<compile_context>
chip_gen: v7x
topology: tpu7x:2x2x1
jax: 0.10.0
libtpu: 0.0.40
codegen_flags: <defaults>
</compile_context>

<pallas_src>
import functools

import jax
import jax.numpy as jnp
from jax import lax
from jax.experimental import pallas as pl
from jax.experimental.pallas import tpu as pltpu


def _vmem_limit_bytes():
    """Generation-aware VMEM limit: ~3/4 of physical capacity, capped at 100 MB
    (v5e/v6e: ~96 MB of 128 MiB, v7x: ~48 MB of 64 MiB)."""
    cap = 64 * 1024 * 1024  # conservative fallback (v7x physical VMEM)
    try:
        info = pltpu.get_tpu_info()
        for name in ("vmem_capacity_bytes", "vmem_bytes", "vmem_size_bytes"):
            val = getattr(info, name, None)
            if val:
                cap = int(val)
                break
    except Exception:
        pass
    return min((cap * 3) // 4, 100 * 1024 * 1024)


def _pick_batch_block(n, per_image_io_bytes, weight_bytes, vmem_limit):
    """Largest batch block in (8,4,2,1) whose double-buffered I/O tiles plus the
    resident weights fit comfortably in the VMEM budget."""
    budget = vmem_limit // 2
    for nb in (8, 4, 2, 1):
        if n % nb == 0 and 2 * nb * per_image_io_bytes + weight_bytes <= budget:
            return nb
    return 1


def _pick_band_rows(ho, per_row_bytes, vmem_limit):
    """Largest divisor of the output height whose per-band working set fits in
    roughly a quarter of the VMEM budget."""
    target = max(1, (vmem_limit // 4) // max(per_row_bytes, 1))
    best = 1
    for d in range(1, ho + 1):
        if ho % d == 0 and d <= target:
            best = d
    return best


def _bottleneck_kernel(x_ref, w1_ref, b1_ref, w2_ref, b2_ref, w3_ref, b3_ref,
                       *rest, stride, has_projection, band_rows):
    if has_projection:
        wr_ref, br_ref, o_ref, pad_ref = rest
    else:
        o_ref, pad_ref = rest

    Nb, H, W, Cin = x_ref.shape
    C = w1_ref.shape[-1]
    _, Ho, Wo, Cout = o_ref.shape
    s = stride
    Bo = band_rows                    # output rows per band
    Bi = Bo * s + 2                   # input rows per band incl. 1-row halo
    n_bands = Ho // Bo
    f32 = jnp.float32
    mxu = w1_ref.dtype                # bf16 MXU operands, f32 accumulation
    sdt = pad_ref.dtype               # halo-scratch dtype (bf16 by default)

    w1 = w1_ref[...]
    w3 = w3_ref[...]
    b1 = b1_ref[...]
    b2 = b2_ref[...]
    b3 = b3_ref[...]
    if has_projection:
        wr = wr_ref[...]
        br = br_ref[...]

    # Row-band loop (static trip count -> all slices below are static).  Only
    # one band of intermediates is live at a time.
    for b in range(n_bands):
        lo = b * Bo * s               # first padded-image row of this band
        r0 = max(lo - 1, 0)           # first real input row
        r1 = min(lo - 1 + Bi, H)      # one past the last real input row
        nreal = r1 - r0
        p0 = r0 - (lo - 1)            # where the real rows land in the window

        # ---- conv1 (1x1) + BN bias + ReLU on the band's input rows ---------
        xb = x_ref[:, r0:r1, :, :]
        h1 = jnp.dot(xb.reshape(Nb * nreal * W, Cin).astype(mxu), w1,
                     preferred_element_type=f32)
        h1 = jnp.maximum(h1 + b1, 0.0)                      # (Nb*nreal*W, C)

        # ---- zero-halo'ed band written to the scratch (full-width slabs) ---
        # The border is rebuilt every band / grid step so the kernel stays
        # correct when the batch axis is sharded across TensorCores.
        if p0 > 0:                                          # top image border
            pad_ref[:, 0:p0, :, :] = jnp.zeros((Nb, p0, W + 2, C), sdt)
        if p0 + nreal < Bi:                                 # bottom image border
            nz = Bi - (p0 + nreal)
            pad_ref[:, p0 + nreal:Bi, :, :] = jnp.zeros((Nb, nz, W + 2, C), sdt)
        zc = jnp.zeros((Nb, nreal, 1, C), f32)
        slab = jnp.concatenate([zc, h1.reshape(Nb, nreal, W, C), zc], axis=2)
        pad_ref[:, p0:p0 + nreal, :, :] = slab.astype(sdt)

        # ---- conv2 (3x3, stride s) + BN bias + ReLU -------------------------
        # Three accumulated K=3C matmuls (one per filter row) instead of one
        # materialized (M, 9C) im2col tensor: the MXU chains the f32 partials.
        acc = None
        for dy in range(3):
            taps = []
            for dx in range(3):
                if s == 1:
                    t = pad_ref[:, dy:dy + Bo, dx:dx + Wo, :]
                else:
                    t = pad_ref[:, pl.ds(dy, Bo, stride=s),
                                pl.ds(dx, Wo, stride=s), :]
                taps.append(t)
            g = (jnp.concatenate(taps, axis=-1)
                 .reshape(Nb * Bo * Wo, 3 * C).astype(mxu))
            part = jnp.dot(g, w2_ref[dy], preferred_element_type=f32)
            acc = part if acc is None else acc + part
        h2 = jnp.maximum(acc + b2, 0.0).astype(mxu)         # (Nb*Bo*Wo, C)

        # ---- conv3 (1x1) + BN bias ------------------------------------------
        h3 = jnp.dot(h2, w3, preferred_element_type=f32) + b3

        # ---- residual path ----------------------------------------------------
        if s == 1:
            xs = x_ref[:, b * Bo:(b + 1) * Bo, :, :]
        else:
            xs = x_ref[:, pl.ds(b * Bo * s, Bo, stride=s),
                       pl.ds(0, Wo, stride=s), :]
        xs = xs.reshape(Nb * Bo * Wo, Cin)
        if has_projection:
            r = jnp.dot(xs.astype(mxu), wr, preferred_element_type=f32) + br
        else:
            r = xs.astype(f32)        # identity shortcut: plain add

        out = jnp.maximum(h3 + r, 0.0)
        o_ref[:, b * Bo:(b + 1) * Bo, :, :] = (
            out.reshape(Nb, Bo, Wo, Cout).astype(o_ref.dtype))


def bottleneck_forward_nhwc(x_nhwc, params, stride, *, batch_block=None,
                            band_rows=None, compute_dtype=jnp.bfloat16):
    """NHWC entry point: (N, H, W, Cin) -> (N, Ho, Wo, 4*C)."""
    N, H, W, Cin = x_nhwc.shape
    C = params["w1"].shape[1]
    Cout = params["w3"].shape[1]
    Ho = (H + 2 - 3) // stride + 1
    Wo = (W + 2 - 3) // stride + 1
    has_projection = "wr" in params
    if not has_projection:
        assert stride == 1 and Cin == Cout, (
            "identity shortcut requires stride == 1 and "
            "in_channels == expansion_factor * out_channels")

    cdt = compute_dtype
    f32 = jnp.float32
    vmem_limit = _vmem_limit_bytes()

    # Fold the BN scales into the conv weights (in f32), cast once to bf16;
    # only the per-channel biases remain as kernel-side VPU work.
    w1 = (params["w1"] * params["s1"]).astype(cdt)                       # (Cin, C)
    w2 = (params["w2"] * params["s2"].reshape(1, 1, 1, C)                # HWIO
          ).reshape(3, 3 * C, C).astype(cdt)                            # per-dy (3C, C)
    w3 = (params["w3"] * params["s3"]).astype(cdt)                       # (C, 4C)
    consts = [w1, params["b1"].astype(f32), w2, params["b2"].astype(f32),
              w3, params["b3"].astype(f32)]
    if has_projection:
        consts += [(params["wr"] * params["sr"]).astype(cdt),
                   params["br"].astype(f32)]

    weight_bytes = sum(int(a.size) * a.dtype.itemsize for a in consts)
    per_image_io = (H * W * Cin + Ho * Wo * Cout) * jnp.dtype(cdt).itemsize
    if batch_block is None:
        batch_block = _pick_batch_block(N, per_image_io, weight_bytes, vmem_limit)
    assert N % batch_block == 0, "batch_block must divide the batch size"
    Nb = batch_block

    if band_rows is None:
        per_row = (4 * Nb * Wo * (2 * Cout + 2 * C)
                   + 2 * Nb * stride * (W + 2) * C)
        band_rows = _pick_band_rows(Ho, per_row, vmem_limit)
    assert Ho % band_rows == 0, "band_rows must divide the output height"
    Bi = band_rows * stride + 2

    flops = 2 * N * (H * W * Cin * C
                     + Ho * Wo * 9 * C * C
                     + Ho * Wo * C * Cout
                     + (Ho * Wo * Cin * Cout if has_projection else 0))

    kernel = functools.partial(_bottleneck_kernel, stride=stride,
                               has_projection=has_projection,
                               band_rows=band_rows)

    def _call(io_dtype, scratch_dtype, single_buffer_consts):
        args = [x_nhwc.astype(io_dtype)] + consts
        in_specs = [pl.BlockSpec((Nb, H, W, Cin), lambda n: (n, 0, 0, 0))]
        for a in consts:
            # Index-constant operands (weights / folded-BN biases): full-array
            # blocks, optionally single-buffered (they never change over the
            # grid, so double-buffering only doubles their VMEM residency).
            kw = {"pipeline_mode": pl.Buffered(1)} if single_buffer_consts else {}
            in_specs.append(
                pl.BlockSpec(a.shape, lambda n, nd=a.ndim: (0,) * nd, **kw))
        bytes_accessed = int(sum(int(a.size) * a.dtype.itemsize for a in args)
                             + N * Ho * Wo * Cout * jnp.dtype(io_dtype).itemsize)
        return pl.pallas_call(
            kernel,
            out_shape=jax.ShapeDtypeStruct((N, Ho, Wo, Cout), io_dtype),
            grid=(N // Nb,),
            in_specs=in_specs,
            out_specs=pl.BlockSpec((Nb, Ho, Wo, Cout), lambda n: (n, 0, 0, 0)),
            scratch_shapes=[pltpu.VMEM((Nb, Bi, W + 2, C), scratch_dtype)],
            compiler_params=pltpu.CompilerParams(
                dimension_semantics=("parallel",),   # batch blocks independent
                vmem_limit_bytes=vmem_limit),
            cost_estimate=pl.CostEstimate(flops=int(flops), transcendentals=0,
                                          bytes_accessed=bytes_accessed),
        )(*args)

    try:
        # Primary: bf16 streaming I/O + bf16 halo scratch + single-buffered
        # constant blocks.
        return _call(cdt, cdt, True)
    except Exception:
        # Conservative fallback (previously validated lowering): f32 I/O and
        # scratch, double-buffered constants.
        return _call(f32, f32, False)


def bottleneck_forward(x_nchw, params, stride, **kw):
    """PyTorch-layout entry point: (N, Cin, H, W) -> (N, 4*C, Ho, Wo).

    NOTE: in a real pipeline keep activations NHWC end-to-end and call
    bottleneck_forward_nhwc directly; these transposes are HBM round trips.
    """
    x = jnp.transpose(x_nchw, (0, 2, 3, 1))
    out = bottleneck_forward_nhwc(x, params, stride, **kw)
    return jnp.transpose(out, (0, 3, 1, 2))


def _fold_bn(key, c, eps=1e-5):
    k1, k2, k3, k4 = jax.random.split(key, 4)
    gamma = jax.random.uniform(k1, (c,), jnp.float32, 0.5, 1.5)
    beta = 0.1 * jax.random.normal(k2, (c,), jnp.float32)
    mean = 0.1 * jax.random.normal(k3, (c,), jnp.float32)
    var = jax.random.uniform(k4, (c,), jnp.float32, 0.5, 1.5)
    scale = gamma / jnp.sqrt(var + eps)
    bias = beta - mean * scale
    return scale.reshape(1, c), bias.reshape(1, c)


def init_params(key, in_channels, out_channels, stride):
    C = out_channels
    Cout = out_channels * 4  # expansion_factor = 4
    ks = jax.random.split(key, 8)

    # conv weights created in PyTorch OIHW convention, then transposed.
    w1_oihw = 0.1 * jax.random.normal(ks[0], (C, in_channels, 1, 1), jnp.float32)
    w2_oihw = 0.1 * jax.random.normal(ks[1], (C, C, 3, 3), jnp.float32)
    w3_oihw = 0.1 * jax.random.normal(ks[2], (Cout, C, 1, 1), jnp.float32)

    p = {}
    p["w1"] = jnp.transpose(w1_oihw[:, :, 0, 0], (1, 0))          # (Cin, C)
    p["w2"] = jnp.transpose(w2_oihw, (2, 3, 1, 0))                # HWIO (3,3,C,C)
    p["w3"] = jnp.transpose(w3_oihw[:, :, 0, 0], (1, 0))          # (C, 4C)
    p["s1"], p["b1"] = _fold_bn(ks[3], C)
    p["s2"], p["b2"] = _fold_bn(ks[4], C)
    p["s3"], p["b3"] = _fold_bn(ks[5], Cout)

    if stride != 1 or in_channels != Cout:
        wr_oihw = 0.1 * jax.random.normal(ks[6], (Cout, in_channels, 1, 1),
                                          jnp.float32)
        p["wr"] = jnp.transpose(wr_oihw[:, :, 0, 0], (1, 0))      # (Cin, 4C)
        p["sr"], p["br"] = _fold_bn(ks[7], Cout)
    # else: identity shortcut -> no projection params, kernel does a plain add
    return p


def reference_forward(x_nhwc, p, stride, compute_dtype=jnp.bfloat16):
    """Pure-JAX reference (NHWC) with the same bf16-operand / f32-accum math."""
    dn = ("NHWC", "HWIO", "NHWC")
    cin = p["w1"].shape[0]
    c = p["w1"].shape[1]
    cout = p["w3"].shape[1]
    cdt = compute_dtype
    f32 = jnp.float32

    xb = x_nhwc.astype(cdt)
    y = lax.conv_general_dilated(xb, p["w1"].reshape(1, 1, cin, c).astype(cdt),
                                 (1, 1), "VALID", dimension_numbers=dn,
                                 preferred_element_type=f32)
    y = jnp.maximum(y * p["s1"] + p["b1"], 0.0)
    y = lax.conv_general_dilated(y.astype(cdt), p["w2"].astype(cdt),
                                 (stride, stride), ((1, 1), (1, 1)),
                                 dimension_numbers=dn,
                                 preferred_element_type=f32)
    y = jnp.maximum(y * p["s2"] + p["b2"], 0.0)
    y = lax.conv_general_dilated(y.astype(cdt),
                                 p["w3"].reshape(1, 1, c, cout).astype(cdt),
                                 (1, 1), "VALID", dimension_numbers=dn,
                                 preferred_element_type=f32)
    y = y * p["s3"] + p["b3"]
    if "wr" in p:
        r = lax.conv_general_dilated(xb,
                                     p["wr"].reshape(1, 1, cin, cout).astype(cdt),
                                     (stride, stride), "VALID",
                                     dimension_numbers=dn,
                                     preferred_element_type=f32)
        r = r * p["sr"] + p["br"]
    else:
        r = xb.astype(f32)   # kernel streams x in bf16, identity add matches
    return jnp.maximum(y + r, 0.0)


if __name__ == "__main__":
    key = jax.random.PRNGKey(0)
    N, H, W = 2, 16, 16

    # (in_channels, out_channels, stride, batch_block, band_rows)
    configs = [
        (16, 8, 2, 1, 4),        # projection shortcut, stride 2, 2 row bands, 2 grid steps
        (32, 8, 1, 2, 8),        # identity shortcut, stride 1, 2 row bands
        (32, 8, 1, None, None),  # identity shortcut, auto batch-block / band-rows
    ]

    for idx, (cin, cout_base, stride, nb, br) in enumerate(configs):
        kx, kp = jax.random.split(jax.random.fold_in(key, idx))
        x_nchw = jax.random.normal(kx, (N, cin, H, W), jnp.float32)
        params = init_params(kp, cin, cout_base, stride)

        y = bottleneck_forward(x_nchw, params, stride,
                               batch_block=nb, band_rows=br)
        y = jax.block_until_ready(y)

        Ho = (H + 2 - 3) // stride + 1
        assert y.shape == (N, cout_base * 4, Ho, Ho), y.shape
        y32 = jnp.asarray(y, jnp.float32)

        x_nhwc = jnp.transpose(x_nchw, (0, 2, 3, 1))
        y_ref = jnp.transpose(reference_forward(x_nhwc, params, stride),
                              (0, 3, 1, 2))
        err = float(jnp.max(jnp.abs(y32 - y_ref)))
        assert jnp.allclose(y32, y_ref, rtol=2e-2, atol=2e-2), \
            f"config {idx}: max abs err {err}"

    print("KERNEL_OK")
</pallas_src>

<mosaic_0001>
module attributes {stable_mosaic.version = 11 : i64} {
  func.func @_bottleneck_kernel(%arg0: i32, %arg1: memref<1x16x16x16xbf16, #tpu.memory_space<vmem>>, %arg2: memref<16x8xbf16, #tpu.memory_space<vmem>>, %arg3: memref<1x8xf32, #tpu.memory_space<vmem>>, %arg4: memref<3x24x8xbf16, #tpu.memory_space<vmem>>, %arg5: memref<1x8xf32, #tpu.memory_space<vmem>>, %arg6: memref<8x32xbf16, #tpu.memory_space<vmem>>, %arg7: memref<1x32xf32, #tpu.memory_space<vmem>>, %arg8: memref<16x32xbf16, #tpu.memory_space<vmem>>, %arg9: memref<1x32xf32, #tpu.memory_space<vmem>>, %arg10: memref<1x8x8x32xbf16, #tpu.memory_space<vmem>>, %arg11: memref<1x10x18x8xbf16, #tpu.memory_space<vmem>>) attributes {dimension_semantics = [#tpu.dimension_semantics<parallel>], iteration_bounds = array<i64: 2>, scalar_prefetch = 0 : i64, scratch_operands = 1 : i64, tpu.core_type = #tpu.core_type<tc>, window_params = [{transform_indices = @transform_0, window_bounds = array<i64: 1, 16, 16, 16>}, {pipeline_mode = #tpu.pipeline_mode<synchronous>, transform_indices = @transform_1, window_bounds = array<i64: 16, 8>}, {pipeline_mode = #tpu.pipeline_mode<synchronous>, transform_indices = @transform_2, window_bounds = array<i64: 1, 8>}, {pipeline_mode = #tpu.pipeline_mode<synchronous>, transform_indices = @transform_3, window_bounds = array<i64: 3, 24, 8>}, {pipeline_mode = #tpu.pipeline_mode<synchronous>, transform_indices = @transform_4, window_bounds = array<i64: 1, 8>}, {pipeline_mode = #tpu.pipeline_mode<synchronous>, transform_indices = @transform_5, window_bounds = array<i64: 8, 32>}, {pipeline_mode = #tpu.pipeline_mode<synchronous>, transform_indices = @transform_6, window_bounds = array<i64: 1, 32>}, {pipeline_mode = #tpu.pipeline_mode<synchronous>, transform_indices = @transform_7, window_bounds = array<i64: 16, 32>}, {pipeline_mode = #tpu.pipeline_mode<synchronous>, transform_indices = @transform_8, window_bounds = array<i64: 1, 32>}, {transform_indices = @transform_9, window_bounds = array<i64: 1, 8, 8, 32>}]} {
    %c0 = arith.constant 0 : index
    %c0_0 = arith.constant 0 : index
    %0 = vector.load %arg2[%c0, %c0_0] : memref<16x8xbf16, #tpu.memory_space<vmem>>, vector<16x8xbf16>
    %c0_1 = arith.constant 0 : index
    %c0_2 = arith.constant 0 : index
    %1 = vector.load %arg6[%c0_1, %c0_2] : memref<8x32xbf16, #tpu.memory_space<vmem>>, vector<8x32xbf16>
    %c0_3 = arith.constant 0 : index
    %c0_4 = arith.constant 0 : index
    %2 = vector.load %arg3[%c0_3, %c0_4] : memref<1x8xf32, #tpu.memory_space<vmem>>, vector<1x8xf32>
    %c0_5 = arith.constant 0 : index
    %c0_6 = arith.constant 0 : index
    %3 = vector.load %arg5[%c0_5, %c0_6] : memref<1x8xf32, #tpu.memory_space<vmem>>, vector<1x8xf32>
    %c0_7 = arith.constant 0 : index
    %c0_8 = arith.constant 0 : index
    %4 = vector.load %arg7[%c0_7, %c0_8] : memref<1x32xf32, #tpu.memory_space<vmem>>, vector<1x32xf32>
    %c0_9 = arith.constant 0 : index
    %c0_10 = arith.constant 0 : index
    %5 = vector.load %arg8[%c0_9, %c0_10] : memref<16x32xbf16, #tpu.memory_space<vmem>>, vector<16x32xbf16>
    %c0_11 = arith.constant 0 : index
    %c0_12 = arith.constant 0 : index
    %6 = vector.load %arg9[%c0_11, %c0_12] : memref<1x32xf32, #tpu.memory_space<vmem>>, vector<1x32xf32>
    %c0_13 = arith.constant 0 : index
    %c0_14 = arith.constant 0 : index
    %c0_15 = arith.constant 0 : index
    %c0_16 = arith.constant 0 : index
    %7 = vector.load %arg1[%c0_13, %c0_14, %c0_15, %c0_16] : memref<1x16x16x16xbf16, #tpu.memory_space<vmem>>, vector<1x9x16x16xbf16>
    %8 = vector.shape_cast %7 : vector<1x9x16x16xbf16> to vector<144x16xbf16>
    %cst = arith.constant dense<0.000000e+00> : vector<144x8xf32>
    %9 = tpu.matmul %8, %0, %cst {dimension_numbers = #tpu.dot_dimension_numbers<[1], [0], [0], [1], [0, 0, 1, 1], [], []>} : vector<144x16xbf16>, vector<16x8xbf16>, vector<144x8xf32> -> vector<144x8xf32>
    %10 = vector.broadcast %2 : vector<1x8xf32> to vector<144x8xf32>
    %11 = arith.addf %9, %10 : vector<144x8xf32>
    %cst_17 = arith.constant 0.000000e+00 : f32
    %12 = vector.broadcast %cst_17 : f32 to vector<144x8xf32>
    %13 = arith.maximumf %11, %12 : vector<144x8xf32>
    %cst_18 = arith.constant 0.000000e+00 : bf16
    %14 = vector.broadcast %cst_18 : bf16 to vector<1x1x18x8xbf16>
    %c0_19 = arith.constant 0 : index
    %c0_20 = arith.constant 0 : index
    %c0_21 = arith.constant 0 : index
    %c0_22 = arith.constant 0 : index
    %15 = vector.load %arg11[%c0_19, %c0_20, %c0_21, %c0_22] : memref<1x10x18x8xbf16, #tpu.memory_space<vmem>>, vector<1x1x18x8xbf16>
    tpu.vector_store %arg11[%c0_19, %c0_20, %c0_21, %c0_22], %14 {strides = array<i32>} : memref<1x10x18x8xbf16, #tpu.memory_space<vmem>>, vector<1x1x18x8xbf16>,
    %cst_23 = arith.constant 0.000000e+00 : f32
    %16 = vector.broadcast %cst_23 : f32 to vector<1x9x1x8xf32>
    %17 = vector.shape_cast %13 : vector<144x8xf32> to vector<1x9x16x8xf32>
    %18 = tpu.concatenate %16, %17, %16 in 2 : vector<1x9x1x8xf32>, vector<1x9x16x8xf32>, vector<1x9x1x8xf32> -> vector<1x9x18x8xf32>
    %19 = arith.truncf %18 : vector<1x9x18x8xf32> to vector<1x9x18x8xbf16>
    %c0_24 = arith.constant 0 : index
    %c1 = arith.constant 1 : index
    %c0_25 = arith.constant 0 : index
    %c0_26 = arith.constant 0 : index
    %20 = vector.load %arg11[%c0_24, %c1, %c0_25, %c0_26] : memref<1x10x18x8xbf16, #tpu.memory_space<vmem>>, vector<1x9x18x8xbf16>
    tpu.vector_store %arg11[%c0_24, %c1, %c0_25, %c0_26], %19 {strides = array<i32>} : memref<1x10x18x8xbf16, #tpu.memory_space<vmem>>, vector<1x9x18x8xbf16>,
    %c0_27 = arith.constant 0 : index
    %c0_28 = arith.constant 0 : index
    %c0_29 = arith.constant 0 : index
    %c0_30 = arith.constant 0 : index
    %21 = tpu.strided_load %arg11[%c0_27, %c0_28, %c0_29, %c0_30] {strides = array<i32: 1, 2, 2, 1>} : memref<1x10x18x8xbf16, #tpu.memory_space<vmem>>, vector<1x4x8x8xbf16>
    %c0_31 = arith.constant 0 : index
    %c0_32 = arith.constant 0 : index
    %c1_33 = arith.constant 1 : index
    %c0_34 = arith.constant 0 : index
    %22 = tpu.strided_load %arg11[%c0_31, %c0_32, %c1_33, %c0_34] {strides = array<i32: 1, 2, 2, 1>} : memref<1x10x18x8xbf16, #tpu.memory_space<vmem>>, vector<1x4x8x8xbf16>
    %c0_35 = arith.constant 0 : index
    %c0_36 = arith.constant 0 : index
    %c2 = arith.constant 2 : index
    %c0_37 = arith.constant 0 : index
    %23 = tpu.strided_load %arg11[%c0_35, %c0_36, %c2, %c0_37] {strides = array<i32: 1, 2, 2, 1>} : memref<1x10x18x8xbf16, #tpu.memory_space<vmem>>, vector<1x4x8x8xbf16>
    %24 = tpu.concatenate %21, %22, %23 in 3 : vector<1x4x8x8xbf16>, vector<1x4x8x8xbf16>, vector<1x4x8x8xbf16> -> vector<1x4x8x24xbf16>
    %25 = vector.shape_cast %24 : vector<1x4x8x24xbf16> to vector<32x24xbf16>
    %c0_38 = arith.constant 0 : index
    %c0_39 = arith.constant 0 : index
    %c0_40 = arith.constant 0 : index
    %26 = vector.load %arg4[%c0_38, %c0_39, %c0_40] : memref<3x24x8xbf16, #tpu.memory_space<vmem>>, vector<1x24x8xbf16>
    %27 = vector.shape_cast %26 : vector<1x24x8xbf16> to vector<24x8xbf16>
    %cst_41 = arith.constant dense<0.000000e+00> : vector<32x8xf32>
    %28 = tpu.matmul %25, %27, %cst_41 {dimension_numbers = #tpu.dot_dimension_numbers<[1], [0], [0], [1], [0, 0, 1, 1], [], []>} : vector<32x24xbf16>, vector<24x8xbf16>, vector<32x8xf32> -> vector<32x8xf32>
    %c0_42 = arith.constant 0 : index
    %c1_43 = arith.constant 1 : index
    %c0_44 = arith.constant 0 : index
    %c0_45 = arith.constant 0 : index
    %29 = tpu.strided_load %arg11[%c0_42, %c1_43, %c0_44, %c0_45] {strides = array<i32: 1, 2, 2, 1>} : memref<1x10x18x8xbf16, #tpu.memory_space<vmem>>, vector<1x4x8x8xbf16>
    %c0_46 = arith.constant 0 : index
    %c1_47 = arith.constant 1 : index
    %c1_48 = arith.constant 1 : index
    %c0_49 = arith.constant 0 : index
    %30 = tpu.strided_load %arg11[%c0_46, %c1_47, %c1_48, %c0_49] {strides = array<i32: 1, 2, 2, 1>} : memref<1x10x18x8xbf16, #tpu.memory_space<vmem>>, vector<1x4x8x8xbf16>
    %c0_50 = arith.constant 0 : index
    %c1_51 = arith.constant 1 : index
    %c2_52 = arith.constant 2 : index
    %c0_53 = arith.constant 0 : index
    %31 = tpu.strided_load %arg11[%c0_50, %c1_51, %c2_52, %c0_53] {strides = array<i32: 1, 2, 2, 1>} : memref<1x10x18x8xbf16, #tpu.memory_space<vmem>>, vector<1x4x8x8xbf16>
    %32 = tpu.concatenate %29, %30, %31 in 3 : vector<1x4x8x8xbf16>, vector<1x4x8x8xbf16>, vector<1x4x8x8xbf16> -> vector<1x4x8x24xbf16>
    %33 = vector.shape_cast %32 : vector<1x4x8x24xbf16> to vector<32x24xbf16>
    %c1_54 = arith.constant 1 : index
    %c0_55 = arith.constant 0 : index
    %c0_56 = arith.constant 0 : index
    %34 = vector.load %arg4[%c1_54, %c0_55, %c0_56] : memref<3x24x8xbf16, #tpu.memory_space<vmem>>, vector<1x24x8xbf16>
    %35 = vector.shape_cast %34 : vector<1x24x8xbf16> to vector<24x8xbf16>
    %cst_57 = arith.constant dense<0.000000e+00> : vector<32x8xf32>
    %36 = tpu.matmul %33, %35, %cst_57 {dimension_numbers = #tpu.dot_dimension_numbers<[1], [0], [0], [1], [0, 0, 1, 1], [], []>} : vector<32x24xbf16>, vector<24x8xbf16>, vector<32x8xf32> -> vector<32x8xf32>
    %37 = arith.addf %28, %36 : vector<32x8xf32>
    %c0_58 = arith.constant 0 : index
    %c2_59 = arith.constant 2 : index
    %c0_60 = arith.constant 0 : index
    %c0_61 = arith.constant 0 : index
    %38 = tpu.strided_load %arg11[%c0_58, %c2_59, %c0_60, %c0_61] {strides = array<i32: 1, 2, 2, 1>} : memref<1x10x18x8xbf16, #tpu.memory_space<vmem>>, vector<1x4x8x8xbf16>
    %c0_62 = arith.constant 0 : index
    %c2_63 = arith.constant 2 : index
    %c1_64 = arith.constant 1 : index
    %c0_65 = arith.constant 0 : index
    %39 = tpu.strided_load %arg11[%c0_62, %c2_63, %c1_64, %c0_65] {strides = array<i32: 1, 2, 2, 1>} : memref<1x10x18x8xbf16, #tpu.memory_space<vmem>>, vector<1x4x8x8xbf16>
    %c0_66 = arith.constant 0 : index
    %c2_67 = arith.constant 2 : index
    %c2_68 = arith.constant 2 : index
    %c0_69 = arith.constant 0 : index
    %40 = tpu.strided_load %arg11[%c0_66, %c2_67, %c2_68, %c0_69] {strides = array<i32: 1, 2, 2, 1>} : memref<1x10x18x8xbf16, #tpu.memory_space<vmem>>, vector<1x4x8x8xbf16>
    %41 = tpu.concatenate %38, %39, %40 in 3 : vector<1x4x8x8xbf16>, vector<1x4x8x8xbf16>, vector<1x4x8x8xbf16> -> vector<1x4x8x24xbf16>
    %42 = vector.shape_cast %41 : vector<1x4x8x24xbf16> to vector<32x24xbf16>
    %c2_70 = arith.constant 2 : index
    %c0_71 = arith.constant 0 : index
    %c0_72 = arith.constant 0 : index
    %43 = vector.load %arg4[%c2_70, %c0_71, %c0_72] : memref<3x24x8xbf16, #tpu.memory_space<vmem>>, vector<1x24x8xbf16>
    %44 = vector.shape_cast %43 : vector<1x24x8xbf16> to vector<24x8xbf16>
    %cst_73 = arith.constant dense<0.000000e+00> : vector<32x8xf32>
    %45 = tpu.matmul %42, %44, %cst_73 {dimension_numbers = #tpu.dot_dimension_numbers<[1], [0], [0], [1], [0, 0, 1, 1], [], []>} : vector<32x24xbf16>, vector<24x8xbf16>, vector<32x8xf32> -> vector<32x8xf32>
    %46 = arith.addf %37, %45 : vector<32x8xf32>
    %47 = vector.broadcast %3 : vector<1x8xf32> to vector<32x8xf32>
    %48 = arith.addf %46, %47 : vector<32x8xf32>
    %cst_74 = arith.constant 0.000000e+00 : f32
    %49 = vector.broadcast %cst_74 : f32 to vector<32x8xf32>
    %50 = arith.maximumf %48, %49 : vector<32x8xf32>
    %51 = arith.truncf %50 : vector<32x8xf32> to vector<32x8xbf16>
    %cst_75 = arith.constant dense<0.000000e+00> : vector<32x32xf32>
    %52 = tpu.matmul %51, %1, %cst_75 {dimension_numbers = #tpu.dot_dimension_numbers<[1], [0], [0], [1], [0, 0, 1, 1], [], []>} : vector<32x8xbf16>, vector<8x32xbf16>, vector<32x32xf32> -> vector<32x32xf32>
    %53 = vector.broadcast %4 : vector<1x32xf32> to vector<32x32xf32>
    %54 = arith.addf %52, %53 : vector<32x32xf32>
    %c0_76 = arith.constant 0 : index
    %c0_77 = arith.constant 0 : index
    %c0_78 = arith.constant 0 : index
    %c0_79 = arith.constant 0 : index
    %55 = tpu.strided_load %arg1[%c0_76, %c0_77, %c0_78, %c0_79] {strides = array<i32: 1, 2, 2, 1>} : memref<1x16x16x16xbf16, #tpu.memory_space<vmem>>, vector<1x4x8x16xbf16>
    %56 = vector.shape_cast %55 : vector<1x4x8x16xbf16> to vector<32x16xbf16>
    %cst_80 = arith.constant dense<0.000000e+00> : vector<32x32xf32>
    %57 = tpu.matmul %56, %5, %cst_80 {dimension_numbers = #tpu.dot_dimension_numbers<[1], [0], [0], [1], [0, 0, 1, 1], [], []>} : vector<32x16xbf16>, vector<16x32xbf16>, vector<32x32xf32> -> vector<32x32xf32>
    %58 = vector.broadcast %6 : vector<1x32xf32> to vector<32x32xf32>
    %59 = arith.addf %57, %58 : vector<32x32xf32>
    %60 = arith.addf %54, %59 : vector<32x32xf32>
    %cst_81 = arith.constant 0.000000e+00 : f32
    %61 = vector.broadcast %cst_81 : f32 to vector<32x32xf32>
    %62 = arith.maximumf %60, %61 : vector<32x32xf32>
    %63 = vector.shape_cast %62 : vector<32x32xf32> to vector<1x4x8x32xf32>
    %64 = arith.truncf %63 : vector<1x4x8x32xf32> to vector<1x4x8x32xbf16>
    %c0_82 = arith.constant 0 : index
    %c0_83 = arith.constant 0 : index
    %c0_84 = arith.constant 0 : index
    %c0_85 = arith.constant 0 : index
    %65 = vector.load %arg10[%c0_82, %c0_83, %c0_84, %c0_85] : memref<1x8x8x32xbf16, #tpu.memory_space<vmem>>, vector<1x4x8x32xbf16>
    tpu.vector_store %arg10[%c0_82, %c0_83, %c0_84, %c0_85], %64 {strides = array<i32>} : memref<1x8x8x32xbf16, #tpu.memory_space<vmem>>, vector<1x4x8x32xbf16>,
    %c0_86 = arith.constant 0 : index
    %c7 = arith.constant 7 : index
    %c0_87 = arith.constant 0 : index
    %c0_88 = arith.constant 0 : index
    %66 = vector.load %arg1[%c0_86, %c7, %c0_87, %c0_88] : memref<1x16x16x16xbf16, #tpu.memory_space<vmem>>, vector<1x9x16x16xbf16>
    %67 = vector.shape_cast %66 : vector<1x9x16x16xbf16> to vector<144x16xbf16>
    %cst_89 = arith.constant dense<0.000000e+00> : vector<144x8xf32>
    %68 = tpu.matmul %67, %0, %cst_89 {dimension_numbers = #tpu.dot_dimension_numbers<[1], [0], [0], [1], [0, 0, 1, 1], [], []>} : vector<144x16xbf16>, vector<16x8xbf16>, vector<144x8xf32> -> vector<144x8xf32>
    %69 = vector.broadcast %2 : vector<1x8xf32> to vector<144x8xf32>
    %70 = arith.addf %68, %69 : vector<144x8xf32>
    %cst_90 = arith.constant 0.000000e+00 : f32
    %71 = vector.broadcast %cst_90 : f32 to vector<144x8xf32>
    %72 = arith.maximumf %70, %71 : vector<144x8xf32>
    %cst_91 = arith.constant 0.000000e+00 : bf16
    %73 = vector.broadcast %cst_91 : bf16 to vector<1x1x18x8xbf16>
    %c0_92 = arith.constant 0 : index
    %c9 = arith.constant 9 : index
    %c0_93 = arith.constant 0 : index
    %c0_94 = arith.constant 0 : index
    %74 = vector.load %arg11[%c0_92, %c9, %c0_93, %c0_94] : memref<1x10x18x8xbf16, #tpu.memory_space<vmem>>, vector<1x1x18x8xbf16>
    tpu.vector_store %arg11[%c0_92, %c9, %c0_93, %c0_94], %73 {strides = array<i32>} : memref<1x10x18x8xbf16, #tpu.memory_space<vmem>>, vector<1x1x18x8xbf16>,
    %cst_95 = arith.constant 0.000000e+00 : f32
    %75 = vector.broadcast %cst_95 : f32 to vector<1x9x1x8xf32>
    %76 = vector.shape_cast %72 : vector<144x8xf32> to vector<1x9x16x8xf32>
    %77 = tpu.concatenate %75, %76, %75 in 2 : vector<1x9x1x8xf32>, vector<1x9x16x8xf32>, vector<1x9x1x8xf32> -> vector<1x9x18x8xf32>
    %78 = arith.truncf %77 : vector<1x9x18x8xf32> to vector<1x9x18x8xbf16>
    %c0_96 = arith.constant 0 : index
    %c0_97 = arith.constant 0 : index
    %c0_98 = arith.constant 0 : index
    %c0_99 = arith.constant 0 : index
    %79 = vector.load %arg11[%c0_96, %c0_97, %c0_98, %c0_99] : memref<1x10x18x8xbf16, #tpu.memory_space<vmem>>, vector<1x9x18x8xbf16>
    tpu.vector_store %arg11[%c0_96, %c0_97, %c0_98, %c0_99], %78 {strides = array<i32>} : memref<1x10x18x8xbf16, #tpu.memory_space<vmem>>, vector<1x9x18x8xbf16>,
    %c0_100 = arith.constant 0 : index
    %c0_101 = arith.constant 0 : index
    %c0_102 = arith.constant 0 : index
    %c0_103 = arith.constant 0 : index
    %80 = tpu.strided_load %arg11[%c0_100, %c0_101, %c0_102, %c0_103] {strides = array<i32: 1, 2, 2, 1>} : memref<1x10x18x8xbf16, #tpu.memory_space<vmem>>, vector<1x4x8x8xbf16>
    %c0_104 = arith.constant 0 : index
    %c0_105 = arith.constant 0 : index
    %c1_106 = arith.constant 1 : index
    %c0_107 = arith.constant 0 : index
    %81 = tpu.strided_load %arg11[%c0_104, %c0_105, %c1_106, %c0_107] {strides = array<i32: 1, 2, 2, 1>} : memref<1x10x18x8xbf16, #tpu.memory_space<vmem>>, vector<1x4x8x8xbf16>
    %c0_108 = arith.constant 0 : index
    %c0_109 = arith.constant 0 : index
    %c2_110 = arith.constant 2 : index
    %c0_111 = arith.constant 0 : index
    %82 = tpu.strided_load %arg11[%c0_108, %c0_109, %c2_110, %c0_111] {strides = array<i32: 1, 2, 2, 1>} : memref<1x10x18x8xbf16, #tpu.memory_space<vmem>>, vector<1x4x8x8xbf16>
    %83 = tpu.concatenate %80, %81, %82 in 3 : vector<1x4x8x8xbf16>, vector<1x4x8x8xbf16>, vector<1x4x8x8xbf16> -> vector<1x4x8x24xbf16>
    %84 = vector.shape_cast %83 : vector<1x4x8x24xbf16> to vector<32x24xbf16>
    %c0_112 = arith.constant 0 : index
    %c0_113 = arith.constant 0 : index
    %c0_114 = arith.constant 0 : index
    %85 = vector.load %arg4[%c0_112, %c0_113, %c0_114] : memref<3x24x8xbf16, #tpu.memory_space<vmem>>, vector<1x24x8xbf16>
    %86 = vector.shape_cast %85 : vector<1x24x8xbf16> to vector<24x8xbf16>
    %cst_115 = arith.constant dense<0.000000e+00> : vector<32x8xf32>
    %87 = tpu.matmul %84, %86, %cst_115 {dimension_numbers = #tpu.dot_dimension_numbers<[1], [0], [0], [1], [0, 0, 1, 1], [], []>} : vector<32x24xbf16>, vector<24x8xbf16>, vector<32x8xf32> -> vector<32x8xf32>
    %c0_116 = arith.constant 0 : index
    %c1_117 = arith.constant 1 : index
    %c0_118 = arith.constant 0 : index
    %c0_119 = arith.constant 0 : index
    %88 = tpu.strided_load %arg11[%c0_116, %c1_117, %c0_118, %c0_119] {strides = array<i32: 1, 2, 2, 1>} : memref<1x10x18x8xbf16, #tpu.memory_space<vmem>>, vector<1x4x8x8xbf16>
    %c0_120 = arith.constant 0 : index
    %c1_121 = arith.constant 1 : index
    %c1_122 = arith.constant 1 : index
    %c0_123 = arith.constant 0 : index
    %89 = tpu.strided_load %arg11[%c0_120, %c1_121, %c1_122, %c0_123] {strides = array<i32: 1, 2, 2, 1>} : memref<1x10x18x8xbf16, #tpu.memory_space<vmem>>, vector<1x4x8x8xbf16>
    %c0_124 = arith.constant 0 : index
    %c1_125 = arith.constant 1 : index
    %c2_126 = arith.constant 2 : index
    %c0_127 = arith.constant 0 : index
    %90 = tpu.strided_load %arg11[%c0_124, %c1_125, %c2_126, %c0_127] {strides = array<i32: 1, 2, 2, 1>} : memref<1x10x18x8xbf16, #tpu.memory_space<vmem>>, vector<1x4x8x8xbf16>
    %91 = tpu.concatenate %88, %89, %90 in 3 : vector<1x4x8x8xbf16>, vector<1x4x8x8xbf16>, vector<1x4x8x8xbf16> -> vector<1x4x8x24xbf16>
    %92 = vector.shape_cast %91 : vector<1x4x8x24xbf16> to vector<32x24xbf16>
    %c1_128 = arith.constant 1 : index
    %c0_129 = arith.constant 0 : index
    %c0_130 = arith.constant 0 : index
    %93 = vector.load %arg4[%c1_128, %c0_129, %c0_130] : memref<3x24x8xbf16, #tpu.memory_space<vmem>>, vector<1x24x8xbf16>
    %94 = vector.shape_cast %93 : vector<1x24x8xbf16> to vector<24x8xbf16>
    %cst_131 = arith.constant dense<0.000000e+00> : vector<32x8xf32>
    %95 = tpu.matmul %92, %94, %cst_131 {dimension_numbers = #tpu.dot_dimension_numbers<[1], [0], [0], [1], [0, 0, 1, 1], [], []>} : vector<32x24xbf16>, vector<24x8xbf16>, vector<32x8xf32> -> vector<32x8xf32>
    %96 = arith.addf %87, %95 : vector<32x8xf32>
    %c0_132 = arith.constant 0 : index
    %c2_133 = arith.constant 2 : index
    %c0_134 = arith.constant 0 : index
    %c0_135 = arith.constant 0 : index
    %97 = tpu.strided_load %arg11[%c0_132, %c2_133, %c0_134, %c0_135] {strides = array<i32: 1, 2, 2, 1>} : memref<1x10x18x8xbf16, #tpu.memory_space<vmem>>, vector<1x4x8x8xbf16>
    %c0_136 = arith.constant 0 : index
    %c2_137 = arith.constant 2 : index
    %c1_138 = arith.constant 1 : index
    %c0_139 = arith.constant 0 : index
    %98 = tpu.strided_load %arg11[%c0_136, %c2_137, %c1_138, %c0_139] {strides = array<i32: 1, 2, 2, 1>} : memref<1x10x18x8xbf16, #tpu.memory_space<vmem>>, vector<1x4x8x8xbf16>
    %c0_140 = arith.constant 0 : index
    %c2_141 = arith.constant 2 : index
    %c2_142 = arith.constant 2 : index
    %c0_143 = arith.constant 0 : index
    %99 = tpu.strided_load %arg11[%c0_140, %c2_141, %c2_142, %c0_143] {strides = array<i32: 1, 2, 2, 1>} : memref<1x10x18x8xbf16, #tpu.memory_space<vmem>>, vector<1x4x8x8xbf16>
    %100 = tpu.concatenate %97, %98, %99 in 3 : vector<1x4x8x8xbf16>, vector<1x4x8x8xbf16>, vector<1x4x8x8xbf16> -> vector<1x4x8x24xbf16>
    %101 = vector.shape_cast %100 : vector<1x4x8x24xbf16> to vector<32x24xbf16>
    %c2_144 = arith.constant 2 : index
    %c0_145 = arith.constant 0 : index
    %c0_146 = arith.constant 0 : index
    %102 = vector.load %arg4[%c2_144, %c0_145, %c0_146] : memref<3x24x8xbf16, #tpu.memory_space<vmem>>, vector<1x24x8xbf16>
    %103 = vector.shape_cast %102 : vector<1x24x8xbf16> to vector<24x8xbf16>
    %cst_147 = arith.constant dense<0.000000e+00> : vector<32x8xf32>
    %104 = tpu.matmul %101, %103, %cst_147 {dimension_numbers = #tpu.dot_dimension_numbers<[1], [0], [0], [1], [0, 0, 1, 1], [], []>} : vector<32x24xbf16>, vector<24x8xbf16>, vector<32x8xf32> -> vector<32x8xf32>
    %105 = arith.addf %96, %104 : vector<32x8xf32>
    %106 = vector.broadcast %3 : vector<1x8xf32> to vector<32x8xf32>
    %107 = arith.addf %105, %106 : vector<32x8xf32>
    %cst_148 = arith.constant 0.000000e+00 : f32
    %108 = vector.broadcast %cst_148 : f32 to vector<32x8xf32>
    %109 = arith.maximumf %107, %108 : vector<32x8xf32>
    %110 = arith.truncf %109 : vector<32x8xf32> to vector<32x8xbf16>
    %cst_149 = arith.constant dense<0.000000e+00> : vector<32x32xf32>
    %111 = tpu.matmul %110, %1, %cst_149 {dimension_numbers = #tpu.dot_dimension_numbers<[1], [0], [0], [1], [0, 0, 1, 1], [], []>} : vector<32x8xbf16>, vector<8x32xbf16>, vector<32x32xf32> -> vector<32x32xf32>
    %112 = vector.broadcast %4 : vector<1x32xf32> to vector<32x32xf32>
    %113 = arith.addf %111, %112 : vector<32x32xf32>
    %c0_150 = arith.constant 0 : index
    %c8 = arith.constant 8 : index
    %c0_151 = arith.constant 0 : index
    %c0_152 = arith.constant 0 : index
    %114 = tpu.strided_load %arg1[%c0_150, %c8, %c0_151, %c0_152] {strides = array<i32: 1, 2, 2, 1>} : memref<1x16x16x16xbf16, #tpu.memory_space<vmem>>, vector<1x4x8x16xbf16>
    %115 = vector.shape_cast %114 : vector<1x4x8x16xbf16> to vector<32x16xbf16>
    %cst_153 = arith.constant dense<0.000000e+00> : vector<32x32xf32>
    %116 = tpu.matmul %115, %5, %cst_153 {dimension_numbers = #tpu.dot_dimension_numbers<[1], [0], [0], [1], [0, 0, 1, 1], [], []>} : vector<32x16xbf16>, vector<16x32xbf16>, vector<32x32xf32> -> vector<32x32xf32>
    %117 = vector.broadcast %6 : vector<1x32xf32> to vector<32x32xf32>
    %118 = arith.addf %116, %117 : vector<32x32xf32>
    %119 = arith.addf %113, %118 : vector<32x32xf32>
    %cst_154 = arith.constant 0.000000e+00 : f32
    %120 = vector.broadcast %cst_154 : f32 to vector<32x32xf32>
    %121 = arith.maximumf %119, %120 : vector<32x32xf32>
    %122 = vector.shape_cast %121 : vector<32x32xf32> to vector<1x4x8x32xf32>
    %123 = arith.truncf %122 : vector<1x4x8x32xf32> to vector<1x4x8x32xbf16>
    %c0_155 = arith.constant 0 : index
    %c4 = arith.constant 4 : index
    %c0_156 = arith.constant 0 : index
    %c0_157 = arith.constant 0 : index
    %124 = vector.load %arg10[%c0_155, %c4, %c0_156, %c0_157] : memref<1x8x8x32xbf16, #tpu.memory_space<vmem>>, vector<1x4x8x32xbf16>
    tpu.vector_store %arg10[%c0_155, %c4, %c0_156, %c0_157], %123 {strides = array<i32>} : memref<1x8x8x32xbf16, #tpu.memory_space<vmem>>, vector<1x4x8x32xbf16>,
    return
  }
  func.func @transform_0(%arg0: i32) -> (i32, i32, i32, i32) {
    %c0_i32 = arith.constant 0 : i32
    %c0_i32_0 = arith.constant 0 : i32
    %c0_i32_1 = arith.constant 0 : i32
    %c0_i32_2 = arith.constant 0 : i32
    return %arg0, %c0_i32, %c0_i32_0, %c0_i32_1 : i32, i32, i32, i32
  }
  func.func @transform_1(%arg0: i32) -> (i32, i32) {
    %c0_i32 = arith.constant 0 : i32
    %c0_i32_0 = arith.constant 0 : i32
    %c0_i32_1 = arith.constant 0 : i32
    return %c0_i32, %c0_i32_0 : i32, i32
  }
  func.func @transform_2(%arg0: i32) -> (i32, i32) {
    %c0_i32 = arith.constant 0 : i32
    %c0_i32_0 = arith.constant 0 : i32
    %c0_i32_1 = arith.constant 0 : i32
    return %c0_i32, %c0_i32_0 : i32, i32
  }
  func.func @transform_3(%arg0: i32) -> (i32, i32, i32) {
    %c0_i32 = arith.constant 0 : i32
    %c0_i32_0 = arith.constant 0 : i32
    %c0_i32_1 = arith.constant 0 : i32
    %c0_i32_2 = arith.constant 0 : i32
    return %c0_i32, %c0_i32_0, %c0_i32_1 : i32, i32, i32
  }
  func.func @transform_4(%arg0: i32) -> (i32, i32) {
    %c0_i32 = arith.constant 0 : i32
    %c0_i32_0 = arith.constant 0 : i32
    %c0_i32_1 = arith.constant 0 : i32
    return %c0_i32, %c0_i32_0 : i32, i32
  }
  func.func @transform_5(%arg0: i32) -> (i32, i32) {
    %c0_i32 = arith.constant 0 : i32
    %c0_i32_0 = arith.constant 0 : i32
    %c0_i32_1 = arith.constant 0 : i32
    return %c0_i32, %c0_i32_0 : i32, i32
  }
  func.func @transform_6(%arg0: i32) -> (i32, i32) {
    %c0_i32 = arith.constant 0 : i32
    %c0_i32_0 = arith.constant 0 : i32
    %c0_i32_1 = arith.constant 0 : i32
    return %c0_i32, %c0_i32_0 : i32, i32
  }
  func.func @transform_7(%arg0: i32) -> (i32, i32) {
    %c0_i32 = arith.constant 0 : i32
    %c0_i32_0 = arith.constant 0 : i32
    %c0_i32_1 = arith.constant 0 : i32
    return %c0_i32, %c0_i32_0 : i32, i32
  }
  func.func @transform_8(%arg0: i32) -> (i32, i32) {
    %c0_i32 = arith.constant 0 : i32
    %c0_i32_0 = arith.constant 0 : i32
    %c0_i32_1 = arith.constant 0 : i32
    return %c0_i32, %c0_i32_0 : i32, i32
  }
  func.func @transform_9(%arg0: i32) -> (i32, i32, i32, i32) {
    %c0_i32 = arith.constant 0 : i32
    %c0_i32_0 = arith.constant 0 : i32
    %c0_i32_1 = arith.constant 0 : i32
    %c0_i32_2 = arith.constant 0 : i32
    return %arg0, %c0_i32, %c0_i32_0, %c0_i32_1 : i32, i32, i32, i32
  }
}

module attributes {stable_mosaic.version = 11 : i64} {
  func.func @_bottleneck_kernel(%arg0: i32, %arg1: memref<1x16x16x16xf32, #tpu.memory_space<vmem>>, %arg2: memref<16x8xbf16, #tpu.memory_space<vmem>>, %arg3: memref<1x8xf32, #tpu.memory_space<vmem>>, %arg4: memref<3x24x8xbf16, #tpu.memory_space<vmem>>, %arg5: memref<1x8xf32, #tpu.memory_space<vmem>>, %arg6: memref<8x32xbf16, #tpu.memory_space<vmem>>, %arg7: memref<1x32xf32, #tpu.memory_space<vmem>>, %arg8: memref<16x32xbf16, #tpu.memory_space<vmem>>, %arg9: memref<1x32xf32, #tpu.memory_space<vmem>>, %arg10: memref<1x8x8x32xf32, #tpu.memory_space<vmem>>, %arg11: memref<1x10x18x8xf32, #tpu.memory_space<vmem>>) attributes {dimension_semantics = [#tpu.dimension_semantics<parallel>], iteration_bounds = array<i64: 2>, scalar_prefetch = 0 : i64, scratch_operands = 1 : i64, tpu.core_type = #tpu.core_type<tc>, window_params = [{transform_indices = @transform_0, window_bounds = array<i64: 1, 16, 16, 16>}, {pipeline_mode = #tpu.pipeline_mode<synchronous>, transform_indices = @transform_1, window_bounds = array<i64: 16, 8>}, {pipeline_mode = #tpu.pipeline_mode<synchronous>, transform_indices = @transform_2, window_bounds = array<i64: 1, 8>}, {pipeline_mode = #tpu.pipeline_mode<synchronous>, transform_indices = @transform_3, window_bounds = array<i64: 3, 24, 8>}, {pipeline_mode = #tpu.pipeline_mode<synchronous>, transform_indices = @transform_4, window_bounds = array<i64: 1, 8>}, {pipeline_mode = #tpu.pipeline_mode<synchronous>, transform_indices = @transform_5, window_bounds = array<i64: 8, 32>}, {pipeline_mode = #tpu.pipeline_mode<synchronous>, transform_indices = @transform_6, window_bounds = array<i64: 1, 32>}, {pipeline_mode = #tpu.pipeline_mode<synchronous>, transform_indices = @transform_7, window_bounds = array<i64: 16, 32>}, {pipeline_mode = #tpu.pipeline_mode<synchronous>, transform_indices = @transform_8, window_bounds = array<i64: 1, 32>}, {transform_indices = @transform_9, window_bounds = array<i64: 1, 8, 8, 32>}]} {
    %c0 = arith.constant 0 : index
    %c0_0 = arith.constant 0 : index
    %0 = vector.load %arg2[%c0, %c0_0] : memref<16x8xbf16, #tpu.memory_space<vmem>>, vector<16x8xbf16>
    %c0_1 = arith.constant 0 : index
    %c0_2 = arith.constant 0 : index
    %1 = vector.load %arg6[%c0_1, %c0_2] : memref<8x32xbf16, #tpu.memory_space<vmem>>, vector<8x32xbf16>
    %c0_3 = arith.constant 0 : index
    %c0_4 = arith.constant 0 : index
    %2 = vector.load %arg3[%c0_3, %c0_4] : memref<1x8xf32, #tpu.memory_space<vmem>>, vector<1x8xf32>
    %c0_5 = arith.constant 0 : index
    %c0_6 = arith.constant 0 : index
    %3 = vector.load %arg5[%c0_5, %c0_6] : memref<1x8xf32, #tpu.memory_space<vmem>>, vector<1x8xf32>
    %c0_7 = arith.constant 0 : index
    %c0_8 = arith.constant 0 : index
    %4 = vector.load %arg7[%c0_7, %c0_8] : memref<1x32xf32, #tpu.memory_space<vmem>>, vector<1x32xf32>
    %c0_9 = arith.constant 0 : index
    %c0_10 = arith.constant 0 : index
    %5 = vector.load %arg8[%c0_9, %c0_10] : memref<16x32xbf16, #tpu.memory_space<vmem>>, vector<16x32xbf16>
    %c0_11 = arith.constant 0 : index
    %c0_12 = arith.constant 0 : index
    %6 = vector.load %arg9[%c0_11, %c0_12] : memref<1x32xf32, #tpu.memory_space<vmem>>, vector<1x32xf32>
    %c0_13 = arith.constant 0 : index
    %c0_14 = arith.constant 0 : index
    %c0_15 = arith.constant 0 : index
    %c0_16 = arith.constant 0 : index
    %7 = vector.load %arg1[%c0_13, %c0_14, %c0_15, %c0_16] : memref<1x16x16x16xf32, #tpu.memory_space<vmem>>, vector<1x9x16x16xf32>
    %8 = vector.shape_cast %7 : vector<1x9x16x16xf32> to vector<144x16xf32>
    %9 = arith.truncf %8 : vector<144x16xf32> to vector<144x16xbf16>
    %cst = arith.constant dense<0.000000e+00> : vector<144x8xf32>
    %10 = tpu.matmul %9, %0, %cst {dimension_numbers = #tpu.dot_dimension_numbers<[1], [0], [0], [1], [0, 0, 1, 1], [], []>} : vector<144x16xbf16>, vector<16x8xbf16>, vector<144x8xf32> -> vector<144x8xf32>
    %11 = vector.broadcast %2 : vector<1x8xf32> to vector<144x8xf32>
    %12 = arith.addf %10, %11 : vector<144x8xf32>
    %cst_17 = arith.constant 0.000000e+00 : f32
    %13 = vector.broadcast %cst_17 : f32 to vector<144x8xf32>
    %14 = arith.maximumf %12, %13 : vector<144x8xf32>
    %cst_18 = arith.constant 0.000000e+00 : f32
    %15 = vector.broadcast %cst_18 : f32 to vector<1x1x18x8xf32>
    %c0_19 = arith.constant 0 : index
    %c0_20 = arith.constant 0 : index
    %c0_21 = arith.constant 0 : index
    %c0_22 = arith.constant 0 : index
    %16 = vector.load %arg11[%c0_19, %c0_20, %c0_21, %c0_22] : memref<1x10x18x8xf32, #tpu.memory_space<vmem>>, vector<1x1x18x8xf32>
    tpu.vector_store %arg11[%c0_19, %c0_20, %c0_21, %c0_22], %15 {strides = array<i32>} : memref<1x10x18x8xf32, #tpu.memory_space<vmem>>, vector<1x1x18x8xf32>,
    %cst_23 = arith.constant 0.000000e+00 : f32
    %17 = vector.broadcast %cst_23 : f32 to vector<1x9x1x8xf32>
    %18 = vector.shape_cast %14 : vector<144x8xf32> to vector<1x9x16x8xf32>
    %19 = tpu.concatenate %17, %18, %17 in 2 : vector<1x9x1x8xf32>, vector<1x9x16x8xf32>, vector<1x9x1x8xf32> -> vector<1x9x18x8xf32>
    %c0_24 = arith.constant 0 : index
    %c1 = arith.constant 1 : index
    %c0_25 = arith.constant 0 : index
    %c0_26 = arith.constant 0 : index
    %20 = vector.load %arg11[%c0_24, %c1, %c0_25, %c0_26] : memref<1x10x18x8xf32, #tpu.memory_space<vmem>>, vector<1x9x18x8xf32>
    tpu.vector_store %arg11[%c0_24, %c1, %c0_25, %c0_26], %19 {strides = array<i32>} : memref<1x10x18x8xf32, #tpu.memory_space<vmem>>, vector<1x9x18x8xf32>,
    %c0_27 = arith.constant 0 : index
    %c0_28 = arith.constant 0 : index
    %c0_29 = arith.constant 0 : index
    %c0_30 = arith.constant 0 : index
    %21 = tpu.strided_load %arg11[%c0_27, %c0_28, %c0_29, %c0_30] {strides = array<i32: 1, 2, 2, 1>} : memref<1x10x18x8xf32, #tpu.memory_space<vmem>>, vector<1x4x8x8xf32>
    %c0_31 = arith.constant 0 : index
    %c0_32 = arith.constant 0 : index
    %c1_33 = arith.constant 1 : index
    %c0_34 = arith.constant 0 : index
    %22 = tpu.strided_load %arg11[%c0_31, %c0_32, %c1_33, %c0_34] {strides = array<i32: 1, 2, 2, 1>} : memref<1x10x18x8xf32, #tpu.memory_space<vmem>>, vector<1x4x8x8xf32>
    %c0_35 = arith.constant 0 : index
    %c0_36 = arith.constant 0 : index
    %c2 = arith.constant 2 : index
    %c0_37 = arith.constant 0 : index
    %23 = tpu.strided_load %arg11[%c0_35, %c0_36, %c2, %c0_37] {strides = array<i32: 1, 2, 2, 1>} : memref<1x10x18x8xf32, #tpu.memory_space<vmem>>, vector<1x4x8x8xf32>
    %24 = tpu.concatenate %21, %22, %23 in 3 : vector<1x4x8x8xf32>, vector<1x4x8x8xf32>, vector<1x4x8x8xf32> -> vector<1x4x8x24xf32>
    %25 = vector.shape_cast %24 : vector<1x4x8x24xf32> to vector<32x24xf32>
    %26 = arith.truncf %25 : vector<32x24xf32> to vector<32x24xbf16>
    %c0_38 = arith.constant 0 : index
    %c0_39 = arith.constant 0 : index
    %c0_40 = arith.constant 0 : index
    %27 = vector.load %arg4[%c0_38, %c0_39, %c0_40] : memref<3x24x8xbf16, #tpu.memory_space<vmem>>, vector<1x24x8xbf16>
    %28 = vector.shape_cast %27 : vector<1x24x8xbf16> to vector<24x8xbf16>
    %cst_41 = arith.constant dense<0.000000e+00> : vector<32x8xf32>
    %29 = tpu.matmul %26, %28, %cst_41 {dimension_numbers = #tpu.dot_dimension_numbers<[1], [0], [0], [1], [0, 0, 1, 1], [], []>} : vector<32x24xbf16>, vector<24x8xbf16>, vector<32x8xf32> -> vector<32x8xf32>
    %c0_42 = arith.constant 0 : index
    %c1_43 = arith.constant 1 : index
    %c0_44 = arith.constant 0 : index
    %c0_45 = arith.constant 0 : index
    %30 = tpu.strided_load %arg11[%c0_42, %c1_43, %c0_44, %c0_45] {strides = array<i32: 1, 2, 2, 1>} : memref<1x10x18x8xf32, #tpu.memory_space<vmem>>, vector<1x4x8x8xf32>
    %c0_46 = arith.constant 0 : index
    %c1_47 = arith.constant 1 : index
    %c1_48 = arith.constant 1 : index
    %c0_49 = arith.constant 0 : index
    %31 = tpu.strided_load %arg11[%c0_46, %c1_47, %c1_48, %c0_49] {strides = array<i32: 1, 2, 2, 1>} : memref<1x10x18x8xf32, #tpu.memory_space<vmem>>, vector<1x4x8x8xf32>
    %c0_50 = arith.constant 0 : index
    %c1_51 = arith.constant 1 : index
    %c2_52 = arith.constant 2 : index
    %c0_53 = arith.constant 0 : index
    %32 = tpu.strided_load %arg11[%c0_50, %c1_51, %c2_52, %c0_53] {strides = array<i32: 1, 2, 2, 1>} : memref<1x10x18x8xf32, #tpu.memory_space<vmem>>, vector<1x4x8x8xf32>
    %33 = tpu.concatenate %30, %31, %32 in 3 : vector<1x4x8x8xf32>, vector<1x4x8x8xf32>, vector<1x4x8x8xf32> -> vector<1x4x8x24xf32>
    %34 = vector.shape_cast %33 : vector<1x4x8x24xf32> to vector<32x24xf32>
    %35 = arith.truncf %34 : vector<32x24xf32> to vector<32x24xbf16>
    %c1_54 = arith.constant 1 : index
    %c0_55 = arith.constant 0 : index
    %c0_56 = arith.constant 0 : index
    %36 = vector.load %arg4[%c1_54, %c0_55, %c0_56] : memref<3x24x8xbf16, #tpu.memory_space<vmem>>, vector<1x24x8xbf16>
    %37 = vector.shape_cast %36 : vector<1x24x8xbf16> to vector<24x8xbf16>
    %cst_57 = arith.constant dense<0.000000e+00> : vector<32x8xf32>
    %38 = tpu.matmul %35, %37, %cst_57 {dimension_numbers = #tpu.dot_dimension_numbers<[1], [0], [0], [1], [0, 0, 1, 1], [], []>} : vector<32x24xbf16>, vector<24x8xbf16>, vector<32x8xf32> -> vector<32x8xf32>
    %39 = arith.addf %29, %38 : vector<32x8xf32>
    %c0_58 = arith.constant 0 : index
    %c2_59 = arith.constant 2 : index
    %c0_60 = arith.constant 0 : index
    %c0_61 = arith.constant 0 : index
    %40 = tpu.strided_load %arg11[%c0_58, %c2_59, %c0_60, %c0_61] {strides = array<i32: 1, 2, 2, 1>} : memref<1x10x18x8xf32, #tpu.memory_space<vmem>>, vector<1x4x8x8xf32>
    %c0_62 = arith.constant 0 : index
    %c2_63 = arith.constant 2 : index
    %c1_64 = arith.constant 1 : index
    %c0_65 = arith.constant 0 : index
    %41 = tpu.strided_load %arg11[%c0_62, %c2_63, %c1_64, %c0_65] {strides = array<i32: 1, 2, 2, 1>} : memref<1x10x18x8xf32, #tpu.memory_space<vmem>>, vector<1x4x8x8xf32>
    %c0_66 = arith.constant 0 : index
    %c2_67 = arith.constant 2 : index
    %c2_68 = arith.constant 2 : index
    %c0_69 = arith.constant 0 : index
    %42 = tpu.strided_load %arg11[%c0_66, %c2_67, %c2_68, %c0_69] {strides = array<i32: 1, 2, 2, 1>} : memref<1x10x18x8xf32, #tpu.memory_space<vmem>>, vector<1x4x8x8xf32>
    %43 = tpu.concatenate %40, %41, %42 in 3 : vector<1x4x8x8xf32>, vector<1x4x8x8xf32>, vector<1x4x8x8xf32> -> vector<1x4x8x24xf32>
    %44 = vector.shape_cast %43 : vector<1x4x8x24xf32> to vector<32x24xf32>
    %45 = arith.truncf %44 : vector<32x24xf32> to vector<32x24xbf16>
    %c2_70 = arith.constant 2 : index
    %c0_71 = arith.constant 0 : index
    %c0_72 = arith.constant 0 : index
    %46 = vector.load %arg4[%c2_70, %c0_71, %c0_72] : memref<3x24x8xbf16, #tpu.memory_space<vmem>>, vector<1x24x8xbf16>
    %47 = vector.shape_cast %46 : vector<1x24x8xbf16> to vector<24x8xbf16>
    %cst_73 = arith.constant dense<0.000000e+00> : vector<32x8xf32>
    %48 = tpu.matmul %45, %47, %cst_73 {dimension_numbers = #tpu.dot_dimension_numbers<[1], [0], [0], [1], [0, 0, 1, 1], [], []>} : vector<32x24xbf16>, vector<24x8xbf16>, vector<32x8xf32> -> vector<32x8xf32>
    %49 = arith.addf %39, %48 : vector<32x8xf32>
    %50 = vector.broadcast %3 : vector<1x8xf32> to vector<32x8xf32>
    %51 = arith.addf %49, %50 : vector<32x8xf32>
    %cst_74 = arith.constant 0.000000e+00 : f32
    %52 = vector.broadcast %cst_74 : f32 to vector<32x8xf32>
    %53 = arith.maximumf %51, %52 : vector<32x8xf32>
    %54 = arith.truncf %53 : vector<32x8xf32> to vector<32x8xbf16>
    %cst_75 = arith.constant dense<0.000000e+00> : vector<32x32xf32>
    %55 = tpu.matmul %54, %1, %cst_75 {dimension_numbers = #tpu.dot_dimension_numbers<[1], [0], [0], [1], [0, 0, 1, 1], [], []>} : vector<32x8xbf16>, vector<8x32xbf16>, vector<32x32xf32> -> vector<32x32xf32>
    %56 = vector.broadcast %4 : vector<1x32xf32> to vector<32x32xf32>
    %57 = arith.addf %55, %56 : vector<32x32xf32>
    %c0_76 = arith.constant 0 : index
    %c0_77 = arith.constant 0 : index
    %c0_78 = arith.constant 0 : index
    %c0_79 = arith.constant 0 : index
    %58 = tpu.strided_load %arg1[%c0_76, %c0_77, %c0_78, %c0_79] {strides = array<i32: 1, 2, 2, 1>} : memref<1x16x16x16xf32, #tpu.memory_space<vmem>>, vector<1x4x8x16xf32>
    %59 = vector.shape_cast %58 : vector<1x4x8x16xf32> to vector<32x16xf32>
    %60 = arith.truncf %59 : vector<32x16xf32> to vector<32x16xbf16>
    %cst_80 = arith.constant dense<0.000000e+00> : vector<32x32xf32>
    %61 = tpu.matmul %60, %5, %cst_80 {dimension_numbers = #tpu.dot_dimension_numbers<[1], [0], [0], [1], [0, 0, 1, 1], [], []>} : vector<32x16xbf16>, vector<16x32xbf16>, vector<32x32xf32> -> vector<32x32xf32>
    %62 = vector.broadcast %6 : vector<1x32xf32> to vector<32x32xf32>
    %63 = arith.addf %61, %62 : vector<32x32xf32>
    %64 = arith.addf %57, %63 : vector<32x32xf32>
    %cst_81 = arith.constant 0.000000e+00 : f32
    %65 = vector.broadcast %cst_81 : f32 to vector<32x32xf32>
    %66 = arith.maximumf %64, %65 : vector<32x32xf32>
    %67 = vector.shape_cast %66 : vector<32x32xf32> to vector<1x4x8x32xf32>
    %c0_82 = arith.constant 0 : index
    %c0_83 = arith.constant 0 : index
    %c0_84 = arith.constant 0 : index
    %c0_85 = arith.constant 0 : index
    %68 = vector.load %arg10[%c0_82, %c0_83, %c0_84, %c0_85] : memref<1x8x8x32xf32, #tpu.memory_space<vmem>>, vector<1x4x8x32xf32>
    tpu.vector_store %arg10[%c0_82, %c0_83, %c0_84, %c0_85], %67 {strides = array<i32>} : memref<1x8x8x32xf32, #tpu.memory_space<vmem>>, vector<1x4x8x32xf32>,
    %c0_86 = arith.constant 0 : index
    %c7 = arith.constant 7 : index
    %c0_87 = arith.constant 0 : index
    %c0_88 = arith.constant 0 : index
    %69 = vector.load %arg1[%c0_86, %c7, %c0_87, %c0_88] : memref<1x16x16x16xf32, #tpu.memory_space<vmem>>, vector<1x9x16x16xf32>
    %70 = vector.shape_cast %69 : vector<1x9x16x16xf32> to vector<144x16xf32>
    %71 = arith.truncf %70 : vector<144x16xf32> to vector<144x16xbf16>
    %cst_89 = arith.constant dense<0.000000e+00> : vector<144x8xf32>
    %72 = tpu.matmul %71, %0, %cst_89 {dimension_numbers = #tpu.dot_dimension_numbers<[1], [0], [0], [1], [0, 0, 1, 1], [], []>} : vector<144x16xbf16>, vector<16x8xbf16>, vector<144x8xf32> -> vector<144x8xf32>
    %73 = vector.broadcast %2 : vector<1x8xf32> to vector<144x8xf32>
    %74 = arith.addf %72, %73 : vector<144x8xf32>
    %cst_90 = arith.constant 0.000000e+00 : f32
    %75 = vector.broadcast %cst_90 : f32 to vector<144x8xf32>
    %76 = arith.maximumf %74, %75 : vector<144x8xf32>
    %cst_91 = arith.constant 0.000000e+00 : f32
    %77 = vector.broadcast %cst_91 : f32 to vector<1x1x18x8xf32>
    %c0_92 = arith.constant 0 : index
    %c9 = arith.constant 9 : index
    %c0_93 = arith.constant 0 : index
    %c0_94 = arith.constant 0 : index
    %78 = vector.load %arg11[%c0_92, %c9, %c0_93, %c0_94] : memref<1x10x18x8xf32, #tpu.memory_space<vmem>>, vector<1x1x18x8xf32>
    tpu.vector_store %arg11[%c0_92, %c9, %c0_93, %c0_94], %77 {strides = array<i32>} : memref<1x10x18x8xf32, #tpu.memory_space<vmem>>, vector<1x1x18x8xf32>,
    %cst_95 = arith.constant 0.000000e+00 : f32
    %79 = vector.broadcast %cst_95 : f32 to vector<1x9x1x8xf32>
    %80 = vector.shape_cast %76 : vector<144x8xf32> to vector<1x9x16x8xf32>
    %81 = tpu.concatenate %79, %80, %79 in 2 : vector<1x9x1x8xf32>, vector<1x9x16x8xf32>, vector<1x9x1x8xf32> -> vector<1x9x18x8xf32>
    %c0_96 = arith.constant 0 : index
    %c0_97 = arith.constant 0 : index
    %c0_98 = arith.constant 0 : index
    %c0_99 = arith.constant 0 : index
    %82 = vector.load %arg11[%c0_96, %c0_97, %c0_98, %c0_99] : memref<1x10x18x8xf32, #tpu.memory_space<vmem>>, vector<1x9x18x8xf32>
    tpu.vector_store %arg11[%c0_96, %c0_97, %c0_98, %c0_99], %81 {strides = array<i32>} : memref<1x10x18x8xf32, #tpu.memory_space<vmem>>, vector<1x9x18x8xf32>,
    %c0_100 = arith.constant 0 : index
    %c0_101 = arith.constant 0 : index
    %c0_102 = arith.constant 0 : index
    %c0_103 = arith.constant 0 : index
    %83 = tpu.strided_load %arg11[%c0_100, %c0_101, %c0_102, %c0_103] {strides = array<i32: 1, 2, 2, 1>} : memref<1x10x18x8xf32, #tpu.memory_space<vmem>>, vector<1x4x8x8xf32>
    %c0_104 = arith.constant 0 : index
    %c0_105 = arith.constant 0 : index
    %c1_106 = arith.constant 1 : index
    %c0_107 = arith.constant 0 : index
    %84 = tpu.strided_load %arg11[%c0_104, %c0_105, %c1_106, %c0_107] {strides = array<i32: 1, 2, 2, 1>} : memref<1x10x18x8xf32, #tpu.memory_space<vmem>>, vector<1x4x8x8xf32>
    %c0_108 = arith.constant 0 : index
    %c0_109 = arith.constant 0 : index
    %c2_110 = arith.constant 2 : index
    %c0_111 = arith.constant 0 : index
    %85 = tpu.strided_load %arg11[%c0_108, %c0_109, %c2_110, %c0_111] {strides = array<i32: 1, 2, 2, 1>} : memref<1x10x18x8xf32, #tpu.memory_space<vmem>>, vector<1x4x8x8xf32>
    %86 = tpu.concatenate %83, %84, %85 in 3 : vector<1x4x8x8xf32>, vector<1x4x8x8xf32>, vector<1x4x8x8xf32> -> vector<1x4x8x24xf32>
    %87 = vector.shape_cast %86 : vector<1x4x8x24xf32> to vector<32x24xf32>
    %88 = arith.truncf %87 : vector<32x24xf32> to vector<32x24xbf16>
    %c0_112 = arith.constant 0 : index
    %c0_113 = arith.constant 0 : index
    %c0_114 = arith.constant 0 : index
    %89 = vector.load %arg4[%c0_112, %c0_113, %c0_114] : memref<3x24x8xbf16, #tpu.memory_space<vmem>>, vector<1x24x8xbf16>
    %90 = vector.shape_cast %89 : vector<1x24x8xbf16> to vector<24x8xbf16>
    %cst_115 = arith.constant dense<0.000000e+00> : vector<32x8xf32>
    %91 = tpu.matmul %88, %90, %cst_115 {dimension_numbers = #tpu.dot_dimension_numbers<[1], [0], [0], [1], [0, 0, 1, 1], [], []>} : vector<32x24xbf16>, vector<24x8xbf16>, vector<32x8xf32> -> vector<32x8xf32>
    %c0_116 = arith.constant 0 : index
    %c1_117 = arith.constant 1 : index
    %c0_118 = arith.constant 0 : index
    %c0_119 = arith.constant 0 : index
    %92 = tpu.strided_load %arg11[%c0_116, %c1_117, %c0_118, %c0_119] {strides = array<i32: 1, 2, 2, 1>} : memref<1x10x18x8xf32, #tpu.memory_space<vmem>>, vector<1x4x8x8xf32>
    %c0_120 = arith.constant 0 : index
    %c1_121 = arith.constant 1 : index
    %c1_122 = arith.constant 1 : index
    %c0_123 = arith.constant 0 : index
    %93 = tpu.strided_load %arg11[%c0_120, %c1_121, %c1_122, %c0_123] {strides = array<i32: 1, 2, 2, 1>} : memref<1x10x18x8xf32, #tpu.memory_space<vmem>>, vector<1x4x8x8xf32>
    %c0_124 = arith.constant 0 : index
    %c1_125 = arith.constant 1 : index
    %c2_126 = arith.constant 2 : index
    %c0_127 = arith.constant 0 : index
    %94 = tpu.strided_load %arg11[%c0_124, %c1_125, %c2_126, %c0_127] {strides = array<i32: 1, 2, 2, 1>} : memref<1x10x18x8xf32, #tpu.memory_space<vmem>>, vector<1x4x8x8xf32>
    %95 = tpu.concatenate %92, %93, %94 in 3 : vector<1x4x8x8xf32>, vector<1x4x8x8xf32>, vector<1x4x8x8xf32> -> vector<1x4x8x24xf32>
    %96 = vector.shape_cast %95 : vector<1x4x8x24xf32> to vector<32x24xf32>
    %97 = arith.truncf %96 : vector<32x24xf32> to vector<32x24xbf16>
    %c1_128 = arith.constant 1 : index
    %c0_129 = arith.constant 0 : index
    %c0_130 = arith.constant 0 : index
    %98 = vector.load %arg4[%c1_128, %c0_129, %c0_130] : memref<3x24x8xbf16, #tpu.memory_space<vmem>>, vector<1x24x8xbf16>
    %99 = vector.shape_cast %98 : vector<1x24x8xbf16> to vector<24x8xbf16>
    %cst_131 = arith.constant dense<0.000000e+00> : vector<32x8xf32>
    %100 = tpu.matmul %97, %99, %cst_131 {dimension_numbers = #tpu.dot_dimension_numbers<[1], [0], [0], [1], [0, 0, 1, 1], [], []>} : vector<32x24xbf16>, vector<24x8xbf16>, vector<32x8xf32> -> vector<32x8xf32>
    %101 = arith.addf %91, %100 : vector<32x8xf32>
    %c0_132 = arith.constant 0 : index
    %c2_133 = arith.constant 2 : index
    %c0_134 = arith.constant 0 : index
    %c0_135 = arith.constant 0 : index
    %102 = tpu.strided_load %arg11[%c0_132, %c2_133, %c0_134, %c0_135] {strides = array<i32: 1, 2, 2, 1>} : memref<1x10x18x8xf32, #tpu.memory_space<vmem>>, vector<1x4x8x8xf32>
    %c0_136 = arith.constant 0 : index
    %c2_137 = arith.constant 2 : index
    %c1_138 = arith.constant 1 : index
    %c0_139 = arith.constant 0 : index
    %103 = tpu.strided_load %arg11[%c0_136, %c2_137, %c1_138, %c0_139] {strides = array<i32: 1, 2, 2, 1>} : memref<1x10x18x8xf32, #tpu.memory_space<vmem>>, vector<1x4x8x8xf32>
    %c0_140 = arith.constant 0 : index
    %c2_141 = arith.constant 2 : index
    %c2_142 = arith.constant 2 : index
    %c0_143 = arith.constant 0 : index
    %104 = tpu.strided_load %arg11[%c0_140, %c2_141, %c2_142, %c0_143] {strides = array<i32: 1, 2, 2, 1>} : memref<1x10x18x8xf32, #tpu.memory_space<vmem>>, vector<1x4x8x8xf32>
    %105 = tpu.concatenate %102, %103, %104 in 3 : vector<1x4x8x8xf32>, vector<1x4x8x8xf32>, vector<1x4x8x8xf32> -> vector<1x4x8x24xf32>
    %106 = vector.shape_cast %105 : vector<1x4x8x24xf32> to vector<32x24xf32>
    %107 = arith.truncf %106 : vector<32x24xf32> to vector<32x24xbf16>
    %c2_144 = arith.constant 2 : index
    %c0_145 = arith.constant 0 : index
    %c0_146 = arith.constant 0 : index
    %108 = vector.load %arg4[%c2_144, %c0_145, %c0_146] : memref<3x24x8xbf16, #tpu.memory_space<vmem>>, vector<1x24x8xbf16>
    %109 = vector.shape_cast %108 : vector<1x24x8xbf16> to vector<24x8xbf16>
    %cst_147 = arith.constant dense<0.000000e+00> : vector<32x8xf32>
    %110 = tpu.matmul %107, %109, %cst_147 {dimension_numbers = #tpu.dot_dimension_numbers<[1], [0], [0], [1], [0, 0, 1, 1], [], []>} : vector<32x24xbf16>, vector<24x8xbf16>, vector<32x8xf32> -> vector<32x8xf32>
    %111 = arith.addf %101, %110 : vector<32x8xf32>
    %112 = vector.broadcast %3 : vector<1x8xf32> to vector<32x8xf32>
    %113 = arith.addf %111, %112 : vector<32x8xf32>
    %cst_148 = arith.constant 0.000000e+00 : f32
    %114 = vector.broadcast %cst_148 : f32 to vector<32x8xf32>
    %115 = arith.maximumf %113, %114 : vector<32x8xf32>
    %116 = arith.truncf %115 : vector<32x8xf32> to vector<32x8xbf16>
    %cst_149 = arith.constant dense<0.000000e+00> : vector<32x32xf32>
    %117 = tpu.matmul %116, %1, %cst_149 {dimension_numbers = #tpu.dot_dimension_numbers<[1], [0], [0], [1], [0, 0, 1, 1], [], []>} : vector<32x8xbf16>, vector<8x32xbf16>, vector<32x32xf32> -> vector<32x32xf32>
    %118 = vector.broadcast %4 : vector<1x32xf32> to vector<32x32xf32>
    %119 = arith.addf %117, %118 : vector<32x32xf32>
    %c0_150 = arith.constant 0 : index
    %c8 = arith.constant 8 : index
    %c0_151 = arith.constant 0 : index
    %c0_152 = arith.constant 0 : index
    %120 = tpu.strided_load %arg1[%c0_150, %c8, %c0_151, %c0_152] {strides = array<i32: 1, 2, 2, 1>} : memref<1x16x16x16xf32, #tpu.memory_space<vmem>>, vector<1x4x8x16xf32>
    %121 = vector.shape_cast %120 : vector<1x4x8x16xf32> to vector<32x16xf32>
    %122 = arith.truncf %121 : vector<32x16xf32> to vector<32x16xbf16>
    %cst_153 = arith.constant dense<0.000000e+00> : vector<32x32xf32>
    %123 = tpu.matmul %122, %5, %cst_153 {dimension_numbers = #tpu.dot_dimension_numbers<[1], [0], [0], [1], [0, 0, 1, 1], [], []>} : vector<32x16xbf16>, vector<16x32xbf16>, vector<32x32xf32> -> vector<32x32xf32>
    %124 = vector.broadcast %6 : vector<1x32xf32> to vector<32x32xf32>
    %125 = arith.addf %123, %124 : vector<32x32xf32>
    %126 = arith.addf %119, %125 : vector<32x32xf32>
    %cst_154 = arith.constant 0.000000e+00 : f32
    %127 = vector.broadcast %cst_154 : f32 to vector<32x32xf32>
    %128 = arith.maximumf %126, %127 : vector<32x32xf32>
    %129 = vector.shape_cast %128 : vector<32x32xf32> to vector<1x4x8x32xf32>
    %c0_155 = arith.constant 0 : index
    %c4 = arith.constant 4 : index
    %c0_156 = arith.constant 0 : index
    %c0_157 = arith.constant 0 : index
    %130 = vector.load %arg10[%c0_155, %c4, %c0_156, %c0_157] : memref<1x8x8x32xf32, #tpu.memory_space<vmem>>, vector<1x4x8x32xf32>
    tpu.vector_store %arg10[%c0_155, %c4, %c0_156, %c0_157], %129 {strides = array<i32>} : memref<1x8x8x32xf32, #tpu.memory_space<vmem>>, vector<1x4x8x32xf32>,
    return
  }
  func.func @transform_0(%arg0: i32) -> (i32, i32, i32, i32) {
    %c0_i32 = arith.constant 0 : i32
    %c0_i32_0 = arith.constant 0 : i32
    %c0_i32_1 = arith.constant 0 : i32
    %c0_i32_2 = arith.constant 0 : i32
    return %arg0, %c0_i32, %c0_i32_0, %c0_i32_1 : i32, i32, i32, i32
  }
  func.func @transform_1(%arg0: i32) -> (i32, i32) {
    %c0_i32 = arith.constant 0 : i32
    %c0_i32_0 = arith.constant 0 : i32
    %c0_i32_1 = arith.constant 0 : i32
    return %c0_i32, %c0_i32_0 : i32, i32
  }
  func.func @transform_2(%arg0: i32) -> (i32, i32) {
    %c0_i32 = arith.constant 0 : i32
    %c0_i32_0 = arith.constant 0 : i32
    %c0_i32_1 = arith.constant 0 : i32
    return %c0_i32, %c0_i32_0 : i32, i32
  }
  func.func @transform_3(%arg0: i32) -> (i32, i32, i32) {
    %c0_i32 = arith.constant 0 : i32
    %c0_i32_0 = arith.constant 0 : i32
    %c0_i32_1 = arith.constant 0 : i32
    %c0_i32_2 = arith.constant 0 : i32
    return %c0_i32, %c0_i32_0, %c0_i32_1 : i32, i32, i32
  }
  func.func @transform_4(%arg0: i32) -> (i32, i32) {
    %c0_i32 = arith.constant 0 : i32
    %c0_i32_0 = arith.constant 0 : i32
    %c0_i32_1 = arith.constant 0 : i32
    return %c0_i32, %c0_i32_0 : i32, i32
  }
  func.func @transform_5(%arg0: i32) -> (i32, i32) {
    %c0_i32 = arith.constant 0 : i32
    %c0_i32_0 = arith.constant 0 : i32
    %c0_i32_1 = arith.constant 0 : i32
    return %c0_i32, %c0_i32_0 : i32, i32
  }
  func.func @transform_6(%arg0: i32) -> (i32, i32) {
    %c0_i32 = arith.constant 0 : i32
    %c0_i32_0 = arith.constant 0 : i32
    %c0_i32_1 = arith.constant 0 : i32
    return %c0_i32, %c0_i32_0 : i32, i32
  }
  func.func @transform_7(%arg0: i32) -> (i32, i32) {
    %c0_i32 = arith.constant 0 : i32
    %c0_i32_0 = arith.constant 0 : i32
    %c0_i32_1 = arith.constant 0 : i32
    return %c0_i32, %c0_i32_0 : i32, i32
  }
  func.func @transform_8(%arg0: i32) -> (i32, i32) {
    %c0_i32 = arith.constant 0 : i32
    %c0_i32_0 = arith.constant 0 : i32
    %c0_i32_1 = arith.constant 0 : i32
    return %c0_i32, %c0_i32_0 : i32, i32
  }
  func.func @transform_9(%arg0: i32) -> (i32, i32, i32, i32) {
    %c0_i32 = arith.constant 0 : i32
    %c0_i32_0 = arith.constant 0 : i32
    %c0_i32_1 = arith.constant 0 : i32
    %c0_i32_2 = arith.constant 0 : i32
    return %arg0, %c0_i32, %c0_i32_0, %c0_i32_1 : i32, i32, i32, i32
  }
}

</mosaic_0001>

<llo_original>
// kernel: tpu_custom_call.1
$region0: #{tpu_custom_call.1}
  #allocation0 [shape = 'u32[]', space=smem, size = 0x4, offset = 0x4, fixed_abs, tag = 'smem constant byte address 0x4 - core index']
  #allocation1 [shape = 'u32[144,128]{1,0:T(1,128)}', space=vmem, size = 0x12000, scoped, tag = 'internal scratch']
  #allocation2 [shape = 'f32[1,10,18,8]{3,2,1,0:T(8,128)}', space=vmem, size = 0x1e000, scoped, tag = 'scratch operand']
  %s0 = inlined_call_operand.hbm [shape: f32[2,16,16,16], index: 0, kind: input, shape index: {}]
  %s1 = inlined_call_operand.vmem [shape: bf16[16,8], index: 1, kind: input, shape index: {}]
  %s2 = inlined_call_operand.vmem [shape: f32[1,8], index: 2, kind: input, shape index: {}]
  %s3 = inlined_call_operand.vmem [shape: bf16[3,24,8], index: 3, kind: input, shape index: {}]
  %s4 = inlined_call_operand.vmem [shape: f32[1,8], index: 4, kind: input, shape index: {}]
  %s5 = inlined_call_operand.vmem [shape: bf16[8,32], index: 5, kind: input, shape index: {}]
  %s6 = inlined_call_operand.vmem [shape: f32[1,32], index: 6, kind: input, shape index: {}]
  %s7 = inlined_call_operand.vmem [shape: bf16[16,32], index: 7, kind: input, shape index: {}]
  %s8 = inlined_call_operand.vmem [shape: f32[1,32], index: 8, kind: input, shape index: {}]
  %s9 = inlined_call_operand.hbm [shape: f32[2,8,8,32], index: 9, kind: output, shape index: {}]
  %s10 = sld [smem:[#allocation0]]
  $region73: #{tpu_custom_call.1} parent=0
    _
  %s12 = ssub.s32 1, %s10
  %s13 = scalar_select 0, %s12, %s10
  $region1: #{tpu_custom_call.1} parent=0
    #allocation3 [shape = 'u8[262144]{0}', space=vmem, size = 0x40000, scoped, tag = 'input window, operand 0']
    #allocation4 [shape = 's32[2]{0}', space=sflag, size = 0x8, scoped, tag = 'scoped memory for tpu_custom_call.1']
    #allocation5 [shape = 's32[2]{0}', space=sflag, size = 0x8, scoped, tag = 'scoped memory for tpu_custom_call.1']
    #allocation6 [shape = 'u8[65536]{0}', space=vmem, size = 0x10000, scoped, tag = 'output window, operand 0']
    %14 = vsyncpa [#allocation4], 0
    %s15 = scalar_lea.sflag [#allocation4], 1
    %16 = vsyncpa %s15, 0
    %17 = vsyncpa [#allocation5], 0
    %s18 = scalar_lea.sflag [#allocation5], 1
    %19 = vsyncpa %s18, 0
    loop: start=0, step=1, limit=4
    $region2: #{tpu_custom_call.1} parent=1 // loop_pre_header
      _
    $region3: #{tpu_custom_call.1} parent=1 // loop_header
      %s21 = sphi 0, %s25
      %p22 = scmp.ge.s32.totalorder %s21, 4
      %s31 = sphi 0, %s33
      %s34 = sphi 0, %s31
      %s35 = sphi 0, %s34
      %s51 = sphi 0, %s35
      %s55 = sphi 0, %s55
      %s57 = sphi 0, %s55
      %s58 = sphi 0, %s57
      %s72 = sphi 0, %s58
      %s76 = sphi 0, %s76
      %s78 = sphi 0, %s76
      %s79 = sphi 0, %s78
      %s93 = sphi 0, %s79
      %s97 = sphi 0, %s97
      %s99 = sphi 0, %s97
      %s100 = sphi 0, %s99
      %s114 = sphi 0, %s100
      %s118 = sphi 0, %s118
      %s120 = sphi 0, %s118
      %s121 = sphi 0, %s120
      %s135 = sphi 0, %s121
      %s139 = sphi 0, %s139
      %s141 = sphi 0, %s139
      %s142 = sphi 0, %s141
      %s156 = sphi 0, %s142
      %s160 = sphi 0, %s160
      %s162 = sphi 0, %s160
      %s163 = sphi 0, %s162
      %s177 = sphi 0, %s163
      %s181 = sphi 0, %s181
      %s183 = sphi 0, %s181
      %s184 = sphi 0, %s183
      %s198 = sphi 0, %s184
      %s202 = sphi 0, %s202
      %s204 = sphi 0, %s202
      %s205 = sphi 0, %s204
      %s219 = sphi 0, %s205
      %s225 = sphi 0, %s227
      %s228 = sphi 0, %s225
      %s229 = sphi 0, %s228
      %s245 = sphi 0, %s229
    $region4: #{tpu_custom_call.1} parent=1 // loop_header_branch
      %24 = sbr.rel (%p22) target = $region8
    $region5: #{tpu_custom_call.1} parent=1 // loop_body
      %s26 = ssub.s32 %s21, 1
      %s27 = ssub.s32 %s21, 2
      %s28 = sadd.s32 %s21, 1
      %s29 = ssub.s32 %s21, %s28
      %p30 = scmp.eq.s32.totalorder %s29, 0
      %s32 = sadd.s32 %s31, 1
      %s33 = scalar_select %p30, %s31, %s32
      %p36 = pneg %p30
      %p37 = scmp.eq.s32.totalorder %s21, 1
      %p38 = por %p36, %p37
      %p39 = scmp.ne.s32.totalorder %s31, %s34
      %p40 = scmp.eq.s32.totalorder %s21, 0
      %p41 = por %p39, %p40
      %p42 = scmp.ne.s32.totalorder %s31, %s34
      %p43 = scmp.eq.s32.totalorder %s26, 1
      %p44 = por %p42, %p43
      %p45 = scmp.ne.s32.totalorder %s34, %s35
      %p46 = scmp.eq.s32.totalorder %s26, 0
      %p47 = por %p45, %p46
      %p48 = scmp.ne.s32.totalorder %s34, %s35
      %p49 = scmp.eq.s32.totalorder %s27, 1
      %p50 = por %p48, %p49
      %p52 = scmp.ne.s32.totalorder %s35, %s51
      %p53 = scmp.eq.s32.totalorder %s27, 0
      %p54 = por %p52, %p53
      %s56 = sadd.s32 %s55, 1
      %p59 = scmp.eq.s32.totalorder %s21, 1
      %p60 = scmp.ne.s32.totalorder %s55, %s57
      %p61 = scmp.eq.s32.totalorder %s21, 0
      %p62 = por %p60, %p61
      %p63 = scmp.ne.s32.totalorder %s55, %s57
      %p64 = scmp.eq.s32.totalorder %s26, 1
      %p65 = por %p63, %p64
      %p66 = scmp.ne.s32.totalorder %s57, %s58
      %p67 = scmp.eq.s32.totalorder %s26, 0
      %p68 = por %p66, %p67
      %p69 = scmp.ne.s32.totalorder %s57, %s58
      %p70 = scmp.eq.s32.totalorder %s27, 1
      %p71 = por %p69, %p70
      %p73 = scmp.ne.s32.totalorder %s58, %s72
      %p74 = scmp.eq.s32.totalorder %s27, 0
      %p75 = por %p73, %p74
      %s77 = sadd.s32 %s76, 1
      %p80 = scmp.eq.s32.totalorder %s21, 1
      %p81 = scmp.ne.s32.totalorder %s76, %s78
      %p82 = scmp.eq.s32.totalorder %s21, 0
      %p83 = por %p81, %p82
      %p84 = scmp.ne.s32.totalorder %s76, %s78
      %p85 = scmp.eq.s32.totalorder %s26, 1
      %p86 = por %p84, %p85
      %p87 = scmp.ne.s32.totalorder %s78, %s79
      %p88 = scmp.eq.s32.totalorder %s26, 0
      %p89 = por %p87, %p88
      %p90 = scmp.ne.s32.totalorder %s78, %s79
      %p91 = scmp.eq.s32.totalorder %s27, 1
      %p92 = por %p90, %p91
      %p94 = scmp.ne.s32.totalorder %s79, %s93
      %p95 = scmp.eq.s32.totalorder %s27, 0
      %p96 = por %p94, %p95
      %s98 = sadd.s32 %s97, 1
      %p101 = scmp.eq.s32.totalorder %s21, 1
      %p102 = scmp.ne.s32.totalorder %s97, %s99
      %p103 = scmp.eq.s32.totalorder %s21, 0
      %p104 = por %p102, %p103
      %p105 = scmp.ne.s32.totalorder %s97, %s99
      %p106 = scmp.eq.s32.totalorder %s26, 1
      %p107 = por %p105, %p106
      %p108 = scmp.ne.s32.totalorder %s99, %s100
      %p109 = scmp.eq.s32.totalorder %s26, 0
      %p110 = por %p108, %p109
      %p111 = scmp.ne.s32.totalorder %s99, %s100
      %p112 = scmp.eq.s32.totalorder %s27, 1
      %p113 = por %p111, %p112
      %p115 = scmp.ne.s32.totalorder %s100, %s114
      %p116 = scmp.eq.s32.totalorder %s27, 0
      %p117 = por %p115, %p116
      %s119 = sadd.s32 %s118, 1
      %p122 = scmp.eq.s32.totalorder %s21, 1
      %p123 = scmp.ne.s32.totalorder %s118, %s120
      %p124 = scmp.eq.s32.totalorder %s21, 0
      %p125 = por %p123, %p124
      %p126 = scmp.ne.s32.totalorder %s118, %s120
      %p127 = scmp.eq.s32.totalorder %s26, 1
      %p128 = por %p126, %p127
      %p129 = scmp.ne.s32.totalorder %s120, %s121
      %p130 = scmp.eq.s32.totalorder %s26, 0
      %p131 = por %p129, %p130
      %p132 = scmp.ne.s32.totalorder %s120, %s121
      %p133 = scmp.eq.s32.totalorder %s27, 1
      %p134 = por %p132, %p133
      %p136 = scmp.ne.s32.totalorder %s121, %s135
      %p137 = scmp.eq.s32.totalorder %s27, 0
      %p138 = por %p136, %p137
      %s140 = sadd.s32 %s139, 1
      %p143 = scmp.eq.s32.totalorder %s21, 1
      %p144 = scmp.ne.s32.totalorder %s139, %s141
      %p145 = scmp.eq.s32.totalorder %s21, 0
      %p146 = por %p144, %p145
      %p147 = scmp.ne.s32.totalorder %s139, %s141
      %p148 = scmp.eq.s32.totalorder %s26, 1
      %p149 = por %p147, %p148
      %p150 = scmp.ne.s32.totalorder %s141, %s142
      %p151 = scmp.eq.s32.totalorder %s26, 0
      %p152 = por %p150, %p151
      %p153 = scmp.ne.s32.totalorder %s141, %s142
      %p154 = scmp.eq.s32.totalorder %s27, 1
      %p155 = por %p153, %p154
      %p157 = scmp.ne.s32.totalorder %s142, %s156
      %p158 = scmp.eq.s32.totalorder %s27, 0
      %p159 = por %p157, %p158
      %s161 = sadd.s32 %s160, 1
      %p164 = scmp.eq.s32.totalorder %s21, 1
      %p165 = scmp.ne.s32.totalorder %s160, %s162
      %p166 = scmp.eq.s32.totalorder %s21, 0
      %p167 = por %p165, %p166
      %p168 = scmp.ne.s32.totalorder %s160, %s162
      %p169 = scmp.eq.s32.totalorder %s26, 1
      %p170 = por %p168, %p169
      %p171 = scmp.ne.s32.totalorder %s162, %s163
      %p172 = scmp.eq.s32.totalorder %s26, 0
      %p173 = por %p171, %p172
      %p174 = scmp.ne.s32.totalorder %s162, %s163
      %p175 = scmp.eq.s32.totalorder %s27, 1
      %p176 = por %p174, %p175
      %p178 = scmp.ne.s32.totalorder %s163, %s177
      %p179 = scmp.eq.s32.totalorder %s27, 0
      %p180 = por %p178, %p179
      %s182 = sadd.s32 %s181, 1
      %p185 = scmp.eq.s32.totalorder %s21, 1
      %p186 = scmp.ne.s32.totalorder %s181, %s183
      %p187 = scmp.eq.s32.totalorder %s21, 0
      %p188 = por %p186, %p187
      %p189 = scmp.ne.s32.totalorder %s181, %s183
      %p190 = scmp.eq.s32.totalorder %s26, 1
      %p191 = por %p189, %p190
      %p192 = scmp.ne.s32.totalorder %s183, %s184
      %p193 = scmp.eq.s32.totalorder %s26, 0
      %p194 = por %p192, %p193
      %p195 = scmp.ne.s32.totalorder %s183, %s184
      %p196 = scmp.eq.s32.totalorder %s27, 1
      %p197 = por %p195, %p196
      %p199 = scmp.ne.s32.totalorder %s184, %s198
      %p200 = scmp.eq.s32.totalorder %s27, 0
      %p201 = por %p199, %p200
      %s203 = sadd.s32 %s202, 1
      %p206 = scmp.eq.s32.totalorder %s21, 1
      %p207 = scmp.ne.s32.totalorder %s202, %s204
      %p208 = scmp.eq.s32.totalorder %s21, 0
      %p209 = por %p207, %p208
      %p210 = scmp.ne.s32.totalorder %s202, %s204
      %p211 = scmp.eq.s32.totalorder %s26, 1
      %p212 = por %p210, %p211
      %p213 = scmp.ne.s32.totalorder %s204, %s205
      %p214 = scmp.eq.s32.totalorder %s26, 0
      %p215 = por %p213, %p214
      %p216 = scmp.ne.s32.totalorder %s204, %s205
      %p217 = scmp.eq.s32.totalorder %s27, 1
      %p218 = por %p216, %p217
      %p220 = scmp.ne.s32.totalorder %s205, %s219
      %p221 = scmp.eq.s32.totalorder %s27, 0
      %p222 = por %p220, %p221
      %s223 = ssub.s32 %s21, %s28
      %p224 = scmp.eq.s32.totalorder %s223, 0
      %s226 = sadd.s32 %s225, 1
      %s227 = scalar_select %p224, %s225, %s226
      %p230 = pneg %p224
      %p231 = scmp.eq.s32.totalorder %s21, 1
      %p232 = por %p230, %p231
      %p233 = scmp.ne.s32.totalorder %s225, %s228
      %p234 = scmp.eq.s32.totalorder %s21, 0
      %p235 = por %p233, %p234
      %p236 = scmp.ne.s32.totalorder %s225, %s228
      %p237 = scmp.eq.s32.totalorder %s26, 1
      %p238 = por %p236, %p237
      %p239 = scmp.ne.s32.totalorder %s228, %s229
      %p240 = scmp.eq.s32.totalorder %s26, 0
      %p241 = por %p239, %p240
      %p242 = scmp.ne.s32.totalorder %s228, %s229
      %p243 = scmp.eq.s32.totalorder %s27, 1
      %p244 = por %p242, %p243
      %p246 = scmp.ne.s32.totalorder %s229, %s245
      %p247 = scmp.eq.s32.totalorder %s27, 0
      %p248 = por %p246, %p247
      %p249 = scmp.le.s32.totalorder 1, %s21
      %p250 = scmp.lt.s32.totalorder %s21, 3
      %p251 = pnand %p249, %p250
      %p252 = pneg %p251
      // Predicated region
      $region9: #{tpu_custom_call.1} parent=5 // pred_check
        _
      $region10: #{tpu_custom_call.1} parent=5 // pred_check_branch
        %254 = sbr.rel (%p251) target = $region12
      $region11: #{tpu_custom_call.1} parent=5 // pred_region
        %s255 = ssub.s32 %s21, 1
        // Predicated region
        $region13: #{tpu_custom_call.1} parent=11 // pred_check
          %p256 = pneg %p68
        $region14: #{tpu_custom_call.1} parent=11 // pred_check_branch
          %258 = sbr.rel (%p256) target = $region16
        $region15: #{tpu_custom_call.1} parent=11 // pred_region
          _
        $region16: #{tpu_custom_call.1} parent=11 // pred_fallthru
          _
        // Predicated region
        $region17: #{tpu_custom_call.1} parent=11 // pred_check
          %p259 = pneg %p89
        $region18: #{tpu_custom_call.1} parent=11 // pred_check_branch
          %261 = sbr.rel (%p259) target = $region20
        $region19: #{tpu_custom_call.1} parent=11 // pred_region
          _
        $region20: #{tpu_custom_call.1} parent=11 // pred_fallthru
          _
        // Predicated region
        $region21: #{tpu_custom_call.1} parent=11 // pred_check
          %p262 = pneg %p110
        $region22: #{tpu_custom_call.1} parent=11 // pred_check_branch
          %264 = sbr.rel (%p262) target = $region24
        $region23: #{tpu_custom_call.1} parent=11 // pred_region
          _
        $region24: #{tpu_custom_call.1} parent=11 // pred_fallthru
          _
        // Predicated region
        $region25: #{tpu_custom_call.1} parent=11 // pred_check
          %p265 = pneg %p131
        $region26: #{tpu_custom_call.1} parent=11 // pred_check_branch
          %267 = sbr.rel (%p265) target = $region28
        $region27: #{tpu_custom_call.1} parent=11 // pred_region
          _
        $region28: #{tpu_custom_call.1} parent=11 // pred_fallthru
          _
        // Predicated region
        $region29: #{tpu_custom_call.1} parent=11 // pred_check
          %p268 = pneg %p152
        $region30: #{tpu_custom_call.1} parent=11 // pred_check_branch
          %270 = sbr.rel (%p268) target = $region32
        $region31: #{tpu_custom_call.1} parent=11 // pred_region
          _
        $region32: #{tpu_custom_call.1} parent=11 // pred_fallthru
          _
        // Predicated region
        $region33: #{tpu_custom_call.1} parent=11 // pred_check
          %p271 = pneg %p173
        $region34: #{tpu_custom_call.1} parent=11 // pred_check_branch
          %273 = sbr.rel (%p271) target = $region36
        $region35: #{tpu_custom_call.1} parent=11 // pred_region
          _
        $region36: #{tpu_custom_call.1} parent=11 // pred_fallthru
          _
        // Predicated region
        $region37: #{tpu_custom_call.1} parent=11 // pred_check
          %p274 = pneg %p194
        $region38: #{tpu_custom_call.1} parent=11 // pred_check_branch
          %276 = sbr.rel (%p274) target = $region40
        $region39: #{tpu_custom_call.1} parent=11 // pred_region
          _
        $region40: #{tpu_custom_call.1} parent=11 // pred_fallthru
          _
        // Predicated region
        $region41: #{tpu_custom_call.1} parent=11 // pred_check
          %p277 = pneg %p215
        $region42: #{tpu_custom_call.1} parent=11 // pred_check_branch
          %279 = sbr.rel (%p277) target = $region44
        $region43: #{tpu_custom_call.1} parent=11 // pred_region
          _
        $region44: #{tpu_custom_call.1} parent=11 // pred_fallthru
          _
      $region12: #{tpu_custom_call.1} parent=5 // pred_fallthru
        _
      %p280 = scmp.lt.s32.totalorder %s21, 2
      // Predicated region
      $region45: #{tpu_custom_call.1} parent=5 // pred_check
        %p281 = pneg %p280
      $region46: #{tpu_custom_call.1} parent=5 // pred_check_branch
        %283 = sbr.rel (%p281) target = $region48
      $region47: #{tpu_custom_call.1} parent=5 // pred_region
        // Predicated region
        $region49: #{tpu_custom_call.1} parent=47 // pred_check
          %p284 = pneg %p41
        $region50: #{tpu_custom_call.1} parent=47 // pred_check_branch
          %286 = sbr.rel (%p284) target = $region52
        $region51: #{tpu_custom_call.1} parent=47 // pred_region
          %s287 = sand.u32 %s31, 1
          %s288 = scalar_lea.sflag [#allocation4], %s287
          %s289 = sand.u32 %s31, 1
          %s290 = smul.addr %s289, 256
          %s291 = scalar_lea.vmem [#allocation3], %s290
          %s293 = ssub.s32 4096, 4096
          %294 = vsyncadd %s288, %s293
          %s295 = smul.addr %s21, 32
          %s296 = smul.addr %s295, 128
          %s297 = scalar_lea.hbm %s0, %s296
          %s298 = sshll.u32 %s291, 4
          %s299 = int_to_ptr.vmem [resolvable:$true] %s298
          %304 = dma.hbm_to_vmem [thread:$0]  %s297, 4096, %s299, %s288, 128, 128, 8
        $region52: #{tpu_custom_call.1} parent=47 // pred_fallthru
          _
      $region48: #{tpu_custom_call.1} parent=5 // pred_fallthru
        _
      %p305 = scmp.le.s32.totalorder 1, %s21
      %p306 = scmp.lt.s32.totalorder %s21, 3
      %p307 = pnand %p305, %p306
      %p308 = pneg %p307
      // Predicated region
      $region53: #{tpu_custom_call.1} parent=5 // pred_check
        _
      $region54: #{tpu_custom_call.1} parent=5 // pred_check_branch
        %310 = sbr.rel (%p307) target = $region56
      $region55: #{tpu_custom_call.1} parent=5 // pred_region
        %s311 = ssub.s32 %s21, 1
        %s312 = sand.u32 %s34, 1
        %s313 = scalar_lea.sflag [#allocation4], %s312
        %s314 = sand.u32 %s34, 1
        %s315 = smul.addr %s314, 256
        %s316 = scalar_lea.vmem [#allocation3], %s315
        // Predicated region
        $region57: #{tpu_custom_call.1} parent=55 // pred_check
          %p317 = pneg %p47
        $region58: #{tpu_custom_call.1} parent=55 // pred_check_branch
          %319 = sbr.rel (%p317) target = $region60
        $region59: #{tpu_custom_call.1} parent=55 // pred_region
          %320 = dma.done %s313, 4096
        $region60: #{tpu_custom_call.1} parent=55 // pred_fallthru
          _
        %s321 = sand.u32 %s34, 1
        %s322 = scalar_lea.sflag [#allocation4], %s321
        %s323 = sand.u32 %s34, 1
        %s324 = smul.addr %s323, 256
        %s325 = scalar_lea.vmem [#allocation3], %s324
        %p326 = pneg %p47
        %p327 = pneg %p44
        %p328 = pneg %p68
        %p329 = pneg %p65
        %p330 = pneg %p89
        %p331 = pneg %p86
        %p332 = pneg %p110
        %p333 = pneg %p107
        %p334 = pneg %p131
        %p335 = pneg %p128
        %p336 = pneg %p152
        %p337 = pneg %p149
        %p338 = pneg %p173
        %p339 = pneg %p170
        %p340 = pneg %p194
        %p341 = pneg %p191
        %p342 = pneg %p215
        %p343 = pneg %p212
        %p344 = pneg %p241
        %p345 = pneg %p238
        %s346 = sand.u32 %s228, 1
        %s347 = scalar_lea.sflag [#allocation5], %s346
        %s348 = sand.u32 %s228, 1
        %s349 = smul.addr %s348, 64
        %s350 = scalar_lea.vmem [#allocation6], %s349
        %v352 = vld [vmem:[%s1] sm:$0xf]
        %v353 = vld [vmem:[%s1 + $0x4] sm:$0xf]
        %v354 = vld [vmem:[%s5] sm:$0xf]
        %v355 = vld [vmem:[%s2] sm:$0x1]
        %v356 = vld [vmem:[%s4] sm:$0x1]
        %v357 = vld [vmem:[%s6] sm:$0x1]
        %v358 = vld [vmem:[%s7] sm:$0xf]
        %v359 = vld [vmem:[%s7 + $0x4] sm:$0xf]
        %v360 = vld [vmem:[%s8] sm:$0x1]
        %v361 = vld [vmem:[%s316] sm:$0xff]
        %v362 = vld [vmem:[%s316 + $0x8] sm:$0xff]
        %v363 = vld [vmem:[%s316 + $0x10] sm:$0xff]
        %v364 = vld [vmem:[%s316 + $0x18] sm:$0xff]
        %v365 = vld [vmem:[%s316 + $0x20] sm:$0xff]
        %v366 = vld [vmem:[%s316 + $0x28] sm:$0xff]
        %v367 = vld [vmem:[%s316 + $0x30] sm:$0xff]
        %v368 = vld [vmem:[%s316 + $0x38] sm:$0xff]
        %v369 = vld [vmem:[%s316 + $0x40] sm:$0xff]
        %v370 = vld [vmem:[%s316 + $0x48] sm:$0xff]
        %v371 = vld [vmem:[%s316 + $0x50] sm:$0xff]
        %v372 = vld [vmem:[%s316 + $0x58] sm:$0xff]
        %v373 = vld [vmem:[%s316 + $0x60] sm:$0xff]
        %v374 = vld [vmem:[%s316 + $0x68] sm:$0xff]
        %v375 = vld [vmem:[%s316 + $0x70] sm:$0xff]
        %v376 = vld [vmem:[%s316 + $0x78] sm:$0xff]
        %v377 = vld [vmem:[%s316 + $0x80] sm:$0xff]
        %v378 = vld [vmem:[%s316 + $0x88] sm:$0xff]
        %v379 = vpack.c.bf16 %v362, %v361
        %v380 = vpack.c.bf16 %v364, %v363
        %v381 = vpack.c.bf16 %v366, %v365
        %v382 = vpack.c.bf16 %v368, %v367
        %v383 = vpack.c.bf16 %v370, %v369
        %v384 = vpack.c.bf16 %v372, %v371
        %v385 = vpack.c.bf16 %v374, %v373
        %v386 = vpack.c.bf16 %v376, %v375
        %v387 = vpack.c.bf16 %v378, %v377
        %v389 = vlaneseq
        %v390 = vshrl.u32 %v389, 7
        %v391 = vsub.s32 0, %v390
        %v392 = vrot.slane %v355, %v391
        %v396 = vunpack.c.l.b16 %v352
        %v397 = vunpack.c.l.b16 %v353
        %v398 = vpack.c.b16 %v397, %v396
        %vm400 = vcmask 130048
        %v402 = vsel %vm400, %v379, 0
        %v405 = vsel %vm400, %v380, 0
        %v408 = vsel %vm400, %v381, 0
        %v411 = vsel %vm400, %v382, 0
        %v414 = vsel %vm400, %v383, 0
        %v417 = vsel %vm400, %v384, 0
        %v420 = vsel %vm400, %v385, 0
        %v423 = vsel %vm400, %v386, 0
        %v426 = vsel %vm400, %v387, 0
        %428 = vmatprep.subr.bf16.mxu0 0
        %429 = vmatpush1.bf16.msra.mxu0 %v398
        %430 = vmatprep.subr.bf16.mxu0 0
        %431 = vmatpush1.bf16.msra.mxu0 0
        %432 = vmatprep.subr.bf16.mxu0 0
        %433 = vmatpush1.bf16.msra.mxu0 0
        %434 = vmatprep.subr.bf16.mxu0 0
        %435 = vmatpush1.bf16.msra.mxu0 0
        %436 = vmatprep.subr.bf16.mxu0 0
        %437 = vmatpush1.bf16.msra.mxu0 0
        %438 = vmatprep.subr.bf16.mxu0 0
        %439 = vmatpush1.bf16.msra.mxu0 0
        %440 = vmatprep.subr.bf16.mxu0 0
        %441 = vmatpush1.bf16.msra.mxu0 0
        %442 = vmatprep.subr.bf16.mxu0 0
        %443 = vmatpush1.bf16.msra.mxu0 0
        %444 = vmatprep.subr.bf16.mxu0 0
        %445 = vmatpush1.bf16.msra.mxu0 0
        %446 = vmatprep.subr.bf16.mxu0 0
        %447 = vmatpush1.bf16.msra.mxu0 0
        %448 = vmatprep.subr.bf16.mxu0 0
        %449 = vmatpush1.bf16.msra.mxu0 0
        %450 = vmatprep.subr.bf16.mxu0 0
        %451 = vmatpush1.bf16.msra.mxu0 0
        %452 = vmatprep.subr.bf16.mxu0 0
        %453 = vmatpush1.bf16.msra.mxu0 0
        %454 = vmatprep.subr.bf16.mxu0 0
        %455 = vmatpush1.bf16.msra.mxu0 0
        %456 = vmatprep.subr.bf16.mxu0 0
        %457 = vmatpush1.bf16.msra.mxu0 0
        %458 = vmatprep.subr.bf16.mxu0 0
        %459 = vmatpush1.bf16.msra.mxu0 0
        %460 = vmatprep.mubr.bf16.mxu0 0
        %461 = vmatmul.mubr.bf16.gmra.mrb[0].mxu0 %v402
        %v462 = vpop.f32.mrb[0].mxu0
        %v463 = vadd.f32 %v392, %v462
        %v464 = vpop.f32.mrb[0].mxu0
        %v465 = vpop.f32.mrb[0].mxu0
        %v466 = vadd.f32 %v392, %v465
        %v467 = vpop.f32.mrb[0].mxu0
        %468 = vmatprep.mubr.bf16.mxu0 0
        %469 = vmatmul.mubr.bf16.gmra.mrb[0].mxu0 %v405
        %v470 = vpop.f32.mrb[0].mxu0
        %v471 = vadd.f32 %v392, %v470
        %v472 = vpop.f32.mrb[0].mxu0
        %v473 = vpop.f32.mrb[0].mxu0
        %v474 = vadd.f32 %v392, %v473
        %v475 = vpop.f32.mrb[0].mxu0
        %476 = vmatprep.mubr.bf16.mxu0 0
        %477 = vmatmul.mubr.bf16.gmra.mrb[0].mxu0 %v408
        %v478 = vpop.f32.mrb[0].mxu0
        %v479 = vadd.f32 %v392, %v478
        %v480 = vpop.f32.mrb[0].mxu0
        %v481 = vpop.f32.mrb[0].mxu0
        %v482 = vadd.f32 %v392, %v481
        %v483 = vpop.f32.mrb[0].mxu0
        %484 = vmatprep.mubr.bf16.mxu0 0
        %485 = vmatmul.mubr.bf16.gmra.mrb[0].mxu0 %v411
        %v486 = vpop.f32.mrb[0].mxu0
        %v487 = vadd.f32 %v392, %v486
        %v488 = vpop.f32.mrb[0].mxu0
        %v489 = vpop.f32.mrb[0].mxu0
        %v490 = vadd.f32 %v392, %v489
        %v491 = vpop.f32.mrb[0].mxu0
        %492 = vmatprep.mubr.bf16.mxu0 0
        %493 = vmatmul.mubr.bf16.gmra.mrb[0].mxu0 %v414
        %v494 = vpop.f32.mrb[0].mxu0
        %v495 = vadd.f32 %v392, %v494
        %v496 = vpop.f32.mrb[0].mxu0
        %v497 = vpop.f32.mrb[0].mxu0
        %v498 = vadd.f32 %v392, %v497
        %v499 = vpop.f32.mrb[0].mxu0
        %500 = vmatprep.mubr.bf16.mxu0 0
        %501 = vmatmul.mubr.bf16.gmra.mrb[0].mxu0 %v417
        %v502 = vpop.f32.mrb[0].mxu0
        %v503 = vadd.f32 %v392, %v502
        %v504 = vpop.f32.mrb[0].mxu0
        %v505 = vpop.f32.mrb[0].mxu0
        %v506 = vadd.f32 %v392, %v505
        %v507 = vpop.f32.mrb[0].mxu0
        %508 = vmatprep.mubr.bf16.mxu0 0
        %509 = vmatmul.mubr.bf16.gmra.mrb[0].mxu0 %v420
        %v510 = vpop.f32.mrb[0].mxu0
        %v511 = vadd.f32 %v392, %v510
        %v512 = vpop.f32.mrb[0].mxu0
        %v513 = vpop.f32.mrb[0].mxu0
        %v514 = vadd.f32 %v392, %v513
        %v515 = vpop.f32.mrb[0].mxu0
        %516 = vmatprep.mubr.bf16.mxu0 0
        %517 = vmatmul.mubr.bf16.gmra.mrb[0].mxu0 %v423
        %v518 = vpop.f32.mrb[0].mxu0
        %v519 = vadd.f32 %v392, %v518
        %v520 = vpop.f32.mrb[0].mxu0
        %v521 = vpop.f32.mrb[0].mxu0
        %v522 = vadd.f32 %v392, %v521
        %v523 = vpop.f32.mrb[0].mxu0
        %524 = vmatprep.mubr.bf16.mxu0 0
        %525 = vmatmul.mubr.bf16.gmra.mrb[0].mxu0 %v426
        %v526 = vpop.f32.mrb[0].mxu0
        %v527 = vadd.f32 %v392, %v526
        %v528 = vpop.f32.mrb[0].mxu0
        %v529 = vpop.f32.mrb[0].mxu0
        %v530 = vadd.f32 %v392, %v529
        %v531 = vpop.f32.mrb[0].mxu0
        %532 = vdwg.mxu0
        %v533 = vmax.f32 %v463, 0.0
        %v534 = vmax.f32 %v466, 0.0
        %v535 = vmax.f32 %v471, 0.0
        %v536 = vmax.f32 %v474, 0.0
        %v537 = vmax.f32 %v479, 0.0
        %v538 = vmax.f32 %v482, 0.0
        %v539 = vmax.f32 %v487, 0.0
        %v540 = vmax.f32 %v490, 0.0
        %v541 = vmax.f32 %v495, 0.0
        %v542 = vmax.f32 %v498, 0.0
        %v543 = vmax.f32 %v503, 0.0
        %v544 = vmax.f32 %v506, 0.0
        %v545 = vmax.f32 %v511, 0.0
        %v546 = vmax.f32 %v514, 0.0
        %v547 = vmax.f32 %v519, 0.0
        %v548 = vmax.f32 %v522, 0.0
        %v549 = vmax.f32 %v527, 0.0
        %v550 = vmax.f32 %v530, 0.0
        %vm551 = vcmask 64512
        %552 = vst.msk [vmem:[#allocation2] sm:$0xff] %vm551, 0.0
        %553 = vst.msk [vmem:[#allocation2 + $0x8] sm:$0xff] %vm551, 0.0
        %vm554 = vcmask 58368
        %555 = vst.msk [vmem:[#allocation2 + $0x10] sm:$0x3] %vm554, 0.0
        %vm574 = vcmask 1040384
        %v575 = vrot.slane %v533, 7
        %v576 = vrot.slane %v534, 7
        %v577 = vsel %vm574, %v575, %v576
        %v578 = vrot.slane %v535, 7
        %v579 = vrot.slane %v536, 7
        %v580 = vsel %vm574, %v578, %v579
        %v581 = vrot.slane %v537, 7
        %v582 = vrot.slane %v538, 7
        %v583 = vsel %vm574, %v581, %v582
        %v584 = vrot.slane %v539, 7
        %v585 = vrot.slane %v540, 7
        %v586 = vsel %vm574, %v584, %v585
        %v587 = vrot.slane %v541, 7
        %v588 = vrot.slane %v542, 7
        %v589 = vsel %vm574, %v587, %v588
        %v590 = vrot.slane %v543, 7
        %v591 = vrot.slane %v544, 7
        %v592 = vsel %vm574, %v590, %v591
        %v593 = vrot.slane %v545, 7
        %v594 = vrot.slane %v546, 7
        %v595 = vsel %vm574, %v593, %v594
        %v596 = vrot.slane %v547, 7
        %v597 = vrot.slane %v548, 7
        %v598 = vsel %vm574, %v596, %v597
        %v599 = vrot.slane %v549, 7
        %v600 = vrot.slane %v550, 7
        %v601 = vsel %vm574, %v599, %v600
        %v629 = vsel %vm574, 0.0, %v575
        %v630 = vsel %vm574, 0.0, %v578
        %v631 = vsel %vm574, 0.0, %v581
        %v632 = vsel %vm574, 0.0, %v584
        %v633 = vsel %vm574, 0.0, %v587
        %v634 = vsel %vm574, 0.0, %v590
        %v635 = vsel %vm574, 0.0, %v593
        %v636 = vsel %vm574, 0.0, %v596
        %v637 = vsel %vm574, 0.0, %v599
        %v638 = vsel %vm574, %v576, 0.0
        %v639 = vsel %vm574, %v579, 0.0
        %v640 = vsel %vm574, %v582, 0.0
        %v641 = vsel %vm574, %v585, 0.0
        %v642 = vsel %vm574, %v588, 0.0
        %v643 = vsel %vm574, %v591, 0.0
        %v644 = vsel %vm574, %v594, 0.0
        %v645 = vsel %vm574, %v597, 0.0
        %v646 = vsel %vm574, %v600, 0.0
        %s647 = scalar_lea.vmem [#allocation2], 24
        %648 = vst.msk [vmem:[%s647] sm:$0xff] %vm551, %v629
        %649 = vst.msk [vmem:[%s647 + $0x8] sm:$0xff] %vm551, %v577
        %650 = vst.msk [vmem:[%s647 + $0x10] sm:$0x3] %vm554, %v638
        %651 = vst.msk [vmem:[%s647 + $0x18] sm:$0xff] %vm551, %v630
        %652 = vst.msk [vmem:[%s647 + $0x20] sm:$0xff] %vm551, %v580
        %653 = vst.msk [vmem:[%s647 + $0x28] sm:$0x3] %vm554, %v639
        %654 = vst.msk [vmem:[%s647 + $0x30] sm:$0xff] %vm551, %v631
        %655 = vst.msk [vmem:[%s647 + $0x38] sm:$0xff] %vm551, %v583
        %656 = vst.msk [vmem:[%s647 + $0x40] sm:$0x3] %vm554, %v640
        %657 = vst.msk [vmem:[%s647 + $0x48] sm:$0xff] %vm551, %v632
        %658 = vst.msk [vmem:[%s647 + $0x50] sm:$0xff] %vm551, %v586
        %659 = vst.msk [vmem:[%s647 + $0x58] sm:$0x3] %vm554, %v641
        %660 = vst.msk [vmem:[%s647 + $0x60] sm:$0xff] %vm551, %v633
        %661 = vst.msk [vmem:[%s647 + $0x68] sm:$0xff] %vm551, %v589
        %662 = vst.msk [vmem:[%s647 + $0x70] sm:$0x3] %vm554, %v642
        %663 = vst.msk [vmem:[%s647 + $0x78] sm:$0xff] %vm551, %v634
        %664 = vst.msk [vmem:[%s647 + $0x80] sm:$0xff] %vm551, %v592
        %665 = vst.msk [vmem:[%s647 + $0x88] sm:$0x3] %vm554, %v643
        %666 = vst.msk [vmem:[%s647 + $0x90] sm:$0xff] %vm551, %v635
        %667 = vst.msk [vmem:[%s647 + $0x98] sm:$0xff] %vm551, %v595
        %668 = vst.msk [vmem:[%s647 + $0xa0] sm:$0x3] %vm554, %v644
        %669 = vst.msk [vmem:[%s647 + $0xa8] sm:$0xff] %vm551, %v636
        %670 = vst.msk [vmem:[%s647 + $0xb0] sm:$0xff] %vm551, %v598
        %671 = vst.msk [vmem:[%s647 + $0xb8] sm:$0x3] %vm554, %v645
        %672 = vst.msk [vmem:[%s647 + $0xc0] sm:$0xff] %vm551, %v637
        %673 = vst.msk [vmem:[%s647 + $0xc8] sm:$0xff] %vm551, %v601
        %674 = vst.msk [vmem:[%s647 + $0xd0] sm:$0x3] %vm554, %v646
        %v675 = vld [vmem:[#allocation2] ss:$2 sm:$0xff]
        %s676 = scalar_lea.vmem [#allocation2], 48
        %v677 = vld [vmem:[%s676] ss:$2 sm:$0xff]
        %s678 = scalar_lea.vmem [#allocation2], 96
        %v679 = vld [vmem:[%s678] ss:$2 sm:$0xff]
        %s680 = scalar_lea.vmem [#allocation2], 144
        %v681 = vld [vmem:[%s680] ss:$2 sm:$0xff]
        %s682 = scalar_lea.vmem [#allocation2], 1
        %v683 = vld [vmem:[%s682] ss:$2 sm:$0xff]
        %s684 = scalar_lea.vmem [#allocation2], 49
        %v685 = vld [vmem:[%s684] ss:$2 sm:$0xff]
        %s686 = scalar_lea.vmem [#allocation2], 97
        %v687 = vld [vmem:[%s686] ss:$2 sm:$0xff]
        %s688 = scalar_lea.vmem [#allocation2], 145
        %v689 = vld [vmem:[%s688] ss:$2 sm:$0xff]
        %s690 = scalar_lea.vmem [#allocation2], 2
        %v691 = vld [vmem:[%s690] ss:$2 sm:$0xff]
        %s692 = scalar_lea.vmem [#allocation2], 50
        %v693 = vld [vmem:[%s692] ss:$2 sm:$0xff]
        %s694 = scalar_lea.vmem [#allocation2], 98
        %v695 = vld [vmem:[%s694] ss:$2 sm:$0xff]
        %s696 = scalar_lea.vmem [#allocation2], 146
        %v697 = vld [vmem:[%s696] ss:$2 sm:$0xff]
        %702 = vrot.lane.b32.xlu0 %v683, 8
        %v703 = vpop.permute.xlu0 %702
        %704 = vrot.lane.b32.xlu0 %v685, 8
        %v705 = vpop.permute.xlu0 %704
        %706 = vrot.lane.b32.xlu0 %v687, 8
        %v707 = vpop.permute.xlu0 %706
        %708 = vrot.lane.b32.xlu0 %v689, 8
        %v709 = vpop.permute.xlu0 %708
        %718 = vrot.lane.b32.xlu0 %v691, 16
        %v719 = vpop.permute.xlu0 %718
        %720 = vrot.lane.b32.xlu0 %v693, 16
        %v721 = vpop.permute.xlu0 %720
        %722 = vrot.lane.b32.xlu0 %v695, 16
        %v723 = vpop.permute.xlu0 %722
        %724 = vrot.lane.b32.xlu0 %v697, 16
        %v725 = vpop.permute.xlu0 %724
        %v730 = vsel %vm551, %v675, %v703
        %v731 = vsel %vm551, %v677, %v705
        %v732 = vsel %vm551, %v679, %v707
        %v733 = vsel %vm551, %v681, %v709
        %v734 = vsel %vm400, %v730, %v719
        %v735 = vsel %vm400, %v731, %v721
        %v736 = vsel %vm400, %v732, %v723
        %v737 = vsel %vm400, %v733, %v725
        %v738 = vpack.c.bf16 %v735, %v734
        %v739 = vpack.c.bf16 %v737, %v736
        %v740 = vld [vmem:[%s3] sm:$0xf]
        %v741 = vld [vmem:[%s3 + $0x4] sm:$0xf]
        %v742 = vld [vmem:[%s3 + $0x8] sm:$0xf]
        %v743 = vld [vmem:[%s647] ss:$2 sm:$0xff]
        %s744 = scalar_lea.vmem %s647, 48 [#allocation2]
        %v745 = vld [vmem:[%s744] ss:$2 sm:$0xff]
        %s746 = scalar_lea.vmem %s647, 96 [#allocation2]
        %v747 = vld [vmem:[%s746] ss:$2 sm:$0xff]
        %s748 = scalar_lea.vmem %s647, 144 [#allocation2]
        %v749 = vld [vmem:[%s748] ss:$2 sm:$0xff]
        %s750 = scalar_lea.vmem %s647, 1 [#allocation2]
        %v751 = vld [vmem:[%s750] ss:$2 sm:$0xff]
        %s752 = scalar_lea.vmem %s647, 49 [#allocation2]
        %v753 = vld [vmem:[%s752] ss:$2 sm:$0xff]
        %s754 = scalar_lea.vmem %s647, 97 [#allocation2]
        %v755 = vld [vmem:[%s754] ss:$2 sm:$0xff]
        %s756 = scalar_lea.vmem %s647, 145 [#allocation2]
        %v757 = vld [vmem:[%s756] ss:$2 sm:$0xff]
        %s758 = scalar_lea.vmem %s647, 2 [#allocation2]
        %v759 = vld [vmem:[%s758] ss:$2 sm:$0xff]
        %s760 = scalar_lea.vmem %s647, 50 [#allocation2]
        %v761 = vld [vmem:[%s760] ss:$2 sm:$0xff]
        %s762 = scalar_lea.vmem %s647, 98 [#allocation2]
        %v763 = vld [vmem:[%s762] ss:$2 sm:$0xff]
        %s764 = scalar_lea.vmem %s647, 146 [#allocation2]
        %v765 = vld [vmem:[%s764] ss:$2 sm:$0xff]
        %770 = vrot.lane.b32.xlu0 %v751, 8
        %v771 = vpop.permute.xlu0 %770
        %772 = vrot.lane.b32.xlu0 %v753, 8
        %v773 = vpop.permute.xlu0 %772
        %774 = vrot.lane.b32.xlu0 %v755, 8
        %v775 = vpop.permute.xlu0 %774
        %776 = vrot.lane.b32.xlu0 %v757, 8
        %v777 = vpop.permute.xlu0 %776
        %786 = vrot.lane.b32.xlu0 %v759, 16
        %v787 = vpop.permute.xlu0 %786
        %788 = vrot.lane.b32.xlu0 %v761, 16
        %v789 = vpop.permute.xlu0 %788
        %790 = vrot.lane.b32.xlu0 %v763, 16
        %v791 = vpop.permute.xlu0 %790
        %792 = vrot.lane.b32.xlu0 %v765, 16
        %v793 = vpop.permute.xlu0 %792
        %v798 = vsel %vm551, %v743, %v771
        %v799 = vsel %vm551, %v745, %v773
        %v800 = vsel %vm551, %v747, %v775
        %v801 = vsel %vm551, %v749, %v777
        %v802 = vsel %vm400, %v798, %v787
        %v803 = vsel %vm400, %v799, %v789
        %v804 = vsel %vm400, %v800, %v791
        %v805 = vsel %vm400, %v801, %v793
        %v806 = vpack.c.bf16 %v803, %v802
        %v807 = vpack.c.bf16 %v805, %v804
        %s808 = scalar_lea.vmem %s3, 12
        %v809 = vld [vmem:[%s808] sm:$0xf]
        %v810 = vld [vmem:[%s808 + $0x4] sm:$0xf]
        %v811 = vld [vmem:[%s808 + $0x8] sm:$0xf]
        %v815 = vunpack.c.l.b16 %v809
        %v816 = vunpack.c.l.b16 %v810
        %v817 = vunpack.c.l.b16 %v811
        %v818 = vpack.c.b16 %v816, %v815
        %v819 = vpack.c.b16 %v817, %v817
        %vm821 = vcmask 195584
        %v823 = vsel %vm821, %v806, 0
        %v826 = vsel %vm821, %v807, 0
        %vm828 = vcmask 1043456
        %v830 = vsel %vm828, %v819, 0
        %832 = vmatprep.subr.bf16.mxu0 0
        %833 = vmatpush1.bf16.msra.mxu0 %v818
        %834 = vmatprep.subr.bf16.mxu0 0
        %835 = vmatpush1.bf16.msra.mxu0 %v830
        %836 = vmatprep.subr.bf16.mxu0 0
        %837 = vmatpush1.bf16.msra.mxu0 0
        %838 = vmatprep.subr.bf16.mxu0 0
        %839 = vmatpush1.bf16.msra.mxu0 0
        %840 = vmatprep.subr.bf16.mxu0 0
        %841 = vmatpush1.bf16.msra.mxu0 0
        %842 = vmatprep.subr.bf16.mxu0 0
        %843 = vmatpush1.bf16.msra.mxu0 0
        %844 = vmatprep.subr.bf16.mxu0 0
        %845 = vmatpush1.bf16.msra.mxu0 0
        %846 = vmatprep.subr.bf16.mxu0 0
        %847 = vmatpush1.bf16.msra.mxu0 0
        %848 = vmatprep.subr.bf16.mxu0 0
        %849 = vmatpush1.bf16.msra.mxu0 0
        %850 = vmatprep.subr.bf16.mxu0 0
        %851 = vmatpush1.bf16.msra.mxu0 0
        %852 = vmatprep.subr.bf16.mxu0 0
        %853 = vmatpush1.bf16.msra.mxu0 0
        %854 = vmatprep.subr.bf16.mxu0 0
        %855 = vmatpush1.bf16.msra.mxu0 0
        %856 = vmatprep.subr.bf16.mxu0 0
        %857 = vmatpush1.bf16.msra.mxu0 0
        %858 = vmatprep.subr.bf16.mxu0 0
        %859 = vmatpush1.bf16.msra.mxu0 0
        %860 = vmatprep.subr.bf16.mxu0 0
        %861 = vmatpush1.bf16.msra.mxu0 0
        %862 = vmatprep.subr.bf16.mxu0 0
        %863 = vmatpush1.bf16.msra.mxu0 0
        %864 = vmatprep.mubr.bf16.mxu0 0
        %865 = vmatmul.mubr.bf16.gmra.mrb[0].mxu0 %v823
        %v866 = vpop.f32.mrb[0].mxu0
        %v867 = vadd.f32 0.0, %v866
        %v868 = vpop.f32.mrb[0].mxu0
        %v869 = vpop.f32.mrb[0].mxu0
        %v870 = vadd.f32 0.0, %v869
        %v871 = vpop.f32.mrb[0].mxu0
        %872 = vmatprep.mubr.bf16.mxu0 0
        %873 = vmatmul.mubr.bf16.gmra.mrb[0].mxu0 %v826
        %v874 = vpop.f32.mrb[0].mxu0
        %v875 = vadd.f32 0.0, %v874
        %v876 = vpop.f32.mrb[0].mxu0
        %v877 = vpop.f32.mrb[0].mxu0
        %v878 = vadd.f32 0.0, %v877
        %v879 = vpop.f32.mrb[0].mxu0
        %880 = vdwg.mxu0
        %v884 = vunpack.c.l.b16 %v740
        %v885 = vunpack.c.l.b16 %v741
        %v886 = vunpack.c.l.b16 %v742
        %v887 = vpack.c.b16 %v885, %v884
        %v888 = vpack.c.b16 %v886, %v886
        %v891 = vsel %vm821, %v738, 0
        %v894 = vsel %vm821, %v739, 0
        %v897 = vsel %vm828, %v888, 0
        %899 = vmatprep.subr.bf16.mxu0 0
        %900 = vmatpush1.bf16.msra.mxu0 %v887
        %901 = vmatprep.subr.bf16.mxu0 0
        %902 = vmatpush1.bf16.msra.mxu0 %v897
        %903 = vmatprep.subr.bf16.mxu0 0
        %904 = vmatpush1.bf16.msra.mxu0 0
        %905 = vmatprep.subr.bf16.mxu0 0
        %906 = vmatpush1.bf16.msra.mxu0 0
        %907 = vmatprep.subr.bf16.mxu0 0
        %908 = vmatpush1.bf16.msra.mxu0 0
        %909 = vmatprep.subr.bf16.mxu0 0
        %910 = vmatpush1.bf16.msra.mxu0 0
        %911 = vmatprep.subr.bf16.mxu0 0
        %912 = vmatpush1.bf16.msra.mxu0 0
        %913 = vmatprep.subr.bf16.mxu0 0
        %914 = vmatpush1.bf16.msra.mxu0 0
        %915 = vmatprep.subr.bf16.mxu0 0
        %916 = vmatpush1.bf16.msra.mxu0 0
        %917 = vmatprep.subr.bf16.mxu0 0
        %918 = vmatpush1.bf16.msra.mxu0 0
        %919 = vmatprep.subr.bf16.mxu0 0
        %920 = vmatpush1.bf16.msra.mxu0 0
        %921 = vmatprep.subr.bf16.mxu0 0
        %922 = vmatpush1.bf16.msra.mxu0 0
        %923 = vmatprep.subr.bf16.mxu0 0
        %924 = vmatpush1.bf16.msra.mxu0 0
        %925 = vmatprep.subr.bf16.mxu0 0
        %926 = vmatpush1.bf16.msra.mxu0 0
        %927 = vmatprep.subr.bf16.mxu0 0
        %928 = vmatpush1.bf16.msra.mxu0 0
        %929 = vmatprep.subr.bf16.mxu0 0
        %930 = vmatpush1.bf16.msra.mxu0 0
        %931 = vmatprep.mubr.bf16.mxu0 0
        %932 = vmatmul.mubr.bf16.gmra.mrb[0].mxu0 %v891
        %v933 = vpop.f32.mrb[0].mxu0
        %v934 = vadd.f32 %v867, %v933
        %v935 = vpop.f32.mrb[0].mxu0
        %v936 = vpop.f32.mrb[0].mxu0
        %v937 = vadd.f32 %v870, %v936
        %v938 = vpop.f32.mrb[0].mxu0
        %939 = vmatprep.mubr.bf16.mxu0 0
        %940 = vmatmul.mubr.bf16.gmra.mrb[0].mxu0 %v894
        %v941 = vpop.f32.mrb[0].mxu0
        %v942 = vadd.f32 %v875, %v941
        %v943 = vpop.f32.mrb[0].mxu0
        %v944 = vpop.f32.mrb[0].mxu0
        %v945 = vadd.f32 %v878, %v944
        %v946 = vpop.f32.mrb[0].mxu0
        %947 = vdwg.mxu0
        %s948 = scalar_lea.vmem [#allocation2], 48
        %v949 = vld [vmem:[%s948] ss:$2 sm:$0xff]
        %s950 = scalar_lea.vmem %s948, 48 [#allocation2]
        %v951 = vld [vmem:[%s950] ss:$2 sm:$0xff]
        %s952 = scalar_lea.vmem %s948, 96 [#allocation2]
        %v953 = vld [vmem:[%s952] ss:$2 sm:$0xff]
        %s954 = scalar_lea.vmem %s948, 144 [#allocation2]
        %v955 = vld [vmem:[%s954] ss:$2 sm:$0xff]
        %s956 = scalar_lea.vmem %s948, 1 [#allocation2]
        %v957 = vld [vmem:[%s956] ss:$2 sm:$0xff]
        %s958 = scalar_lea.vmem %s948, 49 [#allocation2]
        %v959 = vld [vmem:[%s958] ss:$2 sm:$0xff]
        %s960 = scalar_lea.vmem %s948, 97 [#allocation2]
        %v961 = vld [vmem:[%s960] ss:$2 sm:$0xff]
        %s962 = scalar_lea.vmem %s948, 145 [#allocation2]
        %v963 = vld [vmem:[%s962] ss:$2 sm:$0xff]
        %s964 = scalar_lea.vmem %s948, 2 [#allocation2]
        %v965 = vld [vmem:[%s964] ss:$2 sm:$0xff]
        %s966 = scalar_lea.vmem %s948, 50 [#allocation2]
        %v967 = vld [vmem:[%s966] ss:$2 sm:$0xff]
        %s968 = scalar_lea.vmem %s948, 98 [#allocation2]
        %v969 = vld [vmem:[%s968] ss:$2 sm:$0xff]
        %s970 = scalar_lea.vmem %s948, 146 [#allocation2]
        %v971 = vld [vmem:[%s970] ss:$2 sm:$0xff]
        %976 = vrot.lane.b32.xlu0 %v957, 8
        %v977 = vpop.permute.xlu0 %976
        %978 = vrot.lane.b32.xlu0 %v959, 8
        %v979 = vpop.permute.xlu0 %978
        %980 = vrot.lane.b32.xlu0 %v961, 8
        %v981 = vpop.permute.xlu0 %980
        %982 = vrot.lane.b32.xlu0 %v963, 8
        %v983 = vpop.permute.xlu0 %982
        %992 = vrot.lane.b32.xlu0 %v965, 16
        %v993 = vpop.permute.xlu0 %992
        %994 = vrot.lane.b32.xlu0 %v967, 16
        %v995 = vpop.permute.xlu0 %994
        %996 = vrot.lane.b32.xlu0 %v969, 16
        %v997 = vpop.permute.xlu0 %996
        %998 = vrot.lane.b32.xlu0 %v971, 16
        %v999 = vpop.permute.xlu0 %998
        %v1004 = vsel %vm551, %v949, %v977
        %v1005 = vsel %vm551, %v951, %v979
        %v1006 = vsel %vm551, %v953, %v981
        %v1007 = vsel %vm551, %v955, %v983
        %v1008 = vsel %vm400, %v1004, %v993
        %v1009 = vsel %vm400, %v1005, %v995
        %v1010 = vsel %vm400, %v1006, %v997
        %v1011 = vsel %vm400, %v1007, %v999
        %v1012 = vpack.c.bf16 %v1009, %v1008
        %v1013 = vpack.c.bf16 %v1011, %v1010
        %s1014 = scalar_lea.vmem %s3, 24
        %v1015 = vld [vmem:[%s1014] sm:$0xf]
        %v1016 = vld [vmem:[%s1014 + $0x4] sm:$0xf]
        %v1017 = vld [vmem:[%s1014 + $0x8] sm:$0xf]
        %v1021 = vunpack.c.l.b16 %v1015
        %v1022 = vunpack.c.l.b16 %v1016
        %v1023 = vunpack.c.l.b16 %v1017
        %v1024 = vpack.c.b16 %v1022, %v1021
        %v1025 = vpack.c.b16 %v1023, %v1023
        %v1028 = vsel %vm821, %v1012, 0
        %v1031 = vsel %vm821, %v1013, 0
        %v1034 = vsel %vm828, %v1025, 0
        %1036 = vmatprep.subr.bf16.mxu0 0
        %1037 = vmatpush1.bf16.msra.mxu0 %v1024
        %1038 = vmatprep.subr.bf16.mxu0 0
        %1039 = vmatpush1.bf16.msra.mxu0 %v1034
        %1040 = vmatprep.subr.bf16.mxu0 0
        %1041 = vmatpush1.bf16.msra.mxu0 0
        %1042 = vmatprep.subr.bf16.mxu0 0
        %1043 = vmatpush1.bf16.msra.mxu0 0
        %1044 = vmatprep.subr.bf16.mxu0 0
        %1045 = vmatpush1.bf16.msra.mxu0 0
        %1046 = vmatprep.subr.bf16.mxu0 0
        %1047 = vmatpush1.bf16.msra.mxu0 0
        %1048 = vmatprep.subr.bf16.mxu0 0
        %1049 = vmatpush1.bf16.msra.mxu0 0
        %1050 = vmatprep.subr.bf16.mxu0 0
        %1051 = vmatpush1.bf16.msra.mxu0 0
        %1052 = vmatprep.subr.bf16.mxu0 0
        %1053 = vmatpush1.bf16.msra.mxu0 0
        %1054 = vmatprep.subr.bf16.mxu0 0
        %1055 = vmatpush1.bf16.msra.mxu0 0
        %1056 = vmatprep.subr.bf16.mxu0 0
        %1057 = vmatpush1.bf16.msra.mxu0 0
        %1058 = vmatprep.subr.bf16.mxu0 0
        %1059 = vmatpush1.bf16.msra.mxu0 0
        %1060 = vmatprep.subr.bf16.mxu0 0
        %1061 = vmatpush1.bf16.msra.mxu0 0
        %1062 = vmatprep.subr.bf16.mxu0 0
        %1063 = vmatpush1.bf16.msra.mxu0 0
        %1064 = vmatprep.subr.bf16.mxu0 0
        %1065 = vmatpush1.bf16.msra.mxu0 0
        %1066 = vmatprep.subr.bf16.mxu0 0
        %1067 = vmatpush1.bf16.msra.mxu0 0
        %1068 = vmatprep.mubr.bf16.mxu0 0
        %1069 = vmatmul.mubr.bf16.gmra.mrb[0].mxu0 %v1028
        %v1070 = vpop.f32.mrb[0].mxu0
        %v1071 = vadd.f32 0.0, %v1070
        %v1072 = vpop.f32.mrb[0].mxu0
        %v1073 = vpop.f32.mrb[0].mxu0
        %v1074 = vadd.f32 0.0, %v1073
        %v1075 = vpop.f32.mrb[0].mxu0
        %1076 = vmatprep.mubr.bf16.mxu0 0
        %1077 = vmatmul.mubr.bf16.gmra.mrb[0].mxu0 %v1031
        %v1078 = vpop.f32.mrb[0].mxu0
        %v1079 = vadd.f32 0.0, %v1078
        %v1080 = vpop.f32.mrb[0].mxu0
        %v1081 = vpop.f32.mrb[0].mxu0
        %v1082 = vadd.f32 0.0, %v1081
        %v1083 = vpop.f32.mrb[0].mxu0
        %1084 = vdwg.mxu0
        %v1085 = vadd.f32 %v934, %v1071
        %v1086 = vadd.f32 %v937, %v1074
        %v1087 = vadd.f32 %v942, %v1079
        %v1088 = vadd.f32 %v945, %v1082
        %v1090 = vlaneseq
        %v1091 = vshrl.u32 %v1090, 7
        %v1092 = vsub.s32 0, %v1091
        %v1093 = vrot.slane %v356, %v1092
        %v1095 = vadd.f32 %v1085, %v1093
        %v1096 = vadd.f32 %v1086, %v1093
        %v1097 = vadd.f32 %v1087, %v1093
        %v1098 = vadd.f32 %v1088, %v1093
        %v1099 = vmax.f32 %v1095, 0.0
        %v1100 = vmax.f32 %v1096, 0.0
        %v1101 = vmax.f32 %v1097, 0.0
        %v1102 = vmax.f32 %v1098, 0.0
        %v1103 = vpack.c.bf16 %v1100, %v1099
        %v1104 = vpack.c.bf16 %v1102, %v1101
        %v1106 = vlaneseq
        %v1107 = vshrl.u32 %v1106, 7
        %v1108 = vsub.s32 0, %v1107
        %v1109 = vrot.slane %v357, %v1108
        %v1112 = vsel %vm551, %v1103, 0
        %v1115 = vsel %vm551, %v1104, 0
        %v1118 = vsel %vm828, %v354, 0
        %1120 = vmatprep.subr.bf16.mxu0 0
        %1121 = vmatpush1.bf16.msra.mxu0 %v1118
        %1122 = vmatprep.subr.bf16.mxu0 0
        %1123 = vmatpush1.bf16.msra.mxu0 0
        %1124 = vmatprep.subr.bf16.mxu0 0
        %1125 = vmatpush1.bf16.msra.mxu0 0
        %1126 = vmatprep.subr.bf16.mxu0 0
        %1127 = vmatpush1.bf16.msra.mxu0 0
        %1128 = vmatprep.subr.bf16.mxu0 0
        %1129 = vmatpush1.bf16.msra.mxu0 0
        %1130 = vmatprep.subr.bf16.mxu0 0
        %1131 = vmatpush1.bf16.msra.mxu0 0
        %1132 = vmatprep.subr.bf16.mxu0 0
        %1133 = vmatpush1.bf16.msra.mxu0 0
        %1134 = vmatprep.subr.bf16.mxu0 0
        %1135 = vmatpush1.bf16.msra.mxu0 0
        %1136 = vmatprep.subr.bf16.mxu0 0
        %1137 = vmatpush1.bf16.msra.mxu0 0
        %1138 = vmatprep.subr.bf16.mxu0 0
        %1139 = vmatpush1.bf16.msra.mxu0 0
        %1140 = vmatprep.subr.bf16.mxu0 0
        %1141 = vmatpush1.bf16.msra.mxu0 0
        %1142 = vmatprep.subr.bf16.mxu0 0
        %1143 = vmatpush1.bf16.msra.mxu0 0
        %1144 = vmatprep.subr.bf16.mxu0 0
        %1145 = vmatpush1.bf16.msra.mxu0 0
        %1146 = vmatprep.subr.bf16.mxu0 0
        %1147 = vmatpush1.bf16.msra.mxu0 0
        %1148 = vmatprep.subr.bf16.mxu0 0
        %1149 = vmatpush1.bf16.msra.mxu0 0
        %1150 = vmatprep.subr.bf16.mxu0 0
        %1151 = vmatpush1.bf16.msra.mxu0 0
        %1152 = vmatprep.mubr.bf16.mxu0 0
        %1153 = vmatmul.mubr.bf16.gmra.mrb[0].mxu0 %v1112
        %v1154 = vpop.f32.mrb[0].mxu0
        %v1155 = vadd.f32 %v1109, %v1154
        %v1156 = vpop.f32.mrb[0].mxu0
        %v1157 = vpop.f32.mrb[0].mxu0
        %v1158 = vadd.f32 %v1109, %v1157
        %v1159 = vpop.f32.mrb[0].mxu0
        %1160 = vmatprep.mubr.bf16.mxu0 0
        %1161 = vmatmul.mubr.bf16.gmra.mrb[0].mxu0 %v1115
        %v1162 = vpop.f32.mrb[0].mxu0
        %v1163 = vadd.f32 %v1109, %v1162
        %v1164 = vpop.f32.mrb[0].mxu0
        %v1165 = vpop.f32.mrb[0].mxu0
        %v1166 = vadd.f32 %v1109, %v1165
        %v1167 = vpop.f32.mrb[0].mxu0
        %1168 = vdwg.mxu0
        %v1169 = vld [vmem:[%s316] ss:$2 sm:$0xff]
        %s1170 = scalar_lea.vmem %s316, 32 [#allocation3]
        %v1171 = vld [vmem:[%s1170] ss:$2 sm:$0xff]
        %s1172 = scalar_lea.vmem %s316, 64 [#allocation3]
        %v1173 = vld [vmem:[%s1172] ss:$2 sm:$0xff]
        %s1174 = scalar_lea.vmem %s316, 96 [#allocation3]
        %v1175 = vld [vmem:[%s1174] ss:$2 sm:$0xff]
        %v1176 = vpack.c.bf16 %v1171, %v1169
        %v1177 = vpack.c.bf16 %v1175, %v1173
        %v1179 = vlaneseq
        %v1180 = vshrl.u32 %v1179, 7
        %v1181 = vsub.s32 0, %v1180
        %v1182 = vrot.slane %v360, %v1181
        %v1186 = vunpack.c.l.b16 %v358
        %v1187 = vunpack.c.l.b16 %v359
        %v1188 = vpack.c.b16 %v1187, %v1186
        %v1191 = vsel %vm400, %v1176, 0
        %v1194 = vsel %vm400, %v1177, 0
        %1196 = vmatprep.subr.bf16.mxu0 0
        %1197 = vmatpush1.bf16.msra.mxu0 %v1188
        %1198 = vmatprep.subr.bf16.mxu0 0
        %1199 = vmatpush1.bf16.msra.mxu0 0
        %1200 = vmatprep.subr.bf16.mxu0 0
        %1201 = vmatpush1.bf16.msra.mxu0 0
        %1202 = vmatprep.subr.bf16.mxu0 0
        %1203 = vmatpush1.bf16.msra.mxu0 0
        %1204 = vmatprep.subr.bf16.mxu0 0
        %1205 = vmatpush1.bf16.msra.mxu0 0
        %1206 = vmatprep.subr.bf16.mxu0 0
        %1207 = vmatpush1.bf16.msra.mxu0 0
        %1208 = vmatprep.subr.bf16.mxu0 0
        %1209 = vmatpush1.bf16.msra.mxu0 0
        %1210 = vmatprep.subr.bf16.mxu0 0
        %1211 = vmatpush1.bf16.msra.mxu0 0
        %1212 = vmatprep.subr.bf16.mxu0 0
        %1213 = vmatpush1.bf16.msra.mxu0 0
        %1214 = vmatprep.subr.bf16.mxu0 0
        %1215 = vmatpush1.bf16.msra.mxu0 0
        %1216 = vmatprep.subr.bf16.mxu0 0
        %1217 = vmatpush1.bf16.msra.mxu0 0
        %1218 = vmatprep.subr.bf16.mxu0 0
        %1219 = vmatpush1.bf16.msra.mxu0 0
        %1220 = vmatprep.subr.bf16.mxu0 0
        %1221 = vmatpush1.bf16.msra.mxu0 0
        %1222 = vmatprep.subr.bf16.mxu0 0
        %1223 = vmatpush1.bf16.msra.mxu0 0
        %1224 = vmatprep.subr.bf16.mxu0 0
        %1225 = vmatpush1.bf16.msra.mxu0 0
        %1226 = vmatprep.subr.bf16.mxu0 0
        %1227 = vmatpush1.bf16.msra.mxu0 0
        %1228 = vmatprep.mubr.bf16.mxu0 0
        %1229 = vmatmul.mubr.bf16.gmra.mrb[0].mxu0 %v1191
        %v1230 = vpop.f32.mrb[0].mxu0
        %v1231 = vadd.f32 %v1182, %v1230
        %v1232 = vpop.f32.mrb[0].mxu0
        %v1233 = vpop.f32.mrb[0].mxu0
        %v1234 = vadd.f32 %v1182, %v1233
        %v1235 = vpop.f32.mrb[0].mxu0
        %1236 = vmatprep.mubr.bf16.mxu0 0
        %1237 = vmatmul.mubr.bf16.gmra.mrb[0].mxu0 %v1194
        %v1238 = vpop.f32.mrb[0].mxu0
        %v1239 = vadd.f32 %v1182, %v1238
        %v1240 = vpop.f32.mrb[0].mxu0
        %v1241 = vpop.f32.mrb[0].mxu0
        %v1242 = vadd.f32 %v1182, %v1241
        %v1243 = vpop.f32.mrb[0].mxu0
        %1244 = vdwg.mxu0
        %v1245 = vadd.f32 %v1155, %v1231
        %v1246 = vadd.f32 %v1158, %v1234
        %v1247 = vadd.f32 %v1163, %v1239
        %v1248 = vadd.f32 %v1166, %v1242
        %v1249 = vmax.f32 %v1245, 0.0
        %v1250 = vmax.f32 %v1246, 0.0
        %v1251 = vmax.f32 %v1247, 0.0
        %v1252 = vmax.f32 %v1248, 0.0
        %vm1253 = vcmask 261120
        %1254 = vst.msk [vmem:[%s350] sm:$0xff] %vm1253, %v1249
        %1255 = vst.msk [vmem:[%s350 + $0x8] sm:$0xff] %vm1253, %v1250
        %1256 = vst.msk [vmem:[%s350 + $0x10] sm:$0xff] %vm1253, %v1251
        %1257 = vst.msk [vmem:[%s350 + $0x18] sm:$0xff] %vm1253, %v1252
        %s1258 = scalar_lea.vmem %s316, 112 [#allocation3]
        %v1259 = vld [vmem:[%s1258] sm:$0xff]
        %v1260 = vld [vmem:[%s1258 + $0x8] sm:$0xff]
        %v1261 = vld [vmem:[%s1258 + $0x10] sm:$0xff]
        %v1262 = vld [vmem:[%s1258 + $0x18] sm:$0xff]
        %v1263 = vld [vmem:[%s1258 + $0x20] sm:$0xff]
        %v1264 = vld [vmem:[%s1258 + $0x28] sm:$0xff]
        %v1265 = vld [vmem:[%s1258 + $0x30] sm:$0xff]
        %v1266 = vld [vmem:[%s1258 + $0x38] sm:$0xff]
        %v1267 = vld [vmem:[%s1258 + $0x40] sm:$0xff]
        %v1268 = vld [vmem:[%s1258 + $0x48] sm:$0xff]
        %v1269 = vld [vmem:[%s1258 + $0x50] sm:$0xff]
        %v1270 = vld [vmem:[%s1258 + $0x58] sm:$0xff]
        %v1271 = vld [vmem:[%s1258 + $0x60] sm:$0xff]
        %v1272 = vld [vmem:[%s1258 + $0x68] sm:$0xff]
        %v1273 = vld [vmem:[%s1258 + $0x70] sm:$0xff]
        %v1274 = vld [vmem:[%s1258 + $0x78] sm:$0xff]
        %v1275 = vld [vmem:[%s1258 + $0x80] sm:$0xff]
        %v1276 = vld [vmem:[%s1258 + $0x88] sm:$0xff]
        %v1277 = vpack.c.bf16 %v1260, %v1259
        %v1278 = vpack.c.bf16 %v1262, %v1261
        %v1279 = vpack.c.bf16 %v1264, %v1263
        %v1280 = vpack.c.bf16 %v1266, %v1265
        %v1281 = vpack.c.bf16 %v1268, %v1267
        %v1282 = vpack.c.bf16 %v1270, %v1269
        %v1283 = vpack.c.bf16 %v1272, %v1271
        %v1284 = vpack.c.bf16 %v1274, %v1273
        %v1285 = vpack.c.bf16 %v1276, %v1275
        %v1287 = vsel %vm400, %v1277, 0
        %v1290 = vsel %vm400, %v1278, 0
        %v1293 = vsel %vm400, %v1279, 0
        %v1296 = vsel %vm400, %v1280, 0
        %v1299 = vsel %vm400, %v1281, 0
        %v1302 = vsel %vm400, %v1282, 0
        %v1305 = vsel %vm400, %v1283, 0
        %v1308 = vsel %vm400, %v1284, 0
        %v1311 = vsel %vm400, %v1285, 0
        %1313 = vmatprep.subr.bf16.mxu0 0
        %1314 = vmatpush1.bf16.msra.mxu0 %v398
        %1315 = vmatprep.subr.bf16.mxu0 0
        %1316 = vmatpush1.bf16.msra.mxu0 0
        %1317 = vmatprep.subr.bf16.mxu0 0
        %1318 = vmatpush1.bf16.msra.mxu0 0
        %1319 = vmatprep.subr.bf16.mxu0 0
        %1320 = vmatpush1.bf16.msra.mxu0 0
        %1321 = vmatprep.subr.bf16.mxu0 0
        %1322 = vmatpush1.bf16.msra.mxu0 0
        %1323 = vmatprep.subr.bf16.mxu0 0
        %1324 = vmatpush1.bf16.msra.mxu0 0
        %1325 = vmatprep.subr.bf16.mxu0 0
        %1326 = vmatpush1.bf16.msra.mxu0 0
        %1327 = vmatprep.subr.bf16.mxu0 0
        %1328 = vmatpush1.bf16.msra.mxu0 0
        %1329 = vmatprep.subr.bf16.mxu0 0
        %1330 = vmatpush1.bf16.msra.mxu0 0
        %1331 = vmatprep.subr.bf16.mxu0 0
        %1332 = vmatpush1.bf16.msra.mxu0 0
        %1333 = vmatprep.subr.bf16.mxu0 0
        %1334 = vmatpush1.bf16.msra.mxu0 0
        %1335 = vmatprep.subr.bf16.mxu0 0
        %1336 = vmatpush1.bf16.msra.mxu0 0
        %1337 = vmatprep.subr.bf16.mxu0 0
        %1338 = vmatpush1.bf16.msra.mxu0 0
        %1339 = vmatprep.subr.bf16.mxu0 0
        %1340 = vmatpush1.bf16.msra.mxu0 0
        %1341 = vmatprep.subr.bf16.mxu0 0
        %1342 = vmatpush1.bf16.msra.mxu0 0
        %1343 = vmatprep.subr.bf16.mxu0 0
        %1344 = vmatpush1.bf16.msra.mxu0 0
        %1345 = vmatprep.mubr.bf16.mxu0 0
        %1346 = vmatmul.mubr.bf16.gmra.mrb[0].mxu0 %v1287
        %v1347 = vpop.f32.mrb[0].mxu0
        %v1348 = vadd.f32 %v392, %v1347
        %v1349 = vpop.f32.mrb[0].mxu0
        %v1350 = vpop.f32.mrb[0].mxu0
        %v1351 = vadd.f32 %v392, %v1350
        %v1352 = vpop.f32.mrb[0].mxu0
        %1353 = vmatprep.mubr.bf16.mxu0 0
        %1354 = vmatmul.mubr.bf16.gmra.mrb[0].mxu0 %v1290
        %v1355 = vpop.f32.mrb[0].mxu0
        %v1356 = vadd.f32 %v392, %v1355
        %v1357 = vpop.f32.mrb[0].mxu0
        %v1358 = vpop.f32.mrb[0].mxu0
        %v1359 = vadd.f32 %v392, %v1358
        %v1360 = vpop.f32.mrb[0].mxu0
        %1361 = vmatprep.mubr.bf16.mxu0 0
        %1362 = vmatmul.mubr.bf16.gmra.mrb[0].mxu0 %v1293
        %v1363 = vpop.f32.mrb[0].mxu0
        %v1364 = vadd.f32 %v392, %v1363
        %v1365 = vpop.f32.mrb[0].mxu0
        %v1366 = vpop.f32.mrb[0].mxu0
        %v1367 = vadd.f32 %v392, %v1366
        %v1368 = vpop.f32.mrb[0].mxu0
        %1369 = vmatprep.mubr.bf16.mxu0 0
        %1370 = vmatmul.mubr.bf16.gmra.mrb[0].mxu0 %v1296
        %v1371 = vpop.f32.mrb[0].mxu0
        %v1372 = vadd.f32 %v392, %v1371
        %v1373 = vpop.f32.mrb[0].mxu0
        %v1374 = vpop.f32.mrb[0].mxu0
        %v1375 = vadd.f32 %v392, %v1374
        %v1376 = vpop.f32.mrb[0].mxu0
        %1377 = vmatprep.mubr.bf16.mxu0 0
        %1378 = vmatmul.mubr.bf16.gmra.mrb[0].mxu0 %v1299
        %v1379 = vpop.f32.mrb[0].mxu0
        %v1380 = vadd.f32 %v392, %v1379
        %v1381 = vpop.f32.mrb[0].mxu0
        %v1382 = vpop.f32.mrb[0].mxu0
        %v1383 = vadd.f32 %v392, %v1382
        %v1384 = vpop.f32.mrb[0].mxu0
        %1385 = vmatprep.mubr.bf16.mxu0 0
        %1386 = vmatmul.mubr.bf16.gmra.mrb[0].mxu0 %v1302
        %v1387 = vpop.f32.mrb[0].mxu0
        %v1388 = vadd.f32 %v392, %v1387
        %v1389 = vpop.f32.mrb[0].mxu0
        %v1390 = vpop.f32.mrb[0].mxu0
        %v1391 = vadd.f32 %v392, %v1390
        %v1392 = vpop.f32.mrb[0].mxu0
        %1393 = vmatprep.mubr.bf16.mxu0 0
        %1394 = vmatmul.mubr.bf16.gmra.mrb[0].mxu0 %v1305
        %v1395 = vpop.f32.mrb[0].mxu0
        %v1396 = vadd.f32 %v392, %v1395
        %v1397 = vpop.f32.mrb[0].mxu0
        %v1398 = vpop.f32.mrb[0].mxu0
        %v1399 = vadd.f32 %v392, %v1398
        %v1400 = vpop.f32.mrb[0].mxu0
        %1401 = vmatprep.mubr.bf16.mxu0 0
        %1402 = vmatmul.mubr.bf16.gmra.mrb[0].mxu0 %v1308
        %v1403 = vpop.f32.mrb[0].mxu0
        %v1404 = vadd.f32 %v392, %v1403
        %v1405 = vpop.f32.mrb[0].mxu0
        %v1406 = vpop.f32.mrb[0].mxu0
        %v1407 = vadd.f32 %v392, %v1406
        %v1408 = vpop.f32.mrb[0].mxu0
        %1409 = vmatprep.mubr.bf16.mxu0 0
        %1410 = vmatmul.mubr.bf16.gmra.mrb[0].mxu0 %v1311
        %v1411 = vpop.f32.mrb[0].mxu0
        %v1412 = vadd.f32 %v392, %v1411
        %v1413 = vpop.f32.mrb[0].mxu0
        %v1414 = vpop.f32.mrb[0].mxu0
        %v1415 = vadd.f32 %v392, %v1414
        %v1416 = vpop.f32.mrb[0].mxu0
        %1417 = vdwg.mxu0
        %v1418 = vmax.f32 %v1348, 0.0
        %v1419 = vmax.f32 %v1351, 0.0
        %v1420 = vmax.f32 %v1356, 0.0
        %v1421 = vmax.f32 %v1359, 0.0
        %v1422 = vmax.f32 %v1364, 0.0
        %v1423 = vmax.f32 %v1367, 0.0
        %v1424 = vmax.f32 %v1372, 0.0
        %v1425 = vmax.f32 %v1375, 0.0
        %v1426 = vmax.f32 %v1380, 0.0
        %v1427 = vmax.f32 %v1383, 0.0
        %v1428 = vmax.f32 %v1388, 0.0
        %v1429 = vmax.f32 %v1391, 0.0
        %v1430 = vmax.f32 %v1396, 0.0
        %v1431 = vmax.f32 %v1399, 0.0
        %v1432 = vmax.f32 %v1404, 0.0
        %v1433 = vmax.f32 %v1407, 0.0
        %v1434 = vmax.f32 %v1412, 0.0
        %v1435 = vmax.f32 %v1415, 0.0
        %s1436 = scalar_lea.vmem [#allocation2], 216
        %1437 = vst.msk [vmem:[%s1436] sm:$0xff] %vm551, 0.0
        %1438 = vst.msk [vmem:[%s1436 + $0x8] sm:$0xff] %vm551, 0.0
        %1439 = vst.msk [vmem:[%s1436 + $0x10] sm:$0x3] %vm554, 0.0
        %v1458 = vrot.slane %v1418, 7
        %v1459 = vrot.slane %v1419, 7
        %v1460 = vsel %vm574, %v1458, %v1459
        %v1461 = vrot.slane %v1420, 7
        %v1462 = vrot.slane %v1421, 7
        %v1463 = vsel %vm574, %v1461, %v1462
        %v1464 = vrot.slane %v1422, 7
        %v1465 = vrot.slane %v1423, 7
        %v1466 = vsel %vm574, %v1464, %v1465
        %v1467 = vrot.slane %v1424, 7
        %v1468 = vrot.slane %v1425, 7
        %v1469 = vsel %vm574, %v1467, %v1468
        %v1470 = vrot.slane %v1426, 7
        %v1471 = vrot.slane %v1427, 7
        %v1472 = vsel %vm574, %v1470, %v1471
        %v1473 = vrot.slane %v1428, 7
        %v1474 = vrot.slane %v1429, 7
        %v1475 = vsel %vm574, %v1473, %v1474
        %v1476 = vrot.slane %v1430, 7
        %v1477 = vrot.slane %v1431, 7
        %v1478 = vsel %vm574, %v1476, %v1477
        %v1479 = vrot.slane %v1432, 7
        %v1480 = vrot.slane %v1433, 7
        %v1481 = vsel %vm574, %v1479, %v1480
        %v1482 = vrot.slane %v1434, 7
        %v1483 = vrot.slane %v1435, 7
        %v1484 = vsel %vm574, %v1482, %v1483
        %v1512 = vsel %vm574, 0.0, %v1458
        %v1513 = vsel %vm574, 0.0, %v1461
        %v1514 = vsel %vm574, 0.0, %v1464
        %v1515 = vsel %vm574, 0.0, %v1467
        %v1516 = vsel %vm574, 0.0, %v1470
        %v1517 = vsel %vm574, 0.0, %v1473
        %v1518 = vsel %vm574, 0.0, %v1476
        %v1519 = vsel %vm574, 0.0, %v1479
        %v1520 = vsel %vm574, 0.0, %v1482
        %v1521 = vsel %vm574, %v1459, 0.0
        %v1522 = vsel %vm574, %v1462, 0.0
        %v1523 = vsel %vm574, %v1465, 0.0
        %v1524 = vsel %vm574, %v1468, 0.0
        %v1525 = vsel %vm574, %v1471, 0.0
        %v1526 = vsel %vm574, %v1474, 0.0
        %v1527 = vsel %vm574, %v1477, 0.0
        %v1528 = vsel %vm574, %v1480, 0.0
        %v1529 = vsel %vm574, %v1483, 0.0
        %1530 = vst.msk [vmem:[#allocation2] sm:$0xff] %vm551, %v1512
        %1531 = vst.msk [vmem:[#allocation2 + $0x8] sm:$0xff] %vm551, %v1460
        %1532 = vst.msk [vmem:[#allocation2 + $0x10] sm:$0x3] %vm554, %v1521
        %1533 = vst.msk [vmem:[#allocation2 + $0x18] sm:$0xff] %vm551, %v1513
        %1534 = vst.msk [vmem:[#allocation2 + $0x20] sm:$0xff] %vm551, %v1463
        %1535 = vst.msk [vmem:[#allocation2 + $0x28] sm:$0x3] %vm554, %v1522
        %1536 = vst.msk [vmem:[#allocation2 + $0x30] sm:$0xff] %vm551, %v1514
        %1537 = vst.msk [vmem:[#allocation2 + $0x38] sm:$0xff] %vm551, %v1466
        %1538 = vst.msk [vmem:[#allocation2 + $0x40] sm:$0x3] %vm554, %v1523
        %1539 = vst.msk [vmem:[#allocation2 + $0x48] sm:$0xff] %vm551, %v1515
        %1540 = vst.msk [vmem:[#allocation2 + $0x50] sm:$0xff] %vm551, %v1469
        %1541 = vst.msk [vmem:[#allocation2 + $0x58] sm:$0x3] %vm554, %v1524
        %1542 = vst.msk [vmem:[#allocation2 + $0x60] sm:$0xff] %vm551, %v1516
        %1543 = vst.msk [vmem:[#allocation2 + $0x68] sm:$0xff] %vm551, %v1472
        %1544 = vst.msk [vmem:[#allocation2 + $0x70] sm:$0x3] %vm554, %v1525
        %1545 = vst.msk [vmem:[#allocation2 + $0x78] sm:$0xff] %vm551, %v1517
        %1546 = vst.msk [vmem:[#allocation2 + $0x80] sm:$0xff] %vm551, %v1475
        %1547 = vst.msk [vmem:[#allocation2 + $0x88] sm:$0x3] %vm554, %v1526
        %1548 = vst.msk [vmem:[#allocation2 + $0x90] sm:$0xff] %vm551, %v1518
        %1549 = vst.msk [vmem:[#allocation2 + $0x98] sm:$0xff] %vm551, %v1478
        %1550 = vst.msk [vmem:[#allocation2 + $0xa0] sm:$0x3] %vm554, %v1527
        %1551 = vst.msk [vmem:[#allocation2 + $0xa8] sm:$0xff] %vm551, %v1519
        %1552 = vst.msk [vmem:[#allocation2 + $0xb0] sm:$0xff] %vm551, %v1481
        %1553 = vst.msk [vmem:[#allocation2 + $0xb8] sm:$0x3] %vm554, %v1528
        %1554 = vst.msk [vmem:[#allocation2 + $0xc0] sm:$0xff] %vm551, %v1520
        %1555 = vst.msk [vmem:[#allocation2 + $0xc8] sm:$0xff] %vm551, %v1484
        %1556 = vst.msk [vmem:[#allocation2 + $0xd0] sm:$0x3] %vm554, %v1529
        %v1557 = vld [vmem:[#allocation2] ss:$2 sm:$0xff]
        %v1558 = vld [vmem:[%s676] ss:$2 sm:$0xff]
        %v1559 = vld [vmem:[%s678] ss:$2 sm:$0xff]
        %v1560 = vld [vmem:[%s680] ss:$2 sm:$0xff]
        %v1561 = vld [vmem:[%s682] ss:$2 sm:$0xff]
        %v1562 = vld [vmem:[%s684] ss:$2 sm:$0xff]
        %v1563 = vld [vmem:[%s686] ss:$2 sm:$0xff]
        %v1564 = vld [vmem:[%s688] ss:$2 sm:$0xff]
        %v1565 = vld [vmem:[%s690] ss:$2 sm:$0xff]
        %v1566 = vld [vmem:[%s692] ss:$2 sm:$0xff]
        %v1567 = vld [vmem:[%s694] ss:$2 sm:$0xff]
        %v1568 = vld [vmem:[%s696] ss:$2 sm:$0xff]
        %1573 = vrot.lane.b32.xlu0 %v1561, 8
        %v1574 = vpop.permute.xlu0 %1573
        %1575 = vrot.lane.b32.xlu0 %v1562, 8
        %v1576 = vpop.permute.xlu0 %1575
        %1577 = vrot.lane.b32.xlu0 %v1563, 8
        %v1578 = vpop.permute.xlu0 %1577
        %1579 = vrot.lane.b32.xlu0 %v1564, 8
        %v1580 = vpop.permute.xlu0 %1579
        %1589 = vrot.lane.b32.xlu0 %v1565, 16
        %v1590 = vpop.permute.xlu0 %1589
        %1591 = vrot.lane.b32.xlu0 %v1566, 16
        %v1592 = vpop.permute.xlu0 %1591
        %1593 = vrot.lane.b32.xlu0 %v1567, 16
        %v1594 = vpop.permute.xlu0 %1593
        %1595 = vrot.lane.b32.xlu0 %v1568, 16
        %v1596 = vpop.permute.xlu0 %1595
        %v1601 = vsel %vm551, %v1557, %v1574
        %v1602 = vsel %vm551, %v1558, %v1576
        %v1603 = vsel %vm551, %v1559, %v1578
        %v1604 = vsel %vm551, %v1560, %v1580
        %v1605 = vsel %vm400, %v1601, %v1590
        %v1606 = vsel %vm400, %v1602, %v1592
        %v1607 = vsel %vm400, %v1603, %v1594
        %v1608 = vsel %vm400, %v1604, %v1596
        %v1609 = vpack.c.bf16 %v1606, %v1605
        %v1610 = vpack.c.bf16 %v1608, %v1607
        %v1611 = vld [vmem:[%s3] sm:$0xf]
        %v1612 = vld [vmem:[%s3 + $0x4] sm:$0xf]
        %v1613 = vld [vmem:[%s3 + $0x8] sm:$0xf]
        %v1614 = vld [vmem:[%s647] ss:$2 sm:$0xff]
        %v1615 = vld [vmem:[%s744] ss:$2 sm:$0xff]
        %v1616 = vld [vmem:[%s746] ss:$2 sm:$0xff]
        %v1617 = vld [vmem:[%s748] ss:$2 sm:$0xff]
        %v1618 = vld [vmem:[%s750] ss:$2 sm:$0xff]
        %v1619 = vld [vmem:[%s752] ss:$2 sm:$0xff]
        %v1620 = vld [vmem:[%s754] ss:$2 sm:$0xff]
        %v1621 = vld [vmem:[%s756] ss:$2 sm:$0xff]
        %v1622 = vld [vmem:[%s758] ss:$2 sm:$0xff]
        %v1623 = vld [vmem:[%s760] ss:$2 sm:$0xff]
        %v1624 = vld [vmem:[%s762] ss:$2 sm:$0xff]
        %v1625 = vld [vmem:[%s764] ss:$2 sm:$0xff]
        %1630 = vrot.lane.b32.xlu0 %v1618, 8
        %v1631 = vpop.permute.xlu0 %1630
        %1632 = vrot.lane.b32.xlu0 %v1619, 8
        %v1633 = vpop.permute.xlu0 %1632
        %1634 = vrot.lane.b32.xlu0 %v1620, 8
        %v1635 = vpop.permute.xlu0 %1634
        %1636 = vrot.lane.b32.xlu0 %v1621, 8
        %v1637 = vpop.permute.xlu0 %1636
        %1646 = vrot.lane.b32.xlu0 %v1622, 16
        %v1647 = vpop.permute.xlu0 %1646
        %1648 = vrot.lane.b32.xlu0 %v1623, 16
        %v1649 = vpop.permute.xlu0 %1648
        %1650 = vrot.lane.b32.xlu0 %v1624, 16
        %v1651 = vpop.permute.xlu0 %1650
        %1652 = vrot.lane.b32.xlu0 %v1625, 16
        %v1653 = vpop.permute.xlu0 %1652
        %v1658 = vsel %vm551, %v1614, %v1631
        %v1659 = vsel %vm551, %v1615, %v1633
        %v1660 = vsel %vm551, %v1616, %v1635
        %v1661 = vsel %vm551, %v1617, %v1637
        %v1662 = vsel %vm400, %v1658, %v1647
        %v1663 = vsel %vm400, %v1659, %v1649
        %v1664 = vsel %vm400, %v1660, %v1651
        %v1665 = vsel %vm400, %v1661, %v1653
        %v1666 = vpack.c.bf16 %v1663, %v1662
        %v1667 = vpack.c.bf16 %v1665, %v1664
        %v1668 = vld [vmem:[%s808] sm:$0xf]
        %v1669 = vld [vmem:[%s808 + $0x4] sm:$0xf]
        %v1670 = vld [vmem:[%s808 + $0x8] sm:$0xf]
        %v1674 = vunpack.c.l.b16 %v1668
        %v1675 = vunpack.c.l.b16 %v1669
        %v1676 = vunpack.c.l.b16 %v1670
        %v1677 = vpack.c.b16 %v1675, %v1674
        %v1678 = vpack.c.b16 %v1676, %v1676
        %v1681 = vsel %vm821, %v1666, 0
        %v1684 = vsel %vm821, %v1667, 0
        %v1687 = vsel %vm828, %v1678, 0
        %1689 = vmatprep.subr.bf16.mxu0 0
        %1690 = vmatpush1.bf16.msra.mxu0 %v1677
        %1691 = vmatprep.subr.bf16.mxu0 0
        %1692 = vmatpush1.bf16.msra.mxu0 %v1687
        %1693 = vmatprep.subr.bf16.mxu0 0
        %1694 = vmatpush1.bf16.msra.mxu0 0
        %1695 = vmatprep.subr.bf16.mxu0 0
        %1696 = vmatpush1.bf16.msra.mxu0 0
        %1697 = vmatprep.subr.bf16.mxu0 0
        %1698 = vmatpush1.bf16.msra.mxu0 0
        %1699 = vmatprep.subr.bf16.mxu0 0
        %1700 = vmatpush1.bf16.msra.mxu0 0
        %1701 = vmatprep.subr.bf16.mxu0 0
        %1702 = vmatpush1.bf16.msra.mxu0 0
        %1703 = vmatprep.subr.bf16.mxu0 0
        %1704 = vmatpush1.bf16.msra.mxu0 0
        %1705 = vmatprep.subr.bf16.mxu0 0
        %1706 = vmatpush1.bf16.msra.mxu0 0
        %1707 = vmatprep.subr.bf16.mxu0 0
        %1708 = vmatpush1.bf16.msra.mxu0 0
        %1709 = vmatprep.subr.bf16.mxu0 0
        %1710 = vmatpush1.bf16.msra.mxu0 0
        %1711 = vmatprep.subr.bf16.mxu0 0
        %1712 = vmatpush1.bf16.msra.mxu0 0
        %1713 = vmatprep.subr.bf16.mxu0 0
        %1714 = vmatpush1.bf16.msra.mxu0 0
        %1715 = vmatprep.subr.bf16.mxu0 0
        %1716 = vmatpush1.bf16.msra.mxu0 0
        %1717 = vmatprep.subr.bf16.mxu0 0
        %1718 = vmatpush1.bf16.msra.mxu0 0
        %1719 = vmatprep.subr.bf16.mxu0 0
        %1720 = vmatpush1.bf16.msra.mxu0 0
        %1721 = vmatprep.mubr.bf16.mxu0 0
        %1722 = vmatmul.mubr.bf16.gmra.mrb[0].mxu0 %v1681
        %v1723 = vpop.f32.mrb[0].mxu0
        %v1724 = vadd.f32 0.0, %v1723
        %v1725 = vpop.f32.mrb[0].mxu0
        %v1726 = vpop.f32.mrb[0].mxu0
        %v1727 = vadd.f32 0.0, %v1726
        %v1728 = vpop.f32.mrb[0].mxu0
        %1729 = vmatprep.mubr.bf16.mxu0 0
        %1730 = vmatmul.mubr.bf16.gmra.mrb[0].mxu0 %v1684
        %v1731 = vpop.f32.mrb[0].mxu0
        %v1732 = vadd.f32 0.0, %v1731
        %v1733 = vpop.f32.mrb[0].mxu0
        %v1734 = vpop.f32.mrb[0].mxu0
        %v1735 = vadd.f32 0.0, %v1734
        %v1736 = vpop.f32.mrb[0].mxu0
        %1737 = vdwg.mxu0
        %v1741 = vunpack.c.l.b16 %v1611
        %v1742 = vunpack.c.l.b16 %v1612
        %v1743 = vunpack.c.l.b16 %v1613
        %v1744 = vpack.c.b16 %v1742, %v1741
        %v1745 = vpack.c.b16 %v1743, %v1743
        %v1748 = vsel %vm821, %v1609, 0
        %v1751 = vsel %vm821, %v1610, 0
        %v1754 = vsel %vm828, %v1745, 0
        %1756 = vmatprep.subr.bf16.mxu0 0
        %1757 = vmatpush1.bf16.msra.mxu0 %v1744
        %1758 = vmatprep.subr.bf16.mxu0 0
        %1759 = vmatpush1.bf16.msra.mxu0 %v1754
        %1760 = vmatprep.subr.bf16.mxu0 0
        %1761 = vmatpush1.bf16.msra.mxu0 0
        %1762 = vmatprep.subr.bf16.mxu0 0
        %1763 = vmatpush1.bf16.msra.mxu0 0
        %1764 = vmatprep.subr.bf16.mxu0 0
        %1765 = vmatpush1.bf16.msra.mxu0 0
        %1766 = vmatprep.subr.bf16.mxu0 0
        %1767 = vmatpush1.bf16.msra.mxu0 0
        %1768 = vmatprep.subr.bf16.mxu0 0
        %1769 = vmatpush1.bf16.msra.mxu0 0
        %1770 = vmatprep.subr.bf16.mxu0 0
        %1771 = vmatpush1.bf16.msra.mxu0 0
        %1772 = vmatprep.subr.bf16.mxu0 0
        %1773 = vmatpush1.bf16.msra.mxu0 0
        %1774 = vmatprep.subr.bf16.mxu0 0
        %1775 = vmatpush1.bf16.msra.mxu0 0
        %1776 = vmatprep.subr.bf16.mxu0 0
        %1777 = vmatpush1.bf16.msra.mxu0 0
        %1778 = vmatprep.subr.bf16.mxu0 0
        %1779 = vmatpush1.bf16.msra.mxu0 0
        %1780 = vmatprep.subr.bf16.mxu0 0
        %1781 = vmatpush1.bf16.msra.mxu0 0
        %1782 = vmatprep.subr.bf16.mxu0 0
        %1783 = vmatpush1.bf16.msra.mxu0 0
        %1784 = vmatprep.subr.bf16.mxu0 0
        %1785 = vmatpush1.bf16.msra.mxu0 0
        %1786 = vmatprep.subr.bf16.mxu0 0
        %1787 = vmatpush1.bf16.msra.mxu0 0
        %1788 = vmatprep.mubr.bf16.mxu0 0
        %1789 = vmatmul.mubr.bf16.gmra.mrb[0].mxu0 %v1748
        %v1790 = vpop.f32.mrb[0].mxu0
        %v1791 = vadd.f32 %v1724, %v1790
        %v1792 = vpop.f32.mrb[0].mxu0
        %v1793 = vpop.f32.mrb[0].mxu0
        %v1794 = vadd.f32 %v1727, %v1793
        %v1795 = vpop.f32.mrb[0].mxu0
        %1796 = vmatprep.mubr.bf16.mxu0 0
        %1797 = vmatmul.mubr.bf16.gmra.mrb[0].mxu0 %v1751
        %v1798 = vpop.f32.mrb[0].mxu0
        %v1799 = vadd.f32 %v1732, %v1798
        %v1800 = vpop.f32.mrb[0].mxu0
        %v1801 = vpop.f32.mrb[0].mxu0
        %v1802 = vadd.f32 %v1735, %v1801
        %v1803 = vpop.f32.mrb[0].mxu0
        %1804 = vdwg.mxu0
        %v1805 = vld [vmem:[%s948] ss:$2 sm:$0xff]
        %v1806 = vld [vmem:[%s950] ss:$2 sm:$0xff]
        %v1807 = vld [vmem:[%s952] ss:$2 sm:$0xff]
        %v1808 = vld [vmem:[%s954] ss:$2 sm:$0xff]
        %v1809 = vld [vmem:[%s956] ss:$2 sm:$0xff]
        %v1810 = vld [vmem:[%s958] ss:$2 sm:$0xff]
        %v1811 = vld [vmem:[%s960] ss:$2 sm:$0xff]
        %v1812 = vld [vmem:[%s962] ss:$2 sm:$0xff]
        %v1813 = vld [vmem:[%s964] ss:$2 sm:$0xff]
        %v1814 = vld [vmem:[%s966] ss:$2 sm:$0xff]
        %v1815 = vld [vmem:[%s968] ss:$2 sm:$0xff]
        %v1816 = vld [vmem:[%s970] ss:$2 sm:$0xff]
        %1821 = vrot.lane.b32.xlu0 %v1809, 8
        %v1822 = vpop.permute.xlu0 %1821
        %1823 = vrot.lane.b32.xlu0 %v1810, 8
        %v1824 = vpop.permute.xlu0 %1823
        %1825 = vrot.lane.b32.xlu0 %v1811, 8
        %v1826 = vpop.permute.xlu0 %1825
        %1827 = vrot.lane.b32.xlu0 %v1812, 8
        %v1828 = vpop.permute.xlu0 %1827
        %1837 = vrot.lane.b32.xlu0 %v1813, 16
        %v1838 = vpop.permute.xlu0 %1837
        %1839 = vrot.lane.b32.xlu0 %v1814, 16
        %v1840 = vpop.permute.xlu0 %1839
        %1841 = vrot.lane.b32.xlu0 %v1815, 16
        %v1842 = vpop.permute.xlu0 %1841
        %1843 = vrot.lane.b32.xlu0 %v1816, 16
        %v1844 = vpop.permute.xlu0 %1843
        %v1849 = vsel %vm551, %v1805, %v1822
        %v1850 = vsel %vm551, %v1806, %v1824
        %v1851 = vsel %vm551, %v1807, %v1826
        %v1852 = vsel %vm551, %v1808, %v1828
        %v1853 = vsel %vm400, %v1849, %v1838
        %v1854 = vsel %vm400, %v1850, %v1840
        %v1855 = vsel %vm400, %v1851, %v1842
        %v1856 = vsel %vm400, %v1852, %v1844
        %v1857 = vpack.c.bf16 %v1854, %v1853
        %v1858 = vpack.c.bf16 %v1856, %v1855
        %v1859 = vld [vmem:[%s1014] sm:$0xf]
        %v1860 = vld [vmem:[%s1014 + $0x4] sm:$0xf]
        %v1861 = vld [vmem:[%s1014 + $0x8] sm:$0xf]
        %v1865 = vunpack.c.l.b16 %v1859
        %v1866 = vunpack.c.l.b16 %v1860
        %v1867 = vunpack.c.l.b16 %v1861
        %v1868 = vpack.c.b16 %v1866, %v1865
        %v1869 = vpack.c.b16 %v1867, %v1867
        %v1872 = vsel %vm821, %v1857, 0
        %v1875 = vsel %vm821, %v1858, 0
        %v1878 = vsel %vm828, %v1869, 0
        %1880 = vmatprep.subr.bf16.mxu0 0
        %1881 = vmatpush1.bf16.msra.mxu0 %v1868
        %1882 = vmatprep.subr.bf16.mxu0 0
        %1883 = vmatpush1.bf16.msra.mxu0 %v1878
        %1884 = vmatprep.subr.bf16.mxu0 0
        %1885 = vmatpush1.bf16.msra.mxu0 0
        %1886 = vmatprep.subr.bf16.mxu0 0
        %1887 = vmatpush1.bf16.msra.mxu0 0
        %1888 = vmatprep.subr.bf16.mxu0 0
        %1889 = vmatpush1.bf16.msra.mxu0 0
        %1890 = vmatprep.subr.bf16.mxu0 0
        %1891 = vmatpush1.bf16.msra.mxu0 0
        %1892 = vmatprep.subr.bf16.mxu0 0
        %1893 = vmatpush1.bf16.msra.mxu0 0
        %1894 = vmatprep.subr.bf16.mxu0 0
        %1895 = vmatpush1.bf16.msra.mxu0 0
        %1896 = vmatprep.subr.bf16.mxu0 0
        %1897 = vmatpush1.bf16.msra.mxu0 0
        %1898 = vmatprep.subr.bf16.mxu0 0
        %1899 = vmatpush1.bf16.msra.mxu0 0
        %1900 = vmatprep.subr.bf16.mxu0 0
        %1901 = vmatpush1.bf16.msra.mxu0 0
        %1902 = vmatprep.subr.bf16.mxu0 0
        %1903 = vmatpush1.bf16.msra.mxu0 0
        %1904 = vmatprep.subr.bf16.mxu0 0
        %1905 = vmatpush1.bf16.msra.mxu0 0
        %1906 = vmatprep.subr.bf16.mxu0 0
        %1907 = vmatpush1.bf16.msra.mxu0 0
        %1908 = vmatprep.subr.bf16.mxu0 0
        %1909 = vmatpush1.bf16.msra.mxu0 0
        %1910 = vmatprep.subr.bf16.mxu0 0
        %1911 = vmatpush1.bf16.msra.mxu0 0
        %1912 = vmatprep.mubr.bf16.mxu0 0
        %1913 = vmatmul.mubr.bf16.gmra.mrb[0].mxu0 %v1872
        %v1914 = vpop.f32.mrb[0].mxu0
        %v1915 = vadd.f32 0.0, %v1914
        %v1916 = vpop.f32.mrb[0].mxu0
        %v1917 = vpop.f32.mrb[0].mxu0
        %v1918 = vadd.f32 0.0, %v1917
        %v1919 = vpop.f32.mrb[0].mxu0
        %1920 = vmatprep.mubr.bf16.mxu0 0
        %1921 = vmatmul.mubr.bf16.gmra.mrb[0].mxu0 %v1875
        %v1922 = vpop.f32.mrb[0].mxu0
        %v1923 = vadd.f32 0.0, %v1922
        %v1924 = vpop.f32.mrb[0].mxu0
        %v1925 = vpop.f32.mrb[0].mxu0
        %v1926 = vadd.f32 0.0, %v1925
        %v1927 = vpop.f32.mrb[0].mxu0
        %1928 = vdwg.mxu0
        %v1929 = vadd.f32 %v1791, %v1915
        %v1930 = vadd.f32 %v1794, %v1918
        %v1931 = vadd.f32 %v1799, %v1923
        %v1932 = vadd.f32 %v1802, %v1926
        %v1933 = vadd.f32 %v1929, %v1093
        %v1934 = vadd.f32 %v1930, %v1093
        %v1935 = vadd.f32 %v1931, %v1093
        %v1936 = vadd.f32 %v1932, %v1093
        %v1937 = vmax.f32 %v1933, 0.0
        %v1938 = vmax.f32 %v1934, 0.0
        %v1939 = vmax.f32 %v1935, 0.0
        %v1940 = vmax.f32 %v1936, 0.0
        %v1941 = vpack.c.bf16 %v1938, %v1937
        %v1942 = vpack.c.bf16 %v1940, %v1939
        %v1944 = vsel %vm551, %v1941, 0
        %v1947 = vsel %vm551, %v1942, 0
        %1949 = vmatprep.subr.bf16.mxu0 0
        %1950 = vmatpush1.bf16.msra.mxu0 %v1118
        %1951 = vmatprep.subr.bf16.mxu0 0
        %1952 = vmatpush1.bf16.msra.mxu0 0
        %1953 = vmatprep.subr.bf16.mxu0 0
        %1954 = vmatpush1.bf16.msra.mxu0 0
        %1955 = vmatprep.subr.bf16.mxu0 0
        %1956 = vmatpush1.bf16.msra.mxu0 0
        %1957 = vmatprep.subr.bf16.mxu0 0
        %1958 = vmatpush1.bf16.msra.mxu0 0
        %1959 = vmatprep.subr.bf16.mxu0 0
        %1960 = vmatpush1.bf16.msra.mxu0 0
        %1961 = vmatprep.subr.bf16.mxu0 0
        %1962 = vmatpush1.bf16.msra.mxu0 0
        %1963 = vmatprep.subr.bf16.mxu0 0
        %1964 = vmatpush1.bf16.msra.mxu0 0
        %1965 = vmatprep.subr.bf16.mxu0 0
        %1966 = vmatpush1.bf16.msra.mxu0 0
        %1967 = vmatprep.subr.bf16.mxu0 0
        %1968 = vmatpush1.bf16.msra.mxu0 0
        %1969 = vmatprep.subr.bf16.mxu0 0
        %1970 = vmatpush1.bf16.msra.mxu0 0
        %1971 = vmatprep.subr.bf16.mxu0 0
        %1972 = vmatpush1.bf16.msra.mxu0 0
        %1973 = vmatprep.subr.bf16.mxu0 0
        %1974 = vmatpush1.bf16.msra.mxu0 0
        %1975 = vmatprep.subr.bf16.mxu0 0
        %1976 = vmatpush1.bf16.msra.mxu0 0
        %1977 = vmatprep.subr.bf16.mxu0 0
        %1978 = vmatpush1.bf16.msra.mxu0 0
        %1979 = vmatprep.subr.bf16.mxu0 0
        %1980 = vmatpush1.bf16.msra.mxu0 0
        %1981 = vmatprep.mubr.bf16.mxu0 0
        %1982 = vmatmul.mubr.bf16.gmra.mrb[0].mxu0 %v1944
        %v1983 = vpop.f32.mrb[0].mxu0
        %v1984 = vadd.f32 %v1109, %v1983
        %v1985 = vpop.f32.mrb[0].mxu0
        %v1986 = vpop.f32.mrb[0].mxu0
        %v1987 = vadd.f32 %v1109, %v1986
        %v1988 = vpop.f32.mrb[0].mxu0
        %1989 = vmatprep.mubr.bf16.mxu0 0
        %1990 = vmatmul.mubr.bf16.gmra.mrb[0].mxu0 %v1947
        %v1991 = vpop.f32.mrb[0].mxu0
        %v1992 = vadd.f32 %v1109, %v1991
        %v1993 = vpop.f32.mrb[0].mxu0
        %v1994 = vpop.f32.mrb[0].mxu0
        %v1995 = vadd.f32 %v1109, %v1994
        %v1996 = vpop.f32.mrb[0].mxu0
        %1997 = vdwg.mxu0
        %s1998 = scalar_lea.vmem %s316, 128 [#allocation3]
        %v1999 = vld [vmem:[%s1998] ss:$2 sm:$0xff]
        %s2000 = scalar_lea.vmem %s1998, 32 [#allocation3]
        %v2001 = vld [vmem:[%s2000] ss:$2 sm:$0xff]
        %s2002 = scalar_lea.vmem %s1998, 64 [#allocation3]
        %v2003 = vld [vmem:[%s2002] ss:$2 sm:$0xff]
        %s2004 = scalar_lea.vmem %s1998, 96 [#allocation3]
        %v2005 = vld [vmem:[%s2004] ss:$2 sm:$0xff]
        %v2006 = vpack.c.bf16 %v2001, %v1999
        %v2007 = vpack.c.bf16 %v2005, %v2003
        %v2009 = vsel %vm400, %v2006, 0
        %v2012 = vsel %vm400, %v2007, 0
        %2014 = vmatprep.subr.bf16.mxu0 0
        %2015 = vmatpush1.bf16.msra.mxu0 %v1188
        %2016 = vmatprep.subr.bf16.mxu0 0
        %2017 = vmatpush1.bf16.msra.mxu0 0
        %2018 = vmatprep.subr.bf16.mxu0 0
        %2019 = vmatpush1.bf16.msra.mxu0 0
        %2020 = vmatprep.subr.bf16.mxu0 0
        %2021 = vmatpush1.bf16.msra.mxu0 0
        %2022 = vmatprep.subr.bf16.mxu0 0
        %2023 = vmatpush1.bf16.msra.mxu0 0
        %2024 = vmatprep.subr.bf16.mxu0 0
        %2025 = vmatpush1.bf16.msra.mxu0 0
        %2026 = vmatprep.subr.bf16.mxu0 0
        %2027 = vmatpush1.bf16.msra.mxu0 0
        %2028 = vmatprep.subr.bf16.mxu0 0
        %2029 = vmatpush1.bf16.msra.mxu0 0
        %2030 = vmatprep.subr.bf16.mxu0 0
        %2031 = vmatpush1.bf16.msra.mxu0 0
        %2032 = vmatprep.subr.bf16.mxu0 0
        %2033 = vmatpush1.bf16.msra.mxu0 0
        %2034 = vmatprep.subr.bf16.mxu0 0
        %2035 = vmatpush1.bf16.msra.mxu0 0
        %2036 = vmatprep.subr.bf16.mxu0 0
        %2037 = vmatpush1.bf16.msra.mxu0 0
        %2038 = vmatprep.subr.bf16.mxu0 0
        %2039 = vmatpush1.bf16.msra.mxu0 0
        %2040 = vmatprep.subr.bf16.mxu0 0
        %2041 = vmatpush1.bf16.msra.mxu0 0
        %2042 = vmatprep.subr.bf16.mxu0 0
        %2043 = vmatpush1.bf16.msra.mxu0 0
        %2044 = vmatprep.subr.bf16.mxu0 0
        %2045 = vmatpush1.bf16.msra.mxu0 0
        %2046 = vmatprep.mubr.bf16.mxu0 0
        %2047 = vmatmul.mubr.bf16.gmra.mrb[0].mxu0 %v2009
        %v2048 = vpop.f32.mrb[0].mxu0
        %v2049 = vadd.f32 %v1182, %v2048
        %v2050 = vpop.f32.mrb[0].mxu0
        %v2051 = vpop.f32.mrb[0].mxu0
        %v2052 = vadd.f32 %v1182, %v2051
        %v2053 = vpop.f32.mrb[0].mxu0
        %2054 = vmatprep.mubr.bf16.mxu0 0
        %2055 = vmatmul.mubr.bf16.gmra.mrb[0].mxu0 %v2012
        %v2056 = vpop.f32.mrb[0].mxu0
        %v2057 = vadd.f32 %v1182, %v2056
        %v2058 = vpop.f32.mrb[0].mxu0
        %v2059 = vpop.f32.mrb[0].mxu0
        %v2060 = vadd.f32 %v1182, %v2059
        %v2061 = vpop.f32.mrb[0].mxu0
        %2062 = vdwg.mxu0
        %v2063 = vadd.f32 %v1984, %v2049
        %v2064 = vadd.f32 %v1987, %v2052
        %v2065 = vadd.f32 %v1992, %v2057
        %v2066 = vadd.f32 %v1995, %v2060
        %v2067 = vmax.f32 %v2063, 0.0
        %v2068 = vmax.f32 %v2064, 0.0
        %v2069 = vmax.f32 %v2065, 0.0
        %v2070 = vmax.f32 %v2066, 0.0
        %s2071 = scalar_lea.vmem %s350, 32 [#allocation6]
        %2072 = vst.msk [vmem:[%s2071] sm:$0xff] %vm1253, %v2067
        %2073 = vst.msk [vmem:[%s2071 + $0x8] sm:$0xff] %vm1253, %v2068
        %2074 = vst.msk [vmem:[%s2071 + $0x10] sm:$0xff] %vm1253, %v2069
        %2075 = vst.msk [vmem:[%s2071 + $0x18] sm:$0xff] %vm1253, %v2070
        %s2076 = sand.u32 %s228, 1
        %s2077 = scalar_lea.sflag [#allocation5], %s2076
        %s2078 = sand.u32 %s228, 1
        %s2079 = smul.addr %s2078, 64
        %s2080 = scalar_lea.vmem [#allocation6], %s2079
        // Predicated region
        $region61: #{tpu_custom_call.1} parent=55 // pred_check
          %p2081 = pneg %p238
        $region62: #{tpu_custom_call.1} parent=55 // pred_check_branch
          %2083 = sbr.rel (%p2081) target = $region64
        $region63: #{tpu_custom_call.1} parent=55 // pred_region
          %s2085 = ssub.s32 1024, 1024
          %2086 = vsyncadd %s2077, %s2085
          %s2087 = smul.addr %s26, 8
          %s2088 = smul.addr %s2087, 128
          %s2089 = scalar_lea.hbm %s9, %s2088
          %s2090 = sshll.u32 %s2080, 4
          %s2091 = int_to_ptr.vmem [resolvable:$true] %s2090
          %2096 = dma.vmem_to_hbm [thread:$0]  %s2091, 1024, %s2089, %s2077, 128, 128, 8
        $region64: #{tpu_custom_call.1} parent=55 // pred_fallthru
          _
      $region56: #{tpu_custom_call.1} parent=5 // pred_fallthru
        _
      %p2097 = scmp.le.s32.totalorder 2, %s21
      // Predicated region
      $region65: #{tpu_custom_call.1} parent=5 // pred_check
        %p2098 = pneg %p2097
      $region66: #{tpu_custom_call.1} parent=5 // pred_check_branch
        %2100 = sbr.rel (%p2098) target = $region68
      $region67: #{tpu_custom_call.1} parent=5 // pred_region
        %s2101 = ssub.s32 %s21, 2
        // Predicated region
        $region69: #{tpu_custom_call.1} parent=67 // pred_check
          %p2102 = pneg %p244
        $region70: #{tpu_custom_call.1} parent=67 // pred_check_branch
          %2104 = sbr.rel (%p2102) target = $region72
        $region71: #{tpu_custom_call.1} parent=67 // pred_region
          %s2105 = sand.u32 %s229, 1
          %s2106 = scalar_lea.sflag [#allocation5], %s2105
          %s2107 = sand.u32 %s229, 1
          %s2108 = smul.addr %s2107, 64
          %s2109 = scalar_lea.vmem [#allocation6], %s2108
          %2110 = dma.done %s2106, 1024
        $region72: #{tpu_custom_call.1} parent=67 // pred_fallthru
          _
      $region68: #{tpu_custom_call.1} parent=5 // pred_fallthru
        _
    $region6: #{tpu_custom_call.1} parent=1 // loop_footer
      %s25 = sadd.s32 1, %s21
    $region7: #{tpu_custom_call.1} parent=1 // loop_footer_branch
      %20 = sbr.rel target = $region3
    $region8: #{tpu_custom_call.1} parent=1 // loop_exit
      _
    %2111 = vsyncpa [#allocation4], 1
    %s2112 = scalar_lea.sflag [#allocation4], 1
    %2113 = vsyncpa %s2112, 1
    %2114 = vsyncpa [#allocation5], 1
    %s2115 = scalar_lea.sflag [#allocation5], 1
    %2116 = vsyncpa %s2115, 1

</llo_original>
